<compile_context>
chip_gen: v7x
topology: tpu7x:2x2x1
jax: 0.10.0
libtpu: 0.0.40
codegen_flags: <defaults>
</compile_context>

<pallas_src>
from functools import partial

import jax
import jax.numpy as jnp
from jax.experimental import pallas as pl
from jax.experimental.pallas import tpu as pltpu


def _recurrence_kernel(x_ref, wx_ref, wh_ref, b_ref, h_ref, c_sc):
    """Serial LSTM recurrence over one T-chunk for one batch block.

    x_ref  : (Tc, bb, n_in) f32   raw inputs for this chunk
    wx_ref : (n_in, 4*Hp)   bf16  input->gate weights (zero-padded per gate)
    wh_ref : (Hp, 4*Hp)     bf16  recurrent weights (applied to c_prev — bug kept)
    b_ref  : (1, 4*Hp)      f32   gate bias (zero-padded per gate)
    h_ref  : (bb, Hp)       f32   output block; doubles as the hidden state
                                  (revisited across the T-chunk grid axis)
    c_sc   : (bb, Hp)       f32   VMEM scratch holding the cell state
    """
    Tc = x_ref.shape[0]
    bb, Hp = c_sc.shape
    bf16 = jnp.bfloat16
    f32 = jnp.float32

    # Initialize state only on the first T-chunk of this batch block.
    @pl.when(pl.program_id(1) == 0)
    def _():
        h_ref[...] = jnp.zeros_like(h_ref)
        c_sc[...] = jnp.zeros_like(c_sc)

    # Hoist the bias broadcast out of the loop (broadcast_in_dim is not CSE'd).
    bias = jnp.broadcast_to(b_ref[...], (bb, 4 * Hp))

    def step(t, carry):
        # gates = x_t @ Wx + b + c_prev @ Wh   (recurrent term on c_prev — bug kept)
        x_t = x_ref[t].astype(bf16)                       # (bb, n_in)
        gates = (jnp.dot(x_t, wx_ref[...], preferred_element_type=f32)
                 + bias
                 + jnp.dot(c_sc[...].astype(bf16), wh_ref[...],
                           preferred_element_type=f32))

        f = jax.nn.sigmoid(gates[:, 0 * Hp:1 * Hp])       # lane-aligned slices
        i = jax.nn.sigmoid(gates[:, 1 * Hp:2 * Hp])
        g = jnp.tanh(gates[:, 2 * Hp:3 * Hp])
        o = jax.nn.sigmoid(gates[:, 3 * Hp:4 * Hp])

        c_new = f * h_ref[...] + i * g                    # bug preserved: uses h_prev
        h_ref[...] = o * jnp.tanh(c_new)
        c_sc[...] = c_new
        return carry

    jax.lax.fori_loop(0, Tc, step, 0, unroll=True if Tc <= 64 else 8)


def _round_up(x, m):
    return (x + m - 1) // m * m


def _pick_t_chunk(T, target=128):
    if T <= target:
        return T
    for tc in range(target, 0, -1):
        if T % tc == 0:
            return tc
    return T


def _tensorcores_per_device() -> int:
    """Best-effort TC-per-Pallas-device count; conservative default = 1."""
    try:
        info = pltpu.get_tpu_info()
        for name in ("num_cores", "core_count", "tensorcores_per_chip",
                     "num_tensorcores"):
            v = getattr(info, name, None)
            if isinstance(v, int) and v > 0:
                return v
    except Exception:
        pass
    try:
        kind = jax.devices()[0].device_kind.lower()
    except Exception:
        return 1
    # v7x (2 TCs) and v4/v5p megacore expose 2 TensorCores behind one device;
    # v2/v3/v5e/v6e are 1 TC per Pallas device.
    return 2 if any(tag in kind for tag in ("v7", "7x", "v4", "v5p")) else 1


@partial(jax.jit, static_argnames=("t_chunk",))
def mtrnn_forward(data, wx, wh, b, wfc, bfc, t_chunk=None):
    """data: (T, B, n_in).  Weights are pre-transposed vs torch.nn.Linear:
    wx (n_in, 4H), wh (H, 4H), b (1, 4H) packed [f, i, g, o]; wfc (H, C), bfc (1, C)."""
    T, B, n_in = data.shape
    H = wh.shape[0]
    C = wfc.shape[1]
    Hp = _round_up(H, 128)          # lane-align each gate block
    bf16 = jnp.bfloat16
    f32 = jnp.float32

    # --- repack / zero-pad gate weights so each gate occupies its own Hp block.
    #     Padded lanes provably stay exactly zero through the recurrence
    #     (zero weight cols/rows + zero bias + zero initial state).
    def pad_gate_cols(w):
        parts = [w[..., k * H:(k + 1) * H] for k in range(4)]
        padw = [(0, 0)] * (w.ndim - 1) + [(0, Hp - H)]
        return jnp.concatenate([jnp.pad(p, padw) for p in parts], axis=-1)

    wx_p = pad_gate_cols(wx).astype(bf16)                                  # (n_in, 4Hp)
    wh_p = jnp.pad(pad_gate_cols(wh), ((0, Hp - H), (0, 0))).astype(bf16)  # (Hp, 4Hp)
    b_p = pad_gate_cols(b).astype(f32)                                     # (1, 4Hp)

    # --- device-conditional batch split: only worth it with 2 TensorCores.
    n_tc = _tensorcores_per_device()
    if n_tc >= 2 and B >= 16 and B % 16 == 0:
        bb = B // 2          # keeps bb a multiple of 8 -> valid (8,128) tiling
    else:
        bb = B
    nb = B // bb

    # --- T-chunking: bound the streamed input block, overlap DMA with compute.
    Tc = _pick_t_chunk(T) if t_chunk is None else t_chunk
    assert T % Tc == 0, "t_chunk must divide T"
    nT = T // Tc

    data_f32 = data.astype(f32)

    # --- VMEM budget (input block is double-buffered across T-chunks).
    w_bytes = wx_p.size * 2 + wh_p.size * 2 + b_p.size * 4
    blk_data = Tc * bb * n_in * 4
    blk_out = bb * Hp * 4
    vmem_need = 2 * blk_data + 2 * w_bytes + 2 * blk_out + bb * Hp * 4
    vmem_limit = int(min(64 << 20, max(16 << 20, vmem_need + (8 << 20))))

    cost = pl.CostEstimate(
        flops=int(2 * T * B * (n_in + Hp) * 4 * Hp),
        transcendentals=int(5 * T * B * Hp),
        bytes_accessed=int(T * B * n_in * 4 + w_bytes + B * Hp * 4),
    )

    h_final = pl.pallas_call(
        _recurrence_kernel,
        out_shape=jax.ShapeDtypeStruct((B, Hp), f32),
        grid_spec=pltpu.PrefetchScalarGridSpec(
            num_scalar_prefetch=0,
            grid=(nb, nT),
            in_specs=[
                pl.BlockSpec((Tc, bb, n_in), lambda i, t: (t, i, 0)),   # data chunk
                pl.BlockSpec((n_in, 4 * Hp), lambda i, t: (0, 0)),      # Wx (resident)
                pl.BlockSpec((Hp, 4 * Hp), lambda i, t: (0, 0)),        # Wh (resident)
                pl.BlockSpec((1, 4 * Hp), lambda i, t: (0, 0)),         # bias (resident)
            ],
            out_specs=pl.BlockSpec((bb, Hp), lambda i, t: (i, 0)),      # lane-dense h,
            scratch_shapes=[pltpu.VMEM((bb, Hp), f32)],                 # revisited over t
        ),
        compiler_params=pltpu.CompilerParams(
            dimension_semantics=("parallel", "arbitrary"),
            vmem_limit_bytes=vmem_limit),
        cost_estimate=cost,
    )(data_f32, wx_p, wh_p, b_p)

    # --- classifier head: one-shot (B, H) @ (H, C), no recurrence -> plain XLA.
    logits = jnp.dot(h_final[:, :H].astype(bf16), wfc.astype(bf16),
                     preferred_element_type=f32) + bfc
    return logits


def mtrnn_reference(data, wx, wh, b, wfc, bfc, matmul_dtype=jnp.float32):
    """Pure-JAX reference replicating the PyTorch forward (incl. the arg swap).
    matmul_dtype=bfloat16 matches the kernel's MXU operand precision."""
    md = matmul_dtype
    f32 = jnp.float32
    T, B, _ = data.shape
    H = wh.shape[0]
    h = jnp.zeros((B, H), f32)
    c = jnp.zeros((B, H), f32)
    for t in range(T):
        gates = (jnp.dot(data[t].astype(md), wx.astype(md), preferred_element_type=f32)
                 + jnp.dot(c.astype(md), wh.astype(md), preferred_element_type=f32)
                 + b)                                     # recurrent term uses c_prev
        f = jax.nn.sigmoid(gates[:, 0 * H:1 * H])
        i = jax.nn.sigmoid(gates[:, 1 * H:2 * H])
        g = jnp.tanh(gates[:, 2 * H:3 * H])
        o = jax.nn.sigmoid(gates[:, 3 * H:4 * H])
        c_new = f * h + i * g                             # cell update uses h_prev
        h = o * jnp.tanh(c_new)
        c = c_new
    return jnp.dot(h.astype(md), wfc.astype(md), preferred_element_type=f32) + bfc


if __name__ == "__main__":
    # Small shapes consistent with the module: (T, B, n_in), hidden H, classes C.
    T, B, n_in, H, C = 8, 8, 32, 64, 16

    key = jax.random.PRNGKey(0)
    ks = jax.random.split(key, 6)
    scale = 0.1
    data = jax.random.normal(ks[0], (T, B, n_in), jnp.float32)
    # Gate weights packed [f, i, g, o] along the output dim.
    wx = scale * jax.random.normal(ks[1], (n_in, 4 * H), jnp.float32)
    wh = scale * jax.random.normal(ks[2], (H, 4 * H), jnp.float32)
    b = scale * jax.random.normal(ks[3], (1, 4 * H), jnp.float32)
    wfc = scale * jax.random.normal(ks[4], (H, C), jnp.float32)
    bfc = scale * jax.random.normal(ks[5], (1, C), jnp.float32)

    out = jax.block_until_ready(mtrnn_forward(data, wx, wh, b, wfc, bfc))
    assert out.shape == (B, C)

    # Exercise the multi-chunk path (state carried across T-chunks in scratch /
    # revisited output block) and check it matches the single-chunk result.
    out_chunked = jax.block_until_ready(
        mtrnn_forward(data, wx, wh, b, wfc, bfc, t_chunk=2))
    assert jnp.allclose(out, out_chunked, atol=1e-5, rtol=1e-5), \
        "mismatch between single-chunk and T-chunked execution"

    # Tight check vs a precision-matched (bf16-operand) reference.
    ref_bf16 = mtrnn_reference(data, wx, wh, b, wfc, bfc, matmul_dtype=jnp.bfloat16)
    assert jnp.allclose(out, ref_bf16, atol=5e-3, rtol=5e-3), \
        "mismatch vs precision-matched reference"

    # Looser sanity check vs the full-f32 reference (original module semantics).
    ref_f32 = mtrnn_reference(data, wx, wh, b, wfc, bfc, matmul_dtype=jnp.float32)
    assert jnp.allclose(out, ref_f32, atol=3e-2, rtol=3e-2), \
        "mismatch vs f32 reference"

    print("KERNEL_OK")
</pallas_src>

<mosaic_0001>
module attributes {stable_mosaic.version = 11 : i64} {
  func.func @_recurrence_kernel(%arg0: i32, %arg1: i32, %arg2: memref<8x8x32xf32, #tpu.memory_space<vmem>>, %arg3: memref<32x512xbf16, #tpu.memory_space<vmem>>, %arg4: memref<128x512xbf16, #tpu.memory_space<vmem>>, %arg5: memref<1x512xf32, #tpu.memory_space<vmem>>, %arg6: memref<8x128xf32, #tpu.memory_space<vmem>>, %arg7: memref<8x128xf32, #tpu.memory_space<vmem>>) attributes {dimension_semantics = [#tpu.dimension_semantics<parallel>, #tpu.dimension_semantics<arbitrary>], iteration_bounds = array<i64: 1, 1>, scalar_prefetch = 0 : i64, scratch_operands = 1 : i64, tpu.core_type = #tpu.core_type<tc>, window_params = [{transform_indices = @transform_0, window_bounds = array<i64: 8, 8, 32>}, {pipeline_mode = #tpu.pipeline_mode<synchronous>, transform_indices = @transform_1, window_bounds = array<i64: 32, 512>}, {pipeline_mode = #tpu.pipeline_mode<synchronous>, transform_indices = @transform_2, window_bounds = array<i64: 128, 512>}, {pipeline_mode = #tpu.pipeline_mode<synchronous>, transform_indices = @transform_3, window_bounds = array<i64: 1, 512>}, {transform_indices = @transform_4, window_bounds = array<i64: 8, 128>}]} {
    %c0_i32 = arith.constant 0 : i32
    %0 = arith.cmpi eq, %arg1, %c0_i32 : i32
    %1 = arith.extui %0 : i1 to i32
    %c0_i32_0 = arith.constant 0 : i32
    %2 = arith.cmpi ne, %1, %c0_i32_0 : i32
    scf.if %2 {
      %cst_154 = arith.constant 0.000000e+00 : f32
      %326 = vector.broadcast %cst_154 : f32 to vector<8x128xf32>
      %c0_155 = arith.constant 0 : index
      %c0_156 = arith.constant 0 : index
      %327 = vector.load %arg6[%c0_155, %c0_156] : memref<8x128xf32, #tpu.memory_space<vmem>>, vector<8x128xf32>
      tpu.vector_store %arg6[%c0_155, %c0_156], %326 {strides = array<i32>} : memref<8x128xf32, #tpu.memory_space<vmem>>, vector<8x128xf32>,
      %cst_157 = arith.constant 0.000000e+00 : f32
      %328 = vector.broadcast %cst_157 : f32 to vector<8x128xf32>
      %c0_158 = arith.constant 0 : index
      %c0_159 = arith.constant 0 : index
      %329 = vector.load %arg7[%c0_158, %c0_159] : memref<8x128xf32, #tpu.memory_space<vmem>>, vector<8x128xf32>
      tpu.vector_store %arg7[%c0_158, %c0_159], %328 {strides = array<i32>} : memref<8x128xf32, #tpu.memory_space<vmem>>, vector<8x128xf32>,
    } else {
    }
    %c0 = arith.constant 0 : index
    %c0_1 = arith.constant 0 : index
    %3 = vector.load %arg5[%c0, %c0_1] : memref<1x512xf32, #tpu.memory_space<vmem>>, vector<1x512xf32>
    %4 = vector.shape_cast %3 : vector<1x512xf32> to vector<1x512xf32>
    %5 = vector.broadcast %4 : vector<1x512xf32> to vector<8x512xf32>
    %c0_i32_2 = arith.constant 0 : i32
    %6 = arith.index_cast %c0_i32_2 : i32 to index
    %c0_3 = arith.constant 0 : index
    %c0_4 = arith.constant 0 : index
    %7 = vector.load %arg2[%6, %c0_3, %c0_4] : memref<8x8x32xf32, #tpu.memory_space<vmem>>, vector<1x8x32xf32>
    %8 = vector.shape_cast %7 : vector<1x8x32xf32> to vector<8x32xf32>
    %9 = arith.truncf %8 : vector<8x32xf32> to vector<8x32xbf16>
    %c0_5 = arith.constant 0 : index
    %c0_6 = arith.constant 0 : index
    %10 = vector.load %arg3[%c0_5, %c0_6] : memref<32x512xbf16, #tpu.memory_space<vmem>>, vector<32x512xbf16>
    %cst = arith.constant dense<0.000000e+00> : vector<8x512xf32>
    %11 = tpu.matmul %9, %10, %cst {dimension_numbers = #tpu.dot_dimension_numbers<[1], [0], [0], [1], [0, 0, 1, 1], [], []>} : vector<8x32xbf16>, vector<32x512xbf16>, vector<8x512xf32> -> vector<8x512xf32>
    %12 = arith.addf %11, %5 : vector<8x512xf32>
    %c0_7 = arith.constant 0 : index
    %c0_8 = arith.constant 0 : index
    %13 = vector.load %arg7[%c0_7, %c0_8] : memref<8x128xf32, #tpu.memory_space<vmem>>, vector<8x128xf32>
    %14 = arith.truncf %13 : vector<8x128xf32> to vector<8x128xbf16>
    %c0_9 = arith.constant 0 : index
    %c0_10 = arith.constant 0 : index
    %15 = vector.load %arg4[%c0_9, %c0_10] : memref<128x512xbf16, #tpu.memory_space<vmem>>, vector<128x512xbf16>
    %cst_11 = arith.constant dense<0.000000e+00> : vector<8x512xf32>
    %16 = tpu.matmul %14, %15, %cst_11 {dimension_numbers = #tpu.dot_dimension_numbers<[1], [0], [0], [1], [0, 0, 1, 1], [], []>} : vector<8x128xbf16>, vector<128x512xbf16>, vector<8x512xf32> -> vector<8x512xf32>
    %17 = arith.addf %12, %16 : vector<8x512xf32>
    %18 = vector.extract_strided_slice %17 {offsets = [0, 0], sizes = [8, 128], strides = [1, 1]} : vector<8x512xf32> to vector<8x128xf32>
    %19 = arith.negf %18 : vector<8x128xf32>
    %20 = math.exp %19 : vector<8x128xf32>
    %cst_12 = arith.constant 1.000000e+00 : f32
    %21 = vector.broadcast %cst_12 : f32 to vector<8x128xf32>
    %22 = arith.addf %21, %20 : vector<8x128xf32>
    %23 = arith.divf %21, %22 : vector<8x128xf32>
    %24 = vector.extract_strided_slice %17 {offsets = [0, 128], sizes = [8, 128], strides = [1, 1]} : vector<8x512xf32> to vector<8x128xf32>
    %25 = arith.negf %24 : vector<8x128xf32>
    %26 = math.exp %25 : vector<8x128xf32>
    %cst_13 = arith.constant 1.000000e+00 : f32
    %27 = vector.broadcast %cst_13 : f32 to vector<8x128xf32>
    %28 = arith.addf %27, %26 : vector<8x128xf32>
    %29 = arith.divf %27, %28 : vector<8x128xf32>
    %30 = vector.extract_strided_slice %17 {offsets = [0, 256], sizes = [8, 128], strides = [1, 1]} : vector<8x512xf32> to vector<8x128xf32>
    %31 = math.tanh %30 : vector<8x128xf32>
    %32 = vector.extract_strided_slice %17 {offsets = [0, 384], sizes = [8, 128], strides = [1, 1]} : vector<8x512xf32> to vector<8x128xf32>
    %33 = arith.negf %32 : vector<8x128xf32>
    %34 = math.exp %33 : vector<8x128xf32>
    %cst_14 = arith.constant 1.000000e+00 : f32
    %35 = vector.broadcast %cst_14 : f32 to vector<8x128xf32>
    %36 = arith.addf %35, %34 : vector<8x128xf32>
    %37 = arith.divf %35, %36 : vector<8x128xf32>
    %c0_15 = arith.constant 0 : index
    %c0_16 = arith.constant 0 : index
    %38 = vector.load %arg6[%c0_15, %c0_16] : memref<8x128xf32, #tpu.memory_space<vmem>>, vector<8x128xf32>
    %39 = arith.mulf %23, %38 : vector<8x128xf32>
    %40 = arith.mulf %29, %31 : vector<8x128xf32>
    %41 = arith.addf %39, %40 : vector<8x128xf32>
    %42 = math.tanh %41 : vector<8x128xf32>
    %43 = arith.mulf %37, %42 : vector<8x128xf32>
    %c0_17 = arith.constant 0 : index
    %c0_18 = arith.constant 0 : index
    %44 = vector.load %arg6[%c0_17, %c0_18] : memref<8x128xf32, #tpu.memory_space<vmem>>, vector<8x128xf32>
    tpu.vector_store %arg6[%c0_17, %c0_18], %43 {strides = array<i32>} : memref<8x128xf32, #tpu.memory_space<vmem>>, vector<8x128xf32>,
    %c0_19 = arith.constant 0 : index
    %c0_20 = arith.constant 0 : index
    %45 = vector.load %arg7[%c0_19, %c0_20] : memref<8x128xf32, #tpu.memory_space<vmem>>, vector<8x128xf32>
    tpu.vector_store %arg7[%c0_19, %c0_20], %41 {strides = array<i32>} : memref<8x128xf32, #tpu.memory_space<vmem>>, vector<8x128xf32>,
    %c1_i32 = arith.constant 1 : i32
    %46 = arith.index_cast %c1_i32 : i32 to index
    %c0_21 = arith.constant 0 : index
    %c0_22 = arith.constant 0 : index
    %47 = vector.load %arg2[%46, %c0_21, %c0_22] : memref<8x8x32xf32, #tpu.memory_space<vmem>>, vector<1x8x32xf32>
    %48 = vector.shape_cast %47 : vector<1x8x32xf32> to vector<8x32xf32>
    %49 = arith.truncf %48 : vector<8x32xf32> to vector<8x32xbf16>
    %c0_23 = arith.constant 0 : index
    %c0_24 = arith.constant 0 : index
    %50 = vector.load %arg3[%c0_23, %c0_24] : memref<32x512xbf16, #tpu.memory_space<vmem>>, vector<32x512xbf16>
    %cst_25 = arith.constant dense<0.000000e+00> : vector<8x512xf32>
    %51 = tpu.matmul %49, %50, %cst_25 {dimension_numbers = #tpu.dot_dimension_numbers<[1], [0], [0], [1], [0, 0, 1, 1], [], []>} : vector<8x32xbf16>, vector<32x512xbf16>, vector<8x512xf32> -> vector<8x512xf32>
    %52 = arith.addf %51, %5 : vector<8x512xf32>
    %c0_26 = arith.constant 0 : index
    %c0_27 = arith.constant 0 : index
    %53 = vector.load %arg7[%c0_26, %c0_27] : memref<8x128xf32, #tpu.memory_space<vmem>>, vector<8x128xf32>
    %54 = arith.truncf %53 : vector<8x128xf32> to vector<8x128xbf16>
    %c0_28 = arith.constant 0 : index
    %c0_29 = arith.constant 0 : index
    %55 = vector.load %arg4[%c0_28, %c0_29] : memref<128x512xbf16, #tpu.memory_space<vmem>>, vector<128x512xbf16>
    %cst_30 = arith.constant dense<0.000000e+00> : vector<8x512xf32>
    %56 = tpu.matmul %54, %55, %cst_30 {dimension_numbers = #tpu.dot_dimension_numbers<[1], [0], [0], [1], [0, 0, 1, 1], [], []>} : vector<8x128xbf16>, vector<128x512xbf16>, vector<8x512xf32> -> vector<8x512xf32>
    %57 = arith.addf %52, %56 : vector<8x512xf32>
    %58 = vector.extract_strided_slice %57 {offsets = [0, 0], sizes = [8, 128], strides = [1, 1]} : vector<8x512xf32> to vector<8x128xf32>
    %59 = arith.negf %58 : vector<8x128xf32>
    %60 = math.exp %59 : vector<8x128xf32>
    %cst_31 = arith.constant 1.000000e+00 : f32
    %61 = vector.broadcast %cst_31 : f32 to vector<8x128xf32>
    %62 = arith.addf %61, %60 : vector<8x128xf32>
    %63 = arith.divf %61, %62 : vector<8x128xf32>
    %64 = vector.extract_strided_slice %57 {offsets = [0, 128], sizes = [8, 128], strides = [1, 1]} : vector<8x512xf32> to vector<8x128xf32>
    %65 = arith.negf %64 : vector<8x128xf32>
    %66 = math.exp %65 : vector<8x128xf32>
    %cst_32 = arith.constant 1.000000e+00 : f32
    %67 = vector.broadcast %cst_32 : f32 to vector<8x128xf32>
    %68 = arith.addf %67, %66 : vector<8x128xf32>
    %69 = arith.divf %67, %68 : vector<8x128xf32>
    %70 = vector.extract_strided_slice %57 {offsets = [0, 256], sizes = [8, 128], strides = [1, 1]} : vector<8x512xf32> to vector<8x128xf32>
    %71 = math.tanh %70 : vector<8x128xf32>
    %72 = vector.extract_strided_slice %57 {offsets = [0, 384], sizes = [8, 128], strides = [1, 1]} : vector<8x512xf32> to vector<8x128xf32>
    %73 = arith.negf %72 : vector<8x128xf32>
    %74 = math.exp %73 : vector<8x128xf32>
    %cst_33 = arith.constant 1.000000e+00 : f32
    %75 = vector.broadcast %cst_33 : f32 to vector<8x128xf32>
    %76 = arith.addf %75, %74 : vector<8x128xf32>
    %77 = arith.divf %75, %76 : vector<8x128xf32>
    %c0_34 = arith.constant 0 : index
    %c0_35 = arith.constant 0 : index
    %78 = vector.load %arg6[%c0_34, %c0_35] : memref<8x128xf32, #tpu.memory_space<vmem>>, vector<8x128xf32>
    %79 = arith.mulf %63, %78 : vector<8x128xf32>
    %80 = arith.mulf %69, %71 : vector<8x128xf32>
    %81 = arith.addf %79, %80 : vector<8x128xf32>
    %82 = math.tanh %81 : vector<8x128xf32>
    %83 = arith.mulf %77, %82 : vector<8x128xf32>
    %c0_36 = arith.constant 0 : index
    %c0_37 = arith.constant 0 : index
    %84 = vector.load %arg6[%c0_36, %c0_37] : memref<8x128xf32, #tpu.memory_space<vmem>>, vector<8x128xf32>
    tpu.vector_store %arg6[%c0_36, %c0_37], %83 {strides = array<i32>} : memref<8x128xf32, #tpu.memory_space<vmem>>, vector<8x128xf32>,
    %c0_38 = arith.constant 0 : index
    %c0_39 = arith.constant 0 : index
    %85 = vector.load %arg7[%c0_38, %c0_39] : memref<8x128xf32, #tpu.memory_space<vmem>>, vector<8x128xf32>
    tpu.vector_store %arg7[%c0_38, %c0_39], %81 {strides = array<i32>} : memref<8x128xf32, #tpu.memory_space<vmem>>, vector<8x128xf32>,
    %c2_i32 = arith.constant 2 : i32
    %86 = arith.index_cast %c2_i32 : i32 to index
    %c0_40 = arith.constant 0 : index
    %c0_41 = arith.constant 0 : index
    %87 = vector.load %arg2[%86, %c0_40, %c0_41] : memref<8x8x32xf32, #tpu.memory_space<vmem>>, vector<1x8x32xf32>
    %88 = vector.shape_cast %87 : vector<1x8x32xf32> to vector<8x32xf32>
    %89 = arith.truncf %88 : vector<8x32xf32> to vector<8x32xbf16>
    %c0_42 = arith.constant 0 : index
    %c0_43 = arith.constant 0 : index
    %90 = vector.load %arg3[%c0_42, %c0_43] : memref<32x512xbf16, #tpu.memory_space<vmem>>, vector<32x512xbf16>
    %cst_44 = arith.constant dense<0.000000e+00> : vector<8x512xf32>
    %91 = tpu.matmul %89, %90, %cst_44 {dimension_numbers = #tpu.dot_dimension_numbers<[1], [0], [0], [1], [0, 0, 1, 1], [], []>} : vector<8x32xbf16>, vector<32x512xbf16>, vector<8x512xf32> -> vector<8x512xf32>
    %92 = arith.addf %91, %5 : vector<8x512xf32>
    %c0_45 = arith.constant 0 : index
    %c0_46 = arith.constant 0 : index
    %93 = vector.load %arg7[%c0_45, %c0_46] : memref<8x128xf32, #tpu.memory_space<vmem>>, vector<8x128xf32>
    %94 = arith.truncf %93 : vector<8x128xf32> to vector<8x128xbf16>
    %c0_47 = arith.constant 0 : index
    %c0_48 = arith.constant 0 : index
    %95 = vector.load %arg4[%c0_47, %c0_48] : memref<128x512xbf16, #tpu.memory_space<vmem>>, vector<128x512xbf16>
    %cst_49 = arith.constant dense<0.000000e+00> : vector<8x512xf32>
    %96 = tpu.matmul %94, %95, %cst_49 {dimension_numbers = #tpu.dot_dimension_numbers<[1], [0], [0], [1], [0, 0, 1, 1], [], []>} : vector<8x128xbf16>, vector<128x512xbf16>, vector<8x512xf32> -> vector<8x512xf32>
    %97 = arith.addf %92, %96 : vector<8x512xf32>
    %98 = vector.extract_strided_slice %97 {offsets = [0, 0], sizes = [8, 128], strides = [1, 1]} : vector<8x512xf32> to vector<8x128xf32>
    %99 = arith.negf %98 : vector<8x128xf32>
    %100 = math.exp %99 : vector<8x128xf32>
    %cst_50 = arith.constant 1.000000e+00 : f32
    %101 = vector.broadcast %cst_50 : f32 to vector<8x128xf32>
    %102 = arith.addf %101, %100 : vector<8x128xf32>
    %103 = arith.divf %101, %102 : vector<8x128xf32>
    %104 = vector.extract_strided_slice %97 {offsets = [0, 128], sizes = [8, 128], strides = [1, 1]} : vector<8x512xf32> to vector<8x128xf32>
    %105 = arith.negf %104 : vector<8x128xf32>
    %106 = math.exp %105 : vector<8x128xf32>
    %cst_51 = arith.constant 1.000000e+00 : f32
    %107 = vector.broadcast %cst_51 : f32 to vector<8x128xf32>
    %108 = arith.addf %107, %106 : vector<8x128xf32>
    %109 = arith.divf %107, %108 : vector<8x128xf32>
    %110 = vector.extract_strided_slice %97 {offsets = [0, 256], sizes = [8, 128], strides = [1, 1]} : vector<8x512xf32> to vector<8x128xf32>
    %111 = math.tanh %110 : vector<8x128xf32>
    %112 = vector.extract_strided_slice %97 {offsets = [0, 384], sizes = [8, 128], strides = [1, 1]} : vector<8x512xf32> to vector<8x128xf32>
    %113 = arith.negf %112 : vector<8x128xf32>
    %114 = math.exp %113 : vector<8x128xf32>
    %cst_52 = arith.constant 1.000000e+00 : f32
    %115 = vector.broadcast %cst_52 : f32 to vector<8x128xf32>
    %116 = arith.addf %115, %114 : vector<8x128xf32>
    %117 = arith.divf %115, %116 : vector<8x128xf32>
    %c0_53 = arith.constant 0 : index
    %c0_54 = arith.constant 0 : index
    %118 = vector.load %arg6[%c0_53, %c0_54] : memref<8x128xf32, #tpu.memory_space<vmem>>, vector<8x128xf32>
    %119 = arith.mulf %103, %118 : vector<8x128xf32>
    %120 = arith.mulf %109, %111 : vector<8x128xf32>
    %121 = arith.addf %119, %120 : vector<8x128xf32>
    %122 = math.tanh %121 : vector<8x128xf32>
    %123 = arith.mulf %117, %122 : vector<8x128xf32>
    %c0_55 = arith.constant 0 : index
    %c0_56 = arith.constant 0 : index
    %124 = vector.load %arg6[%c0_55, %c0_56] : memref<8x128xf32, #tpu.memory_space<vmem>>, vector<8x128xf32>
    tpu.vector_store %arg6[%c0_55, %c0_56], %123 {strides = array<i32>} : memref<8x128xf32, #tpu.memory_space<vmem>>, vector<8x128xf32>,
    %c0_57 = arith.constant 0 : index
    %c0_58 = arith.constant 0 : index
    %125 = vector.load %arg7[%c0_57, %c0_58] : memref<8x128xf32, #tpu.memory_space<vmem>>, vector<8x128xf32>
    tpu.vector_store %arg7[%c0_57, %c0_58], %121 {strides = array<i32>} : memref<8x128xf32, #tpu.memory_space<vmem>>, vector<8x128xf32>,
    %c3_i32 = arith.constant 3 : i32
    %126 = arith.index_cast %c3_i32 : i32 to index
    %c0_59 = arith.constant 0 : index
    %c0_60 = arith.constant 0 : index
    %127 = vector.load %arg2[%126, %c0_59, %c0_60] : memref<8x8x32xf32, #tpu.memory_space<vmem>>, vector<1x8x32xf32>
    %128 = vector.shape_cast %127 : vector<1x8x32xf32> to vector<8x32xf32>
    %129 = arith.truncf %128 : vector<8x32xf32> to vector<8x32xbf16>
    %c0_61 = arith.constant 0 : index
    %c0_62 = arith.constant 0 : index
    %130 = vector.load %arg3[%c0_61, %c0_62] : memref<32x512xbf16, #tpu.memory_space<vmem>>, vector<32x512xbf16>
    %cst_63 = arith.constant dense<0.000000e+00> : vector<8x512xf32>
    %131 = tpu.matmul %129, %130, %cst_63 {dimension_numbers = #tpu.dot_dimension_numbers<[1], [0], [0], [1], [0, 0, 1, 1], [], []>} : vector<8x32xbf16>, vector<32x512xbf16>, vector<8x512xf32> -> vector<8x512xf32>
    %132 = arith.addf %131, %5 : vector<8x512xf32>
    %c0_64 = arith.constant 0 : index
    %c0_65 = arith.constant 0 : index
    %133 = vector.load %arg7[%c0_64, %c0_65] : memref<8x128xf32, #tpu.memory_space<vmem>>, vector<8x128xf32>
    %134 = arith.truncf %133 : vector<8x128xf32> to vector<8x128xbf16>
    %c0_66 = arith.constant 0 : index
    %c0_67 = arith.constant 0 : index
    %135 = vector.load %arg4[%c0_66, %c0_67] : memref<128x512xbf16, #tpu.memory_space<vmem>>, vector<128x512xbf16>
    %cst_68 = arith.constant dense<0.000000e+00> : vector<8x512xf32>
    %136 = tpu.matmul %134, %135, %cst_68 {dimension_numbers = #tpu.dot_dimension_numbers<[1], [0], [0], [1], [0, 0, 1, 1], [], []>} : vector<8x128xbf16>, vector<128x512xbf16>, vector<8x512xf32> -> vector<8x512xf32>
    %137 = arith.addf %132, %136 : vector<8x512xf32>
    %138 = vector.extract_strided_slice %137 {offsets = [0, 0], sizes = [8, 128], strides = [1, 1]} : vector<8x512xf32> to vector<8x128xf32>
    %139 = arith.negf %138 : vector<8x128xf32>
    %140 = math.exp %139 : vector<8x128xf32>
    %cst_69 = arith.constant 1.000000e+00 : f32
    %141 = vector.broadcast %cst_69 : f32 to vector<8x128xf32>
    %142 = arith.addf %141, %140 : vector<8x128xf32>
    %143 = arith.divf %141, %142 : vector<8x128xf32>
    %144 = vector.extract_strided_slice %137 {offsets = [0, 128], sizes = [8, 128], strides = [1, 1]} : vector<8x512xf32> to vector<8x128xf32>
    %145 = arith.negf %144 : vector<8x128xf32>
    %146 = math.exp %145 : vector<8x128xf32>
    %cst_70 = arith.constant 1.000000e+00 : f32
    %147 = vector.broadcast %cst_70 : f32 to vector<8x128xf32>
    %148 = arith.addf %147, %146 : vector<8x128xf32>
    %149 = arith.divf %147, %148 : vector<8x128xf32>
    %150 = vector.extract_strided_slice %137 {offsets = [0, 256], sizes = [8, 128], strides = [1, 1]} : vector<8x512xf32> to vector<8x128xf32>
    %151 = math.tanh %150 : vector<8x128xf32>
    %152 = vector.extract_strided_slice %137 {offsets = [0, 384], sizes = [8, 128], strides = [1, 1]} : vector<8x512xf32> to vector<8x128xf32>
    %153 = arith.negf %152 : vector<8x128xf32>
    %154 = math.exp %153 : vector<8x128xf32>
    %cst_71 = arith.constant 1.000000e+00 : f32
    %155 = vector.broadcast %cst_71 : f32 to vector<8x128xf32>
    %156 = arith.addf %155, %154 : vector<8x128xf32>
    %157 = arith.divf %155, %156 : vector<8x128xf32>
    %c0_72 = arith.constant 0 : index
    %c0_73 = arith.constant 0 : index
    %158 = vector.load %arg6[%c0_72, %c0_73] : memref<8x128xf32, #tpu.memory_space<vmem>>, vector<8x128xf32>
    %159 = arith.mulf %143, %158 : vector<8x128xf32>
    %160 = arith.mulf %149, %151 : vector<8x128xf32>
    %161 = arith.addf %159, %160 : vector<8x128xf32>
    %162 = math.tanh %161 : vector<8x128xf32>
    %163 = arith.mulf %157, %162 : vector<8x128xf32>
    %c0_74 = arith.constant 0 : index
    %c0_75 = arith.constant 0 : index
    %164 = vector.load %arg6[%c0_74, %c0_75] : memref<8x128xf32, #tpu.memory_space<vmem>>, vector<8x128xf32>
    tpu.vector_store %arg6[%c0_74, %c0_75], %163 {strides = array<i32>} : memref<8x128xf32, #tpu.memory_space<vmem>>, vector<8x128xf32>,
    %c0_76 = arith.constant 0 : index
    %c0_77 = arith.constant 0 : index
    %165 = vector.load %arg7[%c0_76, %c0_77] : memref<8x128xf32, #tpu.memory_space<vmem>>, vector<8x128xf32>
    tpu.vector_store %arg7[%c0_76, %c0_77], %161 {strides = array<i32>} : memref<8x128xf32, #tpu.memory_space<vmem>>, vector<8x128xf32>,
    %c4_i32 = arith.constant 4 : i32
    %166 = arith.index_cast %c4_i32 : i32 to index
    %c0_78 = arith.constant 0 : index
    %c0_79 = arith.constant 0 : index
    %167 = vector.load %arg2[%166, %c0_78, %c0_79] : memref<8x8x32xf32, #tpu.memory_space<vmem>>, vector<1x8x32xf32>
    %168 = vector.shape_cast %167 : vector<1x8x32xf32> to vector<8x32xf32>
    %169 = arith.truncf %168 : vector<8x32xf32> to vector<8x32xbf16>
    %c0_80 = arith.constant 0 : index
    %c0_81 = arith.constant 0 : index
    %170 = vector.load %arg3[%c0_80, %c0_81] : memref<32x512xbf16, #tpu.memory_space<vmem>>, vector<32x512xbf16>
    %cst_82 = arith.constant dense<0.000000e+00> : vector<8x512xf32>
    %171 = tpu.matmul %169, %170, %cst_82 {dimension_numbers = #tpu.dot_dimension_numbers<[1], [0], [0], [1], [0, 0, 1, 1], [], []>} : vector<8x32xbf16>, vector<32x512xbf16>, vector<8x512xf32> -> vector<8x512xf32>
    %172 = arith.addf %171, %5 : vector<8x512xf32>
    %c0_83 = arith.constant 0 : index
    %c0_84 = arith.constant 0 : index
    %173 = vector.load %arg7[%c0_83, %c0_84] : memref<8x128xf32, #tpu.memory_space<vmem>>, vector<8x128xf32>
    %174 = arith.truncf %173 : vector<8x128xf32> to vector<8x128xbf16>
    %c0_85 = arith.constant 0 : index
    %c0_86 = arith.constant 0 : index
    %175 = vector.load %arg4[%c0_85, %c0_86] : memref<128x512xbf16, #tpu.memory_space<vmem>>, vector<128x512xbf16>
    %cst_87 = arith.constant dense<0.000000e+00> : vector<8x512xf32>
    %176 = tpu.matmul %174, %175, %cst_87 {dimension_numbers = #tpu.dot_dimension_numbers<[1], [0], [0], [1], [0, 0, 1, 1], [], []>} : vector<8x128xbf16>, vector<128x512xbf16>, vector<8x512xf32> -> vector<8x512xf32>
    %177 = arith.addf %172, %176 : vector<8x512xf32>
    %178 = vector.extract_strided_slice %177 {offsets = [0, 0], sizes = [8, 128], strides = [1, 1]} : vector<8x512xf32> to vector<8x128xf32>
    %179 = arith.negf %178 : vector<8x128xf32>
    %180 = math.exp %179 : vector<8x128xf32>
    %cst_88 = arith.constant 1.000000e+00 : f32
    %181 = vector.broadcast %cst_88 : f32 to vector<8x128xf32>
    %182 = arith.addf %181, %180 : vector<8x128xf32>
    %183 = arith.divf %181, %182 : vector<8x128xf32>
    %184 = vector.extract_strided_slice %177 {offsets = [0, 128], sizes = [8, 128], strides = [1, 1]} : vector<8x512xf32> to vector<8x128xf32>
    %185 = arith.negf %184 : vector<8x128xf32>
    %186 = math.exp %185 : vector<8x128xf32>
    %cst_89 = arith.constant 1.000000e+00 : f32
    %187 = vector.broadcast %cst_89 : f32 to vector<8x128xf32>
    %188 = arith.addf %187, %186 : vector<8x128xf32>
    %189 = arith.divf %187, %188 : vector<8x128xf32>
    %190 = vector.extract_strided_slice %177 {offsets = [0, 256], sizes = [8, 128], strides = [1, 1]} : vector<8x512xf32> to vector<8x128xf32>
    %191 = math.tanh %190 : vector<8x128xf32>
    %192 = vector.extract_strided_slice %177 {offsets = [0, 384], sizes = [8, 128], strides = [1, 1]} : vector<8x512xf32> to vector<8x128xf32>
    %193 = arith.negf %192 : vector<8x128xf32>
    %194 = math.exp %193 : vector<8x128xf32>
    %cst_90 = arith.constant 1.000000e+00 : f32
    %195 = vector.broadcast %cst_90 : f32 to vector<8x128xf32>
    %196 = arith.addf %195, %194 : vector<8x128xf32>
    %197 = arith.divf %195, %196 : vector<8x128xf32>
    %c0_91 = arith.constant 0 : index
    %c0_92 = arith.constant 0 : index
    %198 = vector.load %arg6[%c0_91, %c0_92] : memref<8x128xf32, #tpu.memory_space<vmem>>, vector<8x128xf32>
    %199 = arith.mulf %183, %198 : vector<8x128xf32>
    %200 = arith.mulf %189, %191 : vector<8x128xf32>
    %201 = arith.addf %199, %200 : vector<8x128xf32>
    %202 = math.tanh %201 : vector<8x128xf32>
    %203 = arith.mulf %197, %202 : vector<8x128xf32>
    %c0_93 = arith.constant 0 : index
    %c0_94 = arith.constant 0 : index
    %204 = vector.load %arg6[%c0_93, %c0_94] : memref<8x128xf32, #tpu.memory_space<vmem>>, vector<8x128xf32>
    tpu.vector_store %arg6[%c0_93, %c0_94], %203 {strides = array<i32>} : memref<8x128xf32, #tpu.memory_space<vmem>>, vector<8x128xf32>,
    %c0_95 = arith.constant 0 : index
    %c0_96 = arith.constant 0 : index
    %205 = vector.load %arg7[%c0_95, %c0_96] : memref<8x128xf32, #tpu.memory_space<vmem>>, vector<8x128xf32>
    tpu.vector_store %arg7[%c0_95, %c0_96], %201 {strides = array<i32>} : memref<8x128xf32, #tpu.memory_space<vmem>>, vector<8x128xf32>,
    %c5_i32 = arith.constant 5 : i32
    %206 = arith.index_cast %c5_i32 : i32 to index
    %c0_97 = arith.constant 0 : index
    %c0_98 = arith.constant 0 : index
    %207 = vector.load %arg2[%206, %c0_97, %c0_98] : memref<8x8x32xf32, #tpu.memory_space<vmem>>, vector<1x8x32xf32>
    %208 = vector.shape_cast %207 : vector<1x8x32xf32> to vector<8x32xf32>
    %209 = arith.truncf %208 : vector<8x32xf32> to vector<8x32xbf16>
    %c0_99 = arith.constant 0 : index
    %c0_100 = arith.constant 0 : index
    %210 = vector.load %arg3[%c0_99, %c0_100] : memref<32x512xbf16, #tpu.memory_space<vmem>>, vector<32x512xbf16>
    %cst_101 = arith.constant dense<0.000000e+00> : vector<8x512xf32>
    %211 = tpu.matmul %209, %210, %cst_101 {dimension_numbers = #tpu.dot_dimension_numbers<[1], [0], [0], [1], [0, 0, 1, 1], [], []>} : vector<8x32xbf16>, vector<32x512xbf16>, vector<8x512xf32> -> vector<8x512xf32>
    %212 = arith.addf %211, %5 : vector<8x512xf32>
    %c0_102 = arith.constant 0 : index
    %c0_103 = arith.constant 0 : index
    %213 = vector.load %arg7[%c0_102, %c0_103] : memref<8x128xf32, #tpu.memory_space<vmem>>, vector<8x128xf32>
    %214 = arith.truncf %213 : vector<8x128xf32> to vector<8x128xbf16>
    %c0_104 = arith.constant 0 : index
    %c0_105 = arith.constant 0 : index
    %215 = vector.load %arg4[%c0_104, %c0_105] : memref<128x512xbf16, #tpu.memory_space<vmem>>, vector<128x512xbf16>
    %cst_106 = arith.constant dense<0.000000e+00> : vector<8x512xf32>
    %216 = tpu.matmul %214, %215, %cst_106 {dimension_numbers = #tpu.dot_dimension_numbers<[1], [0], [0], [1], [0, 0, 1, 1], [], []>} : vector<8x128xbf16>, vector<128x512xbf16>, vector<8x512xf32> -> vector<8x512xf32>
    %217 = arith.addf %212, %216 : vector<8x512xf32>
    %218 = vector.extract_strided_slice %217 {offsets = [0, 0], sizes = [8, 128], strides = [1, 1]} : vector<8x512xf32> to vector<8x128xf32>
    %219 = arith.negf %218 : vector<8x128xf32>
    %220 = math.exp %219 : vector<8x128xf32>
    %cst_107 = arith.constant 1.000000e+00 : f32
    %221 = vector.broadcast %cst_107 : f32 to vector<8x128xf32>
    %222 = arith.addf %221, %220 : vector<8x128xf32>
    %223 = arith.divf %221, %222 : vector<8x128xf32>
    %224 = vector.extract_strided_slice %217 {offsets = [0, 128], sizes = [8, 128], strides = [1, 1]} : vector<8x512xf32> to vector<8x128xf32>
    %225 = arith.negf %224 : vector<8x128xf32>
    %226 = math.exp %225 : vector<8x128xf32>
    %cst_108 = arith.constant 1.000000e+00 : f32
    %227 = vector.broadcast %cst_108 : f32 to vector<8x128xf32>
    %228 = arith.addf %227, %226 : vector<8x128xf32>
    %229 = arith.divf %227, %228 : vector<8x128xf32>
    %230 = vector.extract_strided_slice %217 {offsets = [0, 256], sizes = [8, 128], strides = [1, 1]} : vector<8x512xf32> to vector<8x128xf32>
    %231 = math.tanh %230 : vector<8x128xf32>
    %232 = vector.extract_strided_slice %217 {offsets = [0, 384], sizes = [8, 128], strides = [1, 1]} : vector<8x512xf32> to vector<8x128xf32>
    %233 = arith.negf %232 : vector<8x128xf32>
    %234 = math.exp %233 : vector<8x128xf32>
    %cst_109 = arith.constant 1.000000e+00 : f32
    %235 = vector.broadcast %cst_109 : f32 to vector<8x128xf32>
    %236 = arith.addf %235, %234 : vector<8x128xf32>
    %237 = arith.divf %235, %236 : vector<8x128xf32>
    %c0_110 = arith.constant 0 : index
    %c0_111 = arith.constant 0 : index
    %238 = vector.load %arg6[%c0_110, %c0_111] : memref<8x128xf32, #tpu.memory_space<vmem>>, vector<8x128xf32>
    %239 = arith.mulf %223, %238 : vector<8x128xf32>
    %240 = arith.mulf %229, %231 : vector<8x128xf32>
    %241 = arith.addf %239, %240 : vector<8x128xf32>
    %242 = math.tanh %241 : vector<8x128xf32>
    %243 = arith.mulf %237, %242 : vector<8x128xf32>
    %c0_112 = arith.constant 0 : index
    %c0_113 = arith.constant 0 : index
    %244 = vector.load %arg6[%c0_112, %c0_113] : memref<8x128xf32, #tpu.memory_space<vmem>>, vector<8x128xf32>
    tpu.vector_store %arg6[%c0_112, %c0_113], %243 {strides = array<i32>} : memref<8x128xf32, #tpu.memory_space<vmem>>, vector<8x128xf32>,
    %c0_114 = arith.constant 0 : index
    %c0_115 = arith.constant 0 : index
    %245 = vector.load %arg7[%c0_114, %c0_115] : memref<8x128xf32, #tpu.memory_space<vmem>>, vector<8x128xf32>
    tpu.vector_store %arg7[%c0_114, %c0_115], %241 {strides = array<i32>} : memref<8x128xf32, #tpu.memory_space<vmem>>, vector<8x128xf32>,
    %c6_i32 = arith.constant 6 : i32
    %246 = arith.index_cast %c6_i32 : i32 to index
    %c0_116 = arith.constant 0 : index
    %c0_117 = arith.constant 0 : index
    %247 = vector.load %arg2[%246, %c0_116, %c0_117] : memref<8x8x32xf32, #tpu.memory_space<vmem>>, vector<1x8x32xf32>
    %248 = vector.shape_cast %247 : vector<1x8x32xf32> to vector<8x32xf32>
    %249 = arith.truncf %248 : vector<8x32xf32> to vector<8x32xbf16>
    %c0_118 = arith.constant 0 : index
    %c0_119 = arith.constant 0 : index
    %250 = vector.load %arg3[%c0_118, %c0_119] : memref<32x512xbf16, #tpu.memory_space<vmem>>, vector<32x512xbf16>
    %cst_120 = arith.constant dense<0.000000e+00> : vector<8x512xf32>
    %251 = tpu.matmul %249, %250, %cst_120 {dimension_numbers = #tpu.dot_dimension_numbers<[1], [0], [0], [1], [0, 0, 1, 1], [], []>} : vector<8x32xbf16>, vector<32x512xbf16>, vector<8x512xf32> -> vector<8x512xf32>
    %252 = arith.addf %251, %5 : vector<8x512xf32>
    %c0_121 = arith.constant 0 : index
    %c0_122 = arith.constant 0 : index
    %253 = vector.load %arg7[%c0_121, %c0_122] : memref<8x128xf32, #tpu.memory_space<vmem>>, vector<8x128xf32>
    %254 = arith.truncf %253 : vector<8x128xf32> to vector<8x128xbf16>
    %c0_123 = arith.constant 0 : index
    %c0_124 = arith.constant 0 : index
    %255 = vector.load %arg4[%c0_123, %c0_124] : memref<128x512xbf16, #tpu.memory_space<vmem>>, vector<128x512xbf16>
    %cst_125 = arith.constant dense<0.000000e+00> : vector<8x512xf32>
    %256 = tpu.matmul %254, %255, %cst_125 {dimension_numbers = #tpu.dot_dimension_numbers<[1], [0], [0], [1], [0, 0, 1, 1], [], []>} : vector<8x128xbf16>, vector<128x512xbf16>, vector<8x512xf32> -> vector<8x512xf32>
    %257 = arith.addf %252, %256 : vector<8x512xf32>
    %258 = vector.extract_strided_slice %257 {offsets = [0, 0], sizes = [8, 128], strides = [1, 1]} : vector<8x512xf32> to vector<8x128xf32>
    %259 = arith.negf %258 : vector<8x128xf32>
    %260 = math.exp %259 : vector<8x128xf32>
    %cst_126 = arith.constant 1.000000e+00 : f32
    %261 = vector.broadcast %cst_126 : f32 to vector<8x128xf32>
    %262 = arith.addf %261, %260 : vector<8x128xf32>
    %263 = arith.divf %261, %262 : vector<8x128xf32>
    %264 = vector.extract_strided_slice %257 {offsets = [0, 128], sizes = [8, 128], strides = [1, 1]} : vector<8x512xf32> to vector<8x128xf32>
    %265 = arith.negf %264 : vector<8x128xf32>
    %266 = math.exp %265 : vector<8x128xf32>
    %cst_127 = arith.constant 1.000000e+00 : f32
    %267 = vector.broadcast %cst_127 : f32 to vector<8x128xf32>
    %268 = arith.addf %267, %266 : vector<8x128xf32>
    %269 = arith.divf %267, %268 : vector<8x128xf32>
    %270 = vector.extract_strided_slice %257 {offsets = [0, 256], sizes = [8, 128], strides = [1, 1]} : vector<8x512xf32> to vector<8x128xf32>
    %271 = math.tanh %270 : vector<8x128xf32>
    %272 = vector.extract_strided_slice %257 {offsets = [0, 384], sizes = [8, 128], strides = [1, 1]} : vector<8x512xf32> to vector<8x128xf32>
    %273 = arith.negf %272 : vector<8x128xf32>
    %274 = math.exp %273 : vector<8x128xf32>
    %cst_128 = arith.constant 1.000000e+00 : f32
    %275 = vector.broadcast %cst_128 : f32 to vector<8x128xf32>
    %276 = arith.addf %275, %274 : vector<8x128xf32>
    %277 = arith.divf %275, %276 : vector<8x128xf32>
    %c0_129 = arith.constant 0 : index
    %c0_130 = arith.constant 0 : index
    %278 = vector.load %arg6[%c0_129, %c0_130] : memref<8x128xf32, #tpu.memory_space<vmem>>, vector<8x128xf32>
    %279 = arith.mulf %263, %278 : vector<8x128xf32>
    %280 = arith.mulf %269, %271 : vector<8x128xf32>
    %281 = arith.addf %279, %280 : vector<8x128xf32>
    %282 = math.tanh %281 : vector<8x128xf32>
    %283 = arith.mulf %277, %282 : vector<8x128xf32>
    %c0_131 = arith.constant 0 : index
    %c0_132 = arith.constant 0 : index
    %284 = vector.load %arg6[%c0_131, %c0_132] : memref<8x128xf32, #tpu.memory_space<vmem>>, vector<8x128xf32>
    tpu.vector_store %arg6[%c0_131, %c0_132], %283 {strides = array<i32>} : memref<8x128xf32, #tpu.memory_space<vmem>>, vector<8x128xf32>,
    %c0_133 = arith.constant 0 : index
    %c0_134 = arith.constant 0 : index
    %285 = vector.load %arg7[%c0_133, %c0_134] : memref<8x128xf32, #tpu.memory_space<vmem>>, vector<8x128xf32>
    tpu.vector_store %arg7[%c0_133, %c0_134], %281 {strides = array<i32>} : memref<8x128xf32, #tpu.memory_space<vmem>>, vector<8x128xf32>,
    %c7_i32 = arith.constant 7 : i32
    %286 = arith.index_cast %c7_i32 : i32 to index
    %c0_135 = arith.constant 0 : index
    %c0_136 = arith.constant 0 : index
    %287 = vector.load %arg2[%286, %c0_135, %c0_136] : memref<8x8x32xf32, #tpu.memory_space<vmem>>, vector<1x8x32xf32>
    %288 = vector.shape_cast %287 : vector<1x8x32xf32> to vector<8x32xf32>
    %289 = arith.truncf %288 : vector<8x32xf32> to vector<8x32xbf16>
    %c0_137 = arith.constant 0 : index
    %c0_138 = arith.constant 0 : index
    %290 = vector.load %arg3[%c0_137, %c0_138] : memref<32x512xbf16, #tpu.memory_space<vmem>>, vector<32x512xbf16>
    %cst_139 = arith.constant dense<0.000000e+00> : vector<8x512xf32>
    %291 = tpu.matmul %289, %290, %cst_139 {dimension_numbers = #tpu.dot_dimension_numbers<[1], [0], [0], [1], [0, 0, 1, 1], [], []>} : vector<8x32xbf16>, vector<32x512xbf16>, vector<8x512xf32> -> vector<8x512xf32>
    %292 = arith.addf %291, %5 : vector<8x512xf32>
    %c0_140 = arith.constant 0 : index
    %c0_141 = arith.constant 0 : index
    %293 = vector.load %arg7[%c0_140, %c0_141] : memref<8x128xf32, #tpu.memory_space<vmem>>, vector<8x128xf32>
    %294 = arith.truncf %293 : vector<8x128xf32> to vector<8x128xbf16>
    %c0_142 = arith.constant 0 : index
    %c0_143 = arith.constant 0 : index
    %295 = vector.load %arg4[%c0_142, %c0_143] : memref<128x512xbf16, #tpu.memory_space<vmem>>, vector<128x512xbf16>
    %cst_144 = arith.constant dense<0.000000e+00> : vector<8x512xf32>
    %296 = tpu.matmul %294, %295, %cst_144 {dimension_numbers = #tpu.dot_dimension_numbers<[1], [0], [0], [1], [0, 0, 1, 1], [], []>} : vector<8x128xbf16>, vector<128x512xbf16>, vector<8x512xf32> -> vector<8x512xf32>
    %297 = arith.addf %292, %296 : vector<8x512xf32>
    %298 = vector.extract_strided_slice %297 {offsets = [0, 0], sizes = [8, 128], strides = [1, 1]} : vector<8x512xf32> to vector<8x128xf32>
    %299 = arith.negf %298 : vector<8x128xf32>
    %300 = math.exp %299 : vector<8x128xf32>
    %cst_145 = arith.constant 1.000000e+00 : f32
    %301 = vector.broadcast %cst_145 : f32 to vector<8x128xf32>
    %302 = arith.addf %301, %300 : vector<8x128xf32>
    %303 = arith.divf %301, %302 : vector<8x128xf32>
    %304 = vector.extract_strided_slice %297 {offsets = [0, 128], sizes = [8, 128], strides = [1, 1]} : vector<8x512xf32> to vector<8x128xf32>
    %305 = arith.negf %304 : vector<8x128xf32>
    %306 = math.exp %305 : vector<8x128xf32>
    %cst_146 = arith.constant 1.000000e+00 : f32
    %307 = vector.broadcast %cst_146 : f32 to vector<8x128xf32>
    %308 = arith.addf %307, %306 : vector<8x128xf32>
    %309 = arith.divf %307, %308 : vector<8x128xf32>
    %310 = vector.extract_strided_slice %297 {offsets = [0, 256], sizes = [8, 128], strides = [1, 1]} : vector<8x512xf32> to vector<8x128xf32>
    %311 = math.tanh %310 : vector<8x128xf32>
    %312 = vector.extract_strided_slice %297 {offsets = [0, 384], sizes = [8, 128], strides = [1, 1]} : vector<8x512xf32> to vector<8x128xf32>
    %313 = arith.negf %312 : vector<8x128xf32>
    %314 = math.exp %313 : vector<8x128xf32>
    %cst_147 = arith.constant 1.000000e+00 : f32
    %315 = vector.broadcast %cst_147 : f32 to vector<8x128xf32>
    %316 = arith.addf %315, %314 : vector<8x128xf32>
    %317 = arith.divf %315, %316 : vector<8x128xf32>
    %c0_148 = arith.constant 0 : index
    %c0_149 = arith.constant 0 : index
    %318 = vector.load %arg6[%c0_148, %c0_149] : memref<8x128xf32, #tpu.memory_space<vmem>>, vector<8x128xf32>
    %319 = arith.mulf %303, %318 : vector<8x128xf32>
    %320 = arith.mulf %309, %311 : vector<8x128xf32>
    %321 = arith.addf %319, %320 : vector<8x128xf32>
    %322 = math.tanh %321 : vector<8x128xf32>
    %323 = arith.mulf %317, %322 : vector<8x128xf32>
    %c0_150 = arith.constant 0 : index
    %c0_151 = arith.constant 0 : index
    %324 = vector.load %arg6[%c0_150, %c0_151] : memref<8x128xf32, #tpu.memory_space<vmem>>, vector<8x128xf32>
    tpu.vector_store %arg6[%c0_150, %c0_151], %323 {strides = array<i32>} : memref<8x128xf32, #tpu.memory_space<vmem>>, vector<8x128xf32>,
    %c0_152 = arith.constant 0 : index
    %c0_153 = arith.constant 0 : index
    %325 = vector.load %arg7[%c0_152, %c0_153] : memref<8x128xf32, #tpu.memory_space<vmem>>, vector<8x128xf32>
    tpu.vector_store %arg7[%c0_152, %c0_153], %321 {strides = array<i32>} : memref<8x128xf32, #tpu.memory_space<vmem>>, vector<8x128xf32>,
    %c8_i32 = arith.constant 8 : i32
    return
  }
  func.func @transform_0(%arg0: i32, %arg1: i32) -> (i32, i32, i32) {
    %c0_i32 = arith.constant 0 : i32
    %c0_i32_0 = arith.constant 0 : i32
    return %arg1, %arg0, %c0_i32 : i32, i32, i32
  }
  func.func @transform_1(%arg0: i32, %arg1: i32) -> (i32, i32) {
    %c0_i32 = arith.constant 0 : i32
    %c0_i32_0 = arith.constant 0 : i32
    %c0_i32_1 = arith.constant 0 : i32
    return %c0_i32, %c0_i32_0 : i32, i32
  }
  func.func @transform_2(%arg0: i32, %arg1: i32) -> (i32, i32) {
    %c0_i32 = arith.constant 0 : i32
    %c0_i32_0 = arith.constant 0 : i32
    %c0_i32_1 = arith.constant 0 : i32
    return %c0_i32, %c0_i32_0 : i32, i32
  }
  func.func @transform_3(%arg0: i32, %arg1: i32) -> (i32, i32) {
    %c0_i32 = arith.constant 0 : i32
    %c0_i32_0 = arith.constant 0 : i32
    %c0_i32_1 = arith.constant 0 : i32
    return %c0_i32, %c0_i32_0 : i32, i32
  }
  func.func @transform_4(%arg0: i32, %arg1: i32) -> (i32, i32) {
    %c0_i32 = arith.constant 0 : i32
    %c0_i32_0 = arith.constant 0 : i32
    return %arg0, %c0_i32 : i32, i32
  }
}

</mosaic_0001>

<llo_original>
// kernel: mtrnn_forward.1
$region0: #{mtrnn_forward.1}
  #allocation0 [shape = 'u32[]', space=smem, size = 0x4, offset = 0x4, fixed_abs, tag = 'smem constant byte address 0x4 - core index']
  #allocation1 [shape = 'u32[144,128]{1,0:T(1,128)}', space=vmem, size = 0x12000, scoped, tag = 'internal scratch']
  #allocation2 [shape = 'f32[8,128]{1,0:T(8,128)}', space=vmem, size = 0x1000, scoped, tag = 'scratch operand']
  %s0 = inlined_call_operand.vmem [shape: f32[8,8,32], index: 0, kind: input, shape index: {}]
  %s1 = inlined_call_operand.vmem [shape: bf16[32,512], index: 1, kind: input, shape index: {}]
  %s2 = inlined_call_operand.vmem [shape: bf16[128,512], index: 2, kind: input, shape index: {}]
  %s3 = inlined_call_operand.vmem [shape: f32[1,512], index: 3, kind: input, shape index: {}]
  %s4 = inlined_call_operand.vmem [shape: f32[8,128], index: 4, kind: output, shape index: {}]
  %s5 = sld [smem:[#allocation0]]
  $region30: #{mtrnn_forward.1} parent=0
    _
  %s7 = ssub.s32 1, %s5
  %s8 = scalar_select 0, %s7, %s5
  // Predicated region
  $region2: #{mtrnn_forward.1} parent=0 // pred_check
    _
  $region3: #{mtrnn_forward.1} parent=0 // pred_check_branch
    %10 = sbr.rel (0) target = $region5
  $region4: #{mtrnn_forward.1} parent=0 // pred_region
    _
  $region5: #{mtrnn_forward.1} parent=0 // pred_fallthru
    _
  // Predicated region
  $region6: #{mtrnn_forward.1} parent=0 // pred_check
    _
  $region7: #{mtrnn_forward.1} parent=0 // pred_check_branch
    %12 = sbr.rel (0) target = $region9
  $region8: #{mtrnn_forward.1} parent=0 // pred_region
    _
  $region9: #{mtrnn_forward.1} parent=0 // pred_fallthru
    _
  // Predicated region
  $region10: #{mtrnn_forward.1} parent=0 // pred_check
    _
  $region11: #{mtrnn_forward.1} parent=0 // pred_check_branch
    %14 = sbr.rel (0) target = $region13
  $region12: #{mtrnn_forward.1} parent=0 // pred_region
    _
  $region13: #{mtrnn_forward.1} parent=0 // pred_fallthru
    _
  // Predicated region
  $region14: #{mtrnn_forward.1} parent=0 // pred_check
    _
  $region15: #{mtrnn_forward.1} parent=0 // pred_check_branch
    %16 = sbr.rel (0) target = $region17
  $region16: #{mtrnn_forward.1} parent=0 // pred_region
    _
  $region17: #{mtrnn_forward.1} parent=0 // pred_fallthru
    _
  %p18 = scmp.eq.s32.totalorder 0, 0
  // Predicated region
  $region18: #{mtrnn_forward.1} parent=0 // pred_check
    %p19 = pneg %p18
  $region19: #{mtrnn_forward.1} parent=0 // pred_check_branch
    %21 = sbr.rel (%p19) target = $region21
  $region20: #{mtrnn_forward.1} parent=0 // pred_region
    %22 = vst [vmem:[%s4] sm:$0xff] 0.0
    %23 = vst [vmem:[#allocation2] sm:$0xff] 0.0
  $region21: #{mtrnn_forward.1} parent=0 // pred_fallthru
    _
  %v24 = vld [vmem:[%s3] sm:$0xf]
  %v26 = vlaneseq
  %v27 = vshrl.u32 %v26, 7
  %v28 = vsub.s32 0, %v27
  %v29 = vrot.slane %v24, %v28
  %v30 = vlaneseq
  %v31 = vshrl.u32 %v30, 7
  %v32 = vsub.s32 1, %v31
  %v33 = vrot.slane %v24, %v32
  %v34 = vlaneseq
  %v35 = vshrl.u32 %v34, 7
  %v36 = vsub.s32 2, %v35
  %v37 = vrot.slane %v24, %v36
  %v38 = vlaneseq
  %v39 = vshrl.u32 %v38, 7
  %v40 = vsub.s32 3, %v39
  %v41 = vrot.slane %v24, %v40
  %v46 = vld [vmem:[%s0] sm:$0xff]
  %v47 = vpack.c.bf16 %v46, %v46
  %v48 = vld [vmem:[%s1] sm:$0xff]
  %v49 = vld [vmem:[%s1 + $0x8] sm:$0xff]
  %v50 = vld [vmem:[%s1 + $0x10] sm:$0xff]
  %v51 = vld [vmem:[%s1 + $0x18] sm:$0xff]
  %v52 = vld [vmem:[%s1 + $0x20] sm:$0xff]
  %v53 = vld [vmem:[%s1 + $0x28] sm:$0xff]
  %v54 = vld [vmem:[%s1 + $0x30] sm:$0xff]
  %v55 = vld [vmem:[%s1 + $0x38] sm:$0xff]
  %v64 = vunpack.c.l.b16 %v48
  %v65 = vunpack.c.h.b16 %v48
  %v66 = vunpack.c.l.b16 %v49
  %v67 = vunpack.c.h.b16 %v49
  %v68 = vunpack.c.l.b16 %v50
  %v69 = vunpack.c.h.b16 %v50
  %v70 = vunpack.c.l.b16 %v51
  %v71 = vunpack.c.h.b16 %v51
  %v72 = vunpack.c.l.b16 %v52
  %v73 = vunpack.c.h.b16 %v52
  %v74 = vunpack.c.l.b16 %v53
  %v75 = vunpack.c.h.b16 %v53
  %v76 = vunpack.c.l.b16 %v54
  %v77 = vunpack.c.h.b16 %v54
  %v78 = vunpack.c.l.b16 %v55
  %v79 = vunpack.c.h.b16 %v55
  %v80 = vpack.c.b16 %v68, %v64
  %v81 = vpack.c.b16 %v69, %v65
  %v82 = vpack.c.b16 %v70, %v66
  %v83 = vpack.c.b16 %v71, %v67
  %v84 = vpack.c.b16 %v76, %v72
  %v85 = vpack.c.b16 %v77, %v73
  %v86 = vpack.c.b16 %v78, %v74
  %v87 = vpack.c.b16 %v79, %v75
  %vm96 = vcmask 261120
  %v98 = vsel %vm96, %v47, 0
  %100 = vmatprep.subr.bf16.mxu0 %v81
  %101 = vmatpush1.bf16.msra.mxu0 %v80
  %102 = vmatprep.subr.bf16.mxu0 %v85
  %103 = vmatpush1.bf16.msra.mxu0 %v84
  %104 = vmatprep.subr.bf16.mxu0 0
  %105 = vmatpush1.bf16.msra.mxu0 0
  %106 = vmatprep.subr.bf16.mxu0 0
  %107 = vmatpush1.bf16.msra.mxu0 0
  %108 = vmatprep.subr.bf16.mxu0 0
  %109 = vmatpush1.bf16.msra.mxu0 0
  %110 = vmatprep.subr.bf16.mxu0 0
  %111 = vmatpush1.bf16.msra.mxu0 0
  %112 = vmatprep.subr.bf16.mxu0 0
  %113 = vmatpush1.bf16.msra.mxu0 0
  %114 = vmatprep.subr.bf16.mxu0 0
  %115 = vmatpush1.bf16.msra.mxu0 0
  %116 = vmatprep.subr.bf16.mxu0 0
  %117 = vmatpush1.bf16.msra.mxu0 0
  %118 = vmatprep.subr.bf16.mxu0 0
  %119 = vmatpush1.bf16.msra.mxu0 0
  %120 = vmatprep.subr.bf16.mxu0 0
  %121 = vmatpush1.bf16.msra.mxu0 0
  %122 = vmatprep.subr.bf16.mxu0 0
  %123 = vmatpush1.bf16.msra.mxu0 0
  %124 = vmatprep.subr.bf16.mxu0 0
  %125 = vmatpush1.bf16.msra.mxu0 0
  %126 = vmatprep.subr.bf16.mxu0 0
  %127 = vmatpush1.bf16.msra.mxu0 0
  %128 = vmatprep.subr.bf16.mxu0 0
  %129 = vmatpush1.bf16.msra.mxu0 0
  %130 = vmatprep.subr.bf16.mxu0 0
  %131 = vmatpush1.bf16.msra.mxu0 0
  %132 = vmatprep.mubr.bf16.mxu0 0
  %133 = vmatmul.mubr.bf16.gmra.mrb[0].mxu0 %v98
  %v134 = vpop.f32.mrb[0].mxu0
  %v135 = vadd.f32 %v29, %v134
  %v136 = vpop.f32.mrb[0].mxu0
  %v137 = vadd.f32 %v33, %v136
  %v138 = vpop.f32.mrb[0].mxu0
  %v139 = vpop.f32.mrb[0].mxu0
  %140 = vdwg.mxu0
  %141 = vmatprep.subr.bf16.mxu0 %v83
  %142 = vmatpush1.bf16.msra.mxu0 %v82
  %143 = vmatprep.subr.bf16.mxu0 %v87
  %144 = vmatpush1.bf16.msra.mxu0 %v86
  %145 = vmatprep.subr.bf16.mxu0 0
  %146 = vmatpush1.bf16.msra.mxu0 0
  %147 = vmatprep.subr.bf16.mxu0 0
  %148 = vmatpush1.bf16.msra.mxu0 0
  %149 = vmatprep.subr.bf16.mxu0 0
  %150 = vmatpush1.bf16.msra.mxu0 0
  %151 = vmatprep.subr.bf16.mxu0 0
  %152 = vmatpush1.bf16.msra.mxu0 0
  %153 = vmatprep.subr.bf16.mxu0 0
  %154 = vmatpush1.bf16.msra.mxu0 0
  %155 = vmatprep.subr.bf16.mxu0 0
  %156 = vmatpush1.bf16.msra.mxu0 0
  %157 = vmatprep.subr.bf16.mxu0 0
  %158 = vmatpush1.bf16.msra.mxu0 0
  %159 = vmatprep.subr.bf16.mxu0 0
  %160 = vmatpush1.bf16.msra.mxu0 0
  %161 = vmatprep.subr.bf16.mxu0 0
  %162 = vmatpush1.bf16.msra.mxu0 0
  %163 = vmatprep.subr.bf16.mxu0 0
  %164 = vmatpush1.bf16.msra.mxu0 0
  %165 = vmatprep.subr.bf16.mxu0 0
  %166 = vmatpush1.bf16.msra.mxu0 0
  %167 = vmatprep.subr.bf16.mxu0 0
  %168 = vmatpush1.bf16.msra.mxu0 0
  %169 = vmatprep.subr.bf16.mxu0 0
  %170 = vmatpush1.bf16.msra.mxu0 0
  %171 = vmatprep.subr.bf16.mxu0 0
  %172 = vmatpush1.bf16.msra.mxu0 0
  %173 = vmatprep.mubr.bf16.mxu0 0
  %174 = vmatmul.mubr.bf16.gmra.mrb[0].mxu0 %v98
  %v175 = vpop.f32.mrb[0].mxu0
  %v176 = vadd.f32 %v37, %v175
  %v177 = vpop.f32.mrb[0].mxu0
  %v178 = vadd.f32 %v41, %v177
  %v179 = vpop.f32.mrb[0].mxu0
  %v180 = vpop.f32.mrb[0].mxu0
  %181 = vdwg.mxu0
  %v182 = vld [vmem:[#allocation2] sm:$0xff]
  %v183 = vpack.c.bf16 %v182, %v182
  %v184 = vld [vmem:[%s2] sm:$0xff]
  %v185 = vld [vmem:[%s2 + $0x8] sm:$0xff]
  %v186 = vld [vmem:[%s2 + $0x10] sm:$0xff]
  %v187 = vld [vmem:[%s2 + $0x18] sm:$0xff]
  %v188 = vld [vmem:[%s2 + $0x20] sm:$0xff]
  %v189 = vld [vmem:[%s2 + $0x28] sm:$0xff]
  %v190 = vld [vmem:[%s2 + $0x30] sm:$0xff]
  %v191 = vld [vmem:[%s2 + $0x38] sm:$0xff]
  %v192 = vld [vmem:[%s2 + $0x40] sm:$0xff]
  %v193 = vld [vmem:[%s2 + $0x48] sm:$0xff]
  %v194 = vld [vmem:[%s2 + $0x50] sm:$0xff]
  %v195 = vld [vmem:[%s2 + $0x58] sm:$0xff]
  %v196 = vld [vmem:[%s2 + $0x60] sm:$0xff]
  %v197 = vld [vmem:[%s2 + $0x68] sm:$0xff]
  %v198 = vld [vmem:[%s2 + $0x70] sm:$0xff]
  %v199 = vld [vmem:[%s2 + $0x78] sm:$0xff]
  %v200 = vld [vmem:[%s2 + $0x80] sm:$0xff]
  %v201 = vld [vmem:[%s2 + $0x88] sm:$0xff]
  %v202 = vld [vmem:[%s2 + $0x90] sm:$0xff]
  %v203 = vld [vmem:[%s2 + $0x98] sm:$0xff]
  %v204 = vld [vmem:[%s2 + $0xa0] sm:$0xff]
  %v205 = vld [vmem:[%s2 + $0xa8] sm:$0xff]
  %v206 = vld [vmem:[%s2 + $0xb0] sm:$0xff]
  %v207 = vld [vmem:[%s2 + $0xb8] sm:$0xff]
  %v208 = vld [vmem:[%s2 + $0xc0] sm:$0xff]
  %v209 = vld [vmem:[%s2 + $0xc8] sm:$0xff]
  %v210 = vld [vmem:[%s2 + $0xd0] sm:$0xff]
  %v211 = vld [vmem:[%s2 + $0xd8] sm:$0xff]
  %v212 = vld [vmem:[%s2 + $0xe0] sm:$0xff]
  %v213 = vld [vmem:[%s2 + $0xe8] sm:$0xff]
  %v214 = vld [vmem:[%s2 + $0xf0] sm:$0xff]
  %v215 = vld [vmem:[%s2 + $0xf8] sm:$0xff]
  %v248 = vunpack.c.l.b16 %v184
  %v249 = vunpack.c.h.b16 %v184
  %v250 = vunpack.c.l.b16 %v185
  %v251 = vunpack.c.h.b16 %v185
  %v252 = vunpack.c.l.b16 %v186
  %v253 = vunpack.c.h.b16 %v186
  %v254 = vunpack.c.l.b16 %v187
  %v255 = vunpack.c.h.b16 %v187
  %v256 = vunpack.c.l.b16 %v188
  %v257 = vunpack.c.h.b16 %v188
  %v258 = vunpack.c.l.b16 %v189
  %v259 = vunpack.c.h.b16 %v189
  %v260 = vunpack.c.l.b16 %v190
  %v261 = vunpack.c.h.b16 %v190
  %v262 = vunpack.c.l.b16 %v191
  %v263 = vunpack.c.h.b16 %v191
  %v264 = vunpack.c.l.b16 %v192
  %v265 = vunpack.c.h.b16 %v192
  %v266 = vunpack.c.l.b16 %v193
  %v267 = vunpack.c.h.b16 %v193
  %v268 = vunpack.c.l.b16 %v194
  %v269 = vunpack.c.h.b16 %v194
  %v270 = vunpack.c.l.b16 %v195
  %v271 = vunpack.c.h.b16 %v195
  %v272 = vunpack.c.l.b16 %v196
  %v273 = vunpack.c.h.b16 %v196
  %v274 = vunpack.c.l.b16 %v197
  %v275 = vunpack.c.h.b16 %v197
  %v276 = vunpack.c.l.b16 %v198
  %v277 = vunpack.c.h.b16 %v198
  %v278 = vunpack.c.l.b16 %v199
  %v279 = vunpack.c.h.b16 %v199
  %v280 = vunpack.c.l.b16 %v200
  %v281 = vunpack.c.h.b16 %v200
  %v282 = vunpack.c.l.b16 %v201
  %v283 = vunpack.c.h.b16 %v201
  %v284 = vunpack.c.l.b16 %v202
  %v285 = vunpack.c.h.b16 %v202
  %v286 = vunpack.c.l.b16 %v203
  %v287 = vunpack.c.h.b16 %v203
  %v288 = vunpack.c.l.b16 %v204
  %v289 = vunpack.c.h.b16 %v204
  %v290 = vunpack.c.l.b16 %v205
  %v291 = vunpack.c.h.b16 %v205
  %v292 = vunpack.c.l.b16 %v206
  %v293 = vunpack.c.h.b16 %v206
  %v294 = vunpack.c.l.b16 %v207
  %v295 = vunpack.c.h.b16 %v207
  %v296 = vunpack.c.l.b16 %v208
  %v297 = vunpack.c.h.b16 %v208
  %v298 = vunpack.c.l.b16 %v209
  %v299 = vunpack.c.h.b16 %v209
  %v300 = vunpack.c.l.b16 %v210
  %v301 = vunpack.c.h.b16 %v210
  %v302 = vunpack.c.l.b16 %v211
  %v303 = vunpack.c.h.b16 %v211
  %v304 = vunpack.c.l.b16 %v212
  %v305 = vunpack.c.h.b16 %v212
  %v306 = vunpack.c.l.b16 %v213
  %v307 = vunpack.c.h.b16 %v213
  %v308 = vunpack.c.l.b16 %v214
  %v309 = vunpack.c.h.b16 %v214
  %v310 = vunpack.c.l.b16 %v215
  %v311 = vunpack.c.h.b16 %v215
  %v312 = vpack.c.b16 %v252, %v248
  %v313 = vpack.c.b16 %v253, %v249
  %v314 = vpack.c.b16 %v254, %v250
  %v315 = vpack.c.b16 %v255, %v251
  %v316 = vpack.c.b16 %v260, %v256
  %v317 = vpack.c.b16 %v261, %v257
  %v318 = vpack.c.b16 %v262, %v258
  %v319 = vpack.c.b16 %v263, %v259
  %v320 = vpack.c.b16 %v268, %v264
  %v321 = vpack.c.b16 %v269, %v265
  %v322 = vpack.c.b16 %v270, %v266
  %v323 = vpack.c.b16 %v271, %v267
  %v324 = vpack.c.b16 %v276, %v272
  %v325 = vpack.c.b16 %v277, %v273
  %v326 = vpack.c.b16 %v278, %v274
  %v327 = vpack.c.b16 %v279, %v275
  %v328 = vpack.c.b16 %v284, %v280
  %v329 = vpack.c.b16 %v285, %v281
  %v330 = vpack.c.b16 %v286, %v282
  %v331 = vpack.c.b16 %v287, %v283
  %v332 = vpack.c.b16 %v292, %v288
  %v333 = vpack.c.b16 %v293, %v289
  %v334 = vpack.c.b16 %v294, %v290
  %v335 = vpack.c.b16 %v295, %v291
  %v336 = vpack.c.b16 %v300, %v296
  %v337 = vpack.c.b16 %v301, %v297
  %v338 = vpack.c.b16 %v302, %v298
  %v339 = vpack.c.b16 %v303, %v299
  %v340 = vpack.c.b16 %v308, %v304
  %v341 = vpack.c.b16 %v309, %v305
  %v342 = vpack.c.b16 %v310, %v306
  %v343 = vpack.c.b16 %v311, %v307
  %376 = vmatprep.subr.bf16.mxu0 %v313
  %377 = vmatpush1.bf16.msra.mxu0 %v312
  %378 = vmatprep.subr.bf16.mxu0 %v317
  %379 = vmatpush1.bf16.msra.mxu0 %v316
  %380 = vmatprep.subr.bf16.mxu0 %v321
  %381 = vmatpush1.bf16.msra.mxu0 %v320
  %382 = vmatprep.subr.bf16.mxu0 %v325
  %383 = vmatpush1.bf16.msra.mxu0 %v324
  %384 = vmatprep.subr.bf16.mxu0 %v329
  %385 = vmatpush1.bf16.msra.mxu0 %v328
  %386 = vmatprep.subr.bf16.mxu0 %v333
  %387 = vmatpush1.bf16.msra.mxu0 %v332
  %388 = vmatprep.subr.bf16.mxu0 %v337
  %389 = vmatpush1.bf16.msra.mxu0 %v336
  %390 = vmatprep.subr.bf16.mxu0 %v341
  %391 = vmatpush1.bf16.msra.mxu0 %v340
  %392 = vmatprep.subr.bf16.mxu0 0
  %393 = vmatpush1.bf16.msra.mxu0 0
  %394 = vmatprep.subr.bf16.mxu0 0
  %395 = vmatpush1.bf16.msra.mxu0 0
  %396 = vmatprep.subr.bf16.mxu0 0
  %397 = vmatpush1.bf16.msra.mxu0 0
  %398 = vmatprep.subr.bf16.mxu0 0
  %399 = vmatpush1.bf16.msra.mxu0 0
  %400 = vmatprep.subr.bf16.mxu0 0
  %401 = vmatpush1.bf16.msra.mxu0 0
  %402 = vmatprep.subr.bf16.mxu0 0
  %403 = vmatpush1.bf16.msra.mxu0 0
  %404 = vmatprep.subr.bf16.mxu0 0
  %405 = vmatpush1.bf16.msra.mxu0 0
  %406 = vmatprep.subr.bf16.mxu0 0
  %407 = vmatpush1.bf16.msra.mxu0 0
  %408 = vmatprep.mubr.bf16.mxu0 0
  %409 = vmatmul.mubr.bf16.gmra.mrb[0].mxu0 %v183
  %v410 = vpop.f32.mrb[0].mxu0
  %v411 = vadd.f32 0.0, %v410
  %v412 = vpop.f32.mrb[0].mxu0
  %v413 = vadd.f32 0.0, %v412
  %v414 = vpop.f32.mrb[0].mxu0
  %v415 = vpop.f32.mrb[0].mxu0
  %416 = vdwg.mxu0
  %417 = vmatprep.subr.bf16.mxu0 %v315
  %418 = vmatpush1.bf16.msra.mxu0 %v314
  %419 = vmatprep.subr.bf16.mxu0 %v319
  %420 = vmatpush1.bf16.msra.mxu0 %v318
  %421 = vmatprep.subr.bf16.mxu0 %v323
  %422 = vmatpush1.bf16.msra.mxu0 %v322
  %423 = vmatprep.subr.bf16.mxu0 %v327
  %424 = vmatpush1.bf16.msra.mxu0 %v326
  %425 = vmatprep.subr.bf16.mxu0 %v331
  %426 = vmatpush1.bf16.msra.mxu0 %v330
  %427 = vmatprep.subr.bf16.mxu0 %v335
  %428 = vmatpush1.bf16.msra.mxu0 %v334
  %429 = vmatprep.subr.bf16.mxu0 %v339
  %430 = vmatpush1.bf16.msra.mxu0 %v338
  %431 = vmatprep.subr.bf16.mxu0 %v343
  %432 = vmatpush1.bf16.msra.mxu0 %v342
  %433 = vmatprep.subr.bf16.mxu0 0
  %434 = vmatpush1.bf16.msra.mxu0 0
  %435 = vmatprep.subr.bf16.mxu0 0
  %436 = vmatpush1.bf16.msra.mxu0 0
  %437 = vmatprep.subr.bf16.mxu0 0
  %438 = vmatpush1.bf16.msra.mxu0 0
  %439 = vmatprep.subr.bf16.mxu0 0
  %440 = vmatpush1.bf16.msra.mxu0 0
  %441 = vmatprep.subr.bf16.mxu0 0
  %442 = vmatpush1.bf16.msra.mxu0 0
  %443 = vmatprep.subr.bf16.mxu0 0
  %444 = vmatpush1.bf16.msra.mxu0 0
  %445 = vmatprep.subr.bf16.mxu0 0
  %446 = vmatpush1.bf16.msra.mxu0 0
  %447 = vmatprep.subr.bf16.mxu0 0
  %448 = vmatpush1.bf16.msra.mxu0 0
  %449 = vmatprep.mubr.bf16.mxu0 0
  %450 = vmatmul.mubr.bf16.gmra.mrb[0].mxu0 %v183
  %v451 = vpop.f32.mrb[0].mxu0
  %v452 = vadd.f32 0.0, %v451
  %v453 = vpop.f32.mrb[0].mxu0
  %v454 = vadd.f32 0.0, %v453
  %v455 = vpop.f32.mrb[0].mxu0
  %v456 = vpop.f32.mrb[0].mxu0
  %457 = vdwg.mxu0
  %v458 = vadd.f32 %v135, %v411
  %v459 = vadd.f32 %v137, %v413
  %v460 = vadd.f32 %v176, %v452
  %v461 = vadd.f32 %v178, %v454
  %v462 = vxor.u32 %v458, 2147483648
  %v463 = vmul.f32 %v462, 1.442695
  %v464 = vpow.pop %v463
  %v465 = vadd.f32 %v464, 1.0
  %v466 = vrcp.pop %v465
  %v467 = vmul.f32 1.0, %v466
  %v468 = vxor.u32 %v459, 2147483648
  %v469 = vmul.f32 %v468, 1.442695
  %v470 = vpow.pop %v469
  %v471 = vadd.f32 %v470, 1.0
  %v472 = vrcp.pop %v471
  %v473 = vmul.f32 1.0, %v472
  %v474 = vtanh.pop %v460
  %v475 = vxor.u32 %v461, 2147483648
  %v476 = vmul.f32 %v475, 1.442695
  %v477 = vpow.pop %v476
  %v478 = vadd.f32 %v477, 1.0
  %v479 = vrcp.pop %v478
  %v480 = vmul.f32 1.0, %v479
  %v481 = vld [vmem:[%s4] sm:$0xff]
  %v482 = vmul.f32 %v467, %v481
  %v483 = vmul.f32 %v473, %v474
  %v484 = vadd.f32 %v482, %v483
  %v485 = vtanh.pop %v484
  %v486 = vmul.f32 %v480, %v485
  %487 = vst [vmem:[%s4] sm:$0xff] %v486
  %488 = vst [vmem:[#allocation2] sm:$0xff] %v484
  %s489 = scalar_lea.vmem %s0, 8
  %v490 = vld [vmem:[%s489] sm:$0xff]
  %v491 = vpack.c.bf16 %v490, %v490
  %v492 = vld [vmem:[%s1] sm:$0xff]
  %v493 = vld [vmem:[%s1 + $0x8] sm:$0xff]
  %v494 = vld [vmem:[%s1 + $0x10] sm:$0xff]
  %v495 = vld [vmem:[%s1 + $0x18] sm:$0xff]
  %v496 = vld [vmem:[%s1 + $0x20] sm:$0xff]
  %v497 = vld [vmem:[%s1 + $0x28] sm:$0xff]
  %v498 = vld [vmem:[%s1 + $0x30] sm:$0xff]
  %v499 = vld [vmem:[%s1 + $0x38] sm:$0xff]
  %v508 = vunpack.c.l.b16 %v492
  %v509 = vunpack.c.h.b16 %v492
  %v510 = vunpack.c.l.b16 %v493
  %v511 = vunpack.c.h.b16 %v493
  %v512 = vunpack.c.l.b16 %v494
  %v513 = vunpack.c.h.b16 %v494
  %v514 = vunpack.c.l.b16 %v495
  %v515 = vunpack.c.h.b16 %v495
  %v516 = vunpack.c.l.b16 %v496
  %v517 = vunpack.c.h.b16 %v496
  %v518 = vunpack.c.l.b16 %v497
  %v519 = vunpack.c.h.b16 %v497
  %v520 = vunpack.c.l.b16 %v498
  %v521 = vunpack.c.h.b16 %v498
  %v522 = vunpack.c.l.b16 %v499
  %v523 = vunpack.c.h.b16 %v499
  %v524 = vpack.c.b16 %v512, %v508
  %v525 = vpack.c.b16 %v513, %v509
  %v526 = vpack.c.b16 %v514, %v510
  %v527 = vpack.c.b16 %v515, %v511
  %v528 = vpack.c.b16 %v520, %v516
  %v529 = vpack.c.b16 %v521, %v517
  %v530 = vpack.c.b16 %v522, %v518
  %v531 = vpack.c.b16 %v523, %v519
  %v541 = vsel %vm96, %v491, 0
  %543 = vmatprep.subr.bf16.mxu0 %v525
  %544 = vmatpush1.bf16.msra.mxu0 %v524
  %545 = vmatprep.subr.bf16.mxu0 %v529
  %546 = vmatpush1.bf16.msra.mxu0 %v528
  %547 = vmatprep.subr.bf16.mxu0 0
  %548 = vmatpush1.bf16.msra.mxu0 0
  %549 = vmatprep.subr.bf16.mxu0 0
  %550 = vmatpush1.bf16.msra.mxu0 0
  %551 = vmatprep.subr.bf16.mxu0 0
  %552 = vmatpush1.bf16.msra.mxu0 0
  %553 = vmatprep.subr.bf16.mxu0 0
  %554 = vmatpush1.bf16.msra.mxu0 0
  %555 = vmatprep.subr.bf16.mxu0 0
  %556 = vmatpush1.bf16.msra.mxu0 0
  %557 = vmatprep.subr.bf16.mxu0 0
  %558 = vmatpush1.bf16.msra.mxu0 0
  %559 = vmatprep.subr.bf16.mxu0 0
  %560 = vmatpush1.bf16.msra.mxu0 0
  %561 = vmatprep.subr.bf16.mxu0 0
  %562 = vmatpush1.bf16.msra.mxu0 0
  %563 = vmatprep.subr.bf16.mxu0 0
  %564 = vmatpush1.bf16.msra.mxu0 0
  %565 = vmatprep.subr.bf16.mxu0 0
  %566 = vmatpush1.bf16.msra.mxu0 0
  %567 = vmatprep.subr.bf16.mxu0 0
  %568 = vmatpush1.bf16.msra.mxu0 0
  %569 = vmatprep.subr.bf16.mxu0 0
  %570 = vmatpush1.bf16.msra.mxu0 0
  %571 = vmatprep.subr.bf16.mxu0 0
  %572 = vmatpush1.bf16.msra.mxu0 0
  %573 = vmatprep.subr.bf16.mxu0 0
  %574 = vmatpush1.bf16.msra.mxu0 0
  %575 = vmatprep.mubr.bf16.mxu0 0
  %576 = vmatmul.mubr.bf16.gmra.mrb[0].mxu0 %v541
  %v577 = vpop.f32.mrb[0].mxu0
  %v578 = vadd.f32 %v29, %v577
  %v579 = vpop.f32.mrb[0].mxu0
  %v580 = vadd.f32 %v33, %v579
  %v581 = vpop.f32.mrb[0].mxu0
  %v582 = vpop.f32.mrb[0].mxu0
  %583 = vdwg.mxu0
  %584 = vmatprep.subr.bf16.mxu0 %v527
  %585 = vmatpush1.bf16.msra.mxu0 %v526
  %586 = vmatprep.subr.bf16.mxu0 %v531
  %587 = vmatpush1.bf16.msra.mxu0 %v530
  %588 = vmatprep.subr.bf16.mxu0 0
  %589 = vmatpush1.bf16.msra.mxu0 0
  %590 = vmatprep.subr.bf16.mxu0 0
  %591 = vmatpush1.bf16.msra.mxu0 0
  %592 = vmatprep.subr.bf16.mxu0 0
  %593 = vmatpush1.bf16.msra.mxu0 0
  %594 = vmatprep.subr.bf16.mxu0 0
  %595 = vmatpush1.bf16.msra.mxu0 0
  %596 = vmatprep.subr.bf16.mxu0 0
  %597 = vmatpush1.bf16.msra.mxu0 0
  %598 = vmatprep.subr.bf16.mxu0 0
  %599 = vmatpush1.bf16.msra.mxu0 0
  %600 = vmatprep.subr.bf16.mxu0 0
  %601 = vmatpush1.bf16.msra.mxu0 0
  %602 = vmatprep.subr.bf16.mxu0 0
  %603 = vmatpush1.bf16.msra.mxu0 0
  %604 = vmatprep.subr.bf16.mxu0 0
  %605 = vmatpush1.bf16.msra.mxu0 0
  %606 = vmatprep.subr.bf16.mxu0 0
  %607 = vmatpush1.bf16.msra.mxu0 0
  %608 = vmatprep.subr.bf16.mxu0 0
  %609 = vmatpush1.bf16.msra.mxu0 0
  %610 = vmatprep.subr.bf16.mxu0 0
  %611 = vmatpush1.bf16.msra.mxu0 0
  %612 = vmatprep.subr.bf16.mxu0 0
  %613 = vmatpush1.bf16.msra.mxu0 0
  %614 = vmatprep.subr.bf16.mxu0 0
  %615 = vmatpush1.bf16.msra.mxu0 0
  %616 = vmatprep.mubr.bf16.mxu0 0
  %617 = vmatmul.mubr.bf16.gmra.mrb[0].mxu0 %v541
  %v618 = vpop.f32.mrb[0].mxu0
  %v619 = vadd.f32 %v37, %v618
  %v620 = vpop.f32.mrb[0].mxu0
  %v621 = vadd.f32 %v41, %v620
  %v622 = vpop.f32.mrb[0].mxu0
  %v623 = vpop.f32.mrb[0].mxu0
  %624 = vdwg.mxu0
  %v625 = vld [vmem:[#allocation2] sm:$0xff]
  %v626 = vpack.c.bf16 %v625, %v625
  %v627 = vld [vmem:[%s2] sm:$0xff]
  %v628 = vld [vmem:[%s2 + $0x8] sm:$0xff]
  %v629 = vld [vmem:[%s2 + $0x10] sm:$0xff]
  %v630 = vld [vmem:[%s2 + $0x18] sm:$0xff]
  %v631 = vld [vmem:[%s2 + $0x20] sm:$0xff]
  %v632 = vld [vmem:[%s2 + $0x28] sm:$0xff]
  %v633 = vld [vmem:[%s2 + $0x30] sm:$0xff]
  %v634 = vld [vmem:[%s2 + $0x38] sm:$0xff]
  %v635 = vld [vmem:[%s2 + $0x40] sm:$0xff]
  %v636 = vld [vmem:[%s2 + $0x48] sm:$0xff]
  %v637 = vld [vmem:[%s2 + $0x50] sm:$0xff]
  %v638 = vld [vmem:[%s2 + $0x58] sm:$0xff]
  %v639 = vld [vmem:[%s2 + $0x60] sm:$0xff]
  %v640 = vld [vmem:[%s2 + $0x68] sm:$0xff]
  %v641 = vld [vmem:[%s2 + $0x70] sm:$0xff]
  %v642 = vld [vmem:[%s2 + $0x78] sm:$0xff]
  %v643 = vld [vmem:[%s2 + $0x80] sm:$0xff]
  %v644 = vld [vmem:[%s2 + $0x88] sm:$0xff]
  %v645 = vld [vmem:[%s2 + $0x90] sm:$0xff]
  %v646 = vld [vmem:[%s2 + $0x98] sm:$0xff]
  %v647 = vld [vmem:[%s2 + $0xa0] sm:$0xff]
  %v648 = vld [vmem:[%s2 + $0xa8] sm:$0xff]
  %v649 = vld [vmem:[%s2 + $0xb0] sm:$0xff]
  %v650 = vld [vmem:[%s2 + $0xb8] sm:$0xff]
  %v651 = vld [vmem:[%s2 + $0xc0] sm:$0xff]
  %v652 = vld [vmem:[%s2 + $0xc8] sm:$0xff]
  %v653 = vld [vmem:[%s2 + $0xd0] sm:$0xff]
  %v654 = vld [vmem:[%s2 + $0xd8] sm:$0xff]
  %v655 = vld [vmem:[%s2 + $0xe0] sm:$0xff]
  %v656 = vld [vmem:[%s2 + $0xe8] sm:$0xff]
  %v657 = vld [vmem:[%s2 + $0xf0] sm:$0xff]
  %v658 = vld [vmem:[%s2 + $0xf8] sm:$0xff]
  %v691 = vunpack.c.l.b16 %v627
  %v692 = vunpack.c.h.b16 %v627
  %v693 = vunpack.c.l.b16 %v628
  %v694 = vunpack.c.h.b16 %v628
  %v695 = vunpack.c.l.b16 %v629
  %v696 = vunpack.c.h.b16 %v629
  %v697 = vunpack.c.l.b16 %v630
  %v698 = vunpack.c.h.b16 %v630
  %v699 = vunpack.c.l.b16 %v631
  %v700 = vunpack.c.h.b16 %v631
  %v701 = vunpack.c.l.b16 %v632
  %v702 = vunpack.c.h.b16 %v632
  %v703 = vunpack.c.l.b16 %v633
  %v704 = vunpack.c.h.b16 %v633
  %v705 = vunpack.c.l.b16 %v634
  %v706 = vunpack.c.h.b16 %v634
  %v707 = vunpack.c.l.b16 %v635
  %v708 = vunpack.c.h.b16 %v635
  %v709 = vunpack.c.l.b16 %v636
  %v710 = vunpack.c.h.b16 %v636
  %v711 = vunpack.c.l.b16 %v637
  %v712 = vunpack.c.h.b16 %v637
  %v713 = vunpack.c.l.b16 %v638
  %v714 = vunpack.c.h.b16 %v638
  %v715 = vunpack.c.l.b16 %v639
  %v716 = vunpack.c.h.b16 %v639
  %v717 = vunpack.c.l.b16 %v640
  %v718 = vunpack.c.h.b16 %v640
  %v719 = vunpack.c.l.b16 %v641
  %v720 = vunpack.c.h.b16 %v641
  %v721 = vunpack.c.l.b16 %v642
  %v722 = vunpack.c.h.b16 %v642
  %v723 = vunpack.c.l.b16 %v643
  %v724 = vunpack.c.h.b16 %v643
  %v725 = vunpack.c.l.b16 %v644
  %v726 = vunpack.c.h.b16 %v644
  %v727 = vunpack.c.l.b16 %v645
  %v728 = vunpack.c.h.b16 %v645
  %v729 = vunpack.c.l.b16 %v646
  %v730 = vunpack.c.h.b16 %v646
  %v731 = vunpack.c.l.b16 %v647
  %v732 = vunpack.c.h.b16 %v647
  %v733 = vunpack.c.l.b16 %v648
  %v734 = vunpack.c.h.b16 %v648
  %v735 = vunpack.c.l.b16 %v649
  %v736 = vunpack.c.h.b16 %v649
  %v737 = vunpack.c.l.b16 %v650
  %v738 = vunpack.c.h.b16 %v650
  %v739 = vunpack.c.l.b16 %v651
  %v740 = vunpack.c.h.b16 %v651
  %v741 = vunpack.c.l.b16 %v652
  %v742 = vunpack.c.h.b16 %v652
  %v743 = vunpack.c.l.b16 %v653
  %v744 = vunpack.c.h.b16 %v653
  %v745 = vunpack.c.l.b16 %v654
  %v746 = vunpack.c.h.b16 %v654
  %v747 = vunpack.c.l.b16 %v655
  %v748 = vunpack.c.h.b16 %v655
  %v749 = vunpack.c.l.b16 %v656
  %v750 = vunpack.c.h.b16 %v656
  %v751 = vunpack.c.l.b16 %v657
  %v752 = vunpack.c.h.b16 %v657
  %v753 = vunpack.c.l.b16 %v658
  %v754 = vunpack.c.h.b16 %v658
  %v755 = vpack.c.b16 %v695, %v691
  %v756 = vpack.c.b16 %v696, %v692
  %v757 = vpack.c.b16 %v697, %v693
  %v758 = vpack.c.b16 %v698, %v694
  %v759 = vpack.c.b16 %v703, %v699
  %v760 = vpack.c.b16 %v704, %v700
  %v761 = vpack.c.b16 %v705, %v701
  %v762 = vpack.c.b16 %v706, %v702
  %v763 = vpack.c.b16 %v711, %v707
  %v764 = vpack.c.b16 %v712, %v708
  %v765 = vpack.c.b16 %v713, %v709
  %v766 = vpack.c.b16 %v714, %v710
  %v767 = vpack.c.b16 %v719, %v715
  %v768 = vpack.c.b16 %v720, %v716
  %v769 = vpack.c.b16 %v721, %v717
  %v770 = vpack.c.b16 %v722, %v718
  %v771 = vpack.c.b16 %v727, %v723
  %v772 = vpack.c.b16 %v728, %v724
  %v773 = vpack.c.b16 %v729, %v725
  %v774 = vpack.c.b16 %v730, %v726
  %v775 = vpack.c.b16 %v735, %v731
  %v776 = vpack.c.b16 %v736, %v732
  %v777 = vpack.c.b16 %v737, %v733
  %v778 = vpack.c.b16 %v738, %v734
  %v779 = vpack.c.b16 %v743, %v739
  %v780 = vpack.c.b16 %v744, %v740
  %v781 = vpack.c.b16 %v745, %v741
  %v782 = vpack.c.b16 %v746, %v742
  %v783 = vpack.c.b16 %v751, %v747
  %v784 = vpack.c.b16 %v752, %v748
  %v785 = vpack.c.b16 %v753, %v749
  %v786 = vpack.c.b16 %v754, %v750
  %819 = vmatprep.subr.bf16.mxu0 %v756
  %820 = vmatpush1.bf16.msra.mxu0 %v755
  %821 = vmatprep.subr.bf16.mxu0 %v760
  %822 = vmatpush1.bf16.msra.mxu0 %v759
  %823 = vmatprep.subr.bf16.mxu0 %v764
  %824 = vmatpush1.bf16.msra.mxu0 %v763
  %825 = vmatprep.subr.bf16.mxu0 %v768
  %826 = vmatpush1.bf16.msra.mxu0 %v767
  %827 = vmatprep.subr.bf16.mxu0 %v772
  %828 = vmatpush1.bf16.msra.mxu0 %v771
  %829 = vmatprep.subr.bf16.mxu0 %v776
  %830 = vmatpush1.bf16.msra.mxu0 %v775
  %831 = vmatprep.subr.bf16.mxu0 %v780
  %832 = vmatpush1.bf16.msra.mxu0 %v779
  %833 = vmatprep.subr.bf16.mxu0 %v784
  %834 = vmatpush1.bf16.msra.mxu0 %v783
  %835 = vmatprep.subr.bf16.mxu0 0
  %836 = vmatpush1.bf16.msra.mxu0 0
  %837 = vmatprep.subr.bf16.mxu0 0
  %838 = vmatpush1.bf16.msra.mxu0 0
  %839 = vmatprep.subr.bf16.mxu0 0
  %840 = vmatpush1.bf16.msra.mxu0 0
  %841 = vmatprep.subr.bf16.mxu0 0
  %842 = vmatpush1.bf16.msra.mxu0 0
  %843 = vmatprep.subr.bf16.mxu0 0
  %844 = vmatpush1.bf16.msra.mxu0 0
  %845 = vmatprep.subr.bf16.mxu0 0
  %846 = vmatpush1.bf16.msra.mxu0 0
  %847 = vmatprep.subr.bf16.mxu0 0
  %848 = vmatpush1.bf16.msra.mxu0 0
  %849 = vmatprep.subr.bf16.mxu0 0
  %850 = vmatpush1.bf16.msra.mxu0 0
  %851 = vmatprep.mubr.bf16.mxu0 0
  %852 = vmatmul.mubr.bf16.gmra.mrb[0].mxu0 %v626
  %v853 = vpop.f32.mrb[0].mxu0
  %v854 = vadd.f32 0.0, %v853
  %v855 = vpop.f32.mrb[0].mxu0
  %v856 = vadd.f32 0.0, %v855
  %v857 = vpop.f32.mrb[0].mxu0
  %v858 = vpop.f32.mrb[0].mxu0
  %859 = vdwg.mxu0
  %860 = vmatprep.subr.bf16.mxu0 %v758
  %861 = vmatpush1.bf16.msra.mxu0 %v757
  %862 = vmatprep.subr.bf16.mxu0 %v762
  %863 = vmatpush1.bf16.msra.mxu0 %v761
  %864 = vmatprep.subr.bf16.mxu0 %v766
  %865 = vmatpush1.bf16.msra.mxu0 %v765
  %866 = vmatprep.subr.bf16.mxu0 %v770
  %867 = vmatpush1.bf16.msra.mxu0 %v769
  %868 = vmatprep.subr.bf16.mxu0 %v774
  %869 = vmatpush1.bf16.msra.mxu0 %v773
  %870 = vmatprep.subr.bf16.mxu0 %v778
  %871 = vmatpush1.bf16.msra.mxu0 %v777
  %872 = vmatprep.subr.bf16.mxu0 %v782
  %873 = vmatpush1.bf16.msra.mxu0 %v781
  %874 = vmatprep.subr.bf16.mxu0 %v786
  %875 = vmatpush1.bf16.msra.mxu0 %v785
  %876 = vmatprep.subr.bf16.mxu0 0
  %877 = vmatpush1.bf16.msra.mxu0 0
  %878 = vmatprep.subr.bf16.mxu0 0
  %879 = vmatpush1.bf16.msra.mxu0 0
  %880 = vmatprep.subr.bf16.mxu0 0
  %881 = vmatpush1.bf16.msra.mxu0 0
  %882 = vmatprep.subr.bf16.mxu0 0
  %883 = vmatpush1.bf16.msra.mxu0 0
  %884 = vmatprep.subr.bf16.mxu0 0
  %885 = vmatpush1.bf16.msra.mxu0 0
  %886 = vmatprep.subr.bf16.mxu0 0
  %887 = vmatpush1.bf16.msra.mxu0 0
  %888 = vmatprep.subr.bf16.mxu0 0
  %889 = vmatpush1.bf16.msra.mxu0 0
  %890 = vmatprep.subr.bf16.mxu0 0
  %891 = vmatpush1.bf16.msra.mxu0 0
  %892 = vmatprep.mubr.bf16.mxu0 0
  %893 = vmatmul.mubr.bf16.gmra.mrb[0].mxu0 %v626
  %v894 = vpop.f32.mrb[0].mxu0
  %v895 = vadd.f32 0.0, %v894
  %v896 = vpop.f32.mrb[0].mxu0
  %v897 = vadd.f32 0.0, %v896
  %v898 = vpop.f32.mrb[0].mxu0
  %v899 = vpop.f32.mrb[0].mxu0
  %900 = vdwg.mxu0
  %v901 = vadd.f32 %v578, %v854
  %v902 = vadd.f32 %v580, %v856
  %v903 = vadd.f32 %v619, %v895
  %v904 = vadd.f32 %v621, %v897
  %v905 = vxor.u32 %v901, 2147483648
  %v906 = vmul.f32 %v905, 1.442695
  %v907 = vpow.pop %v906
  %v908 = vadd.f32 %v907, 1.0
  %v909 = vrcp.pop %v908
  %v910 = vmul.f32 1.0, %v909
  %v911 = vxor.u32 %v902, 2147483648
  %v912 = vmul.f32 %v911, 1.442695
  %v913 = vpow.pop %v912
  %v914 = vadd.f32 %v913, 1.0
  %v915 = vrcp.pop %v914
  %v916 = vmul.f32 1.0, %v915
  %v917 = vtanh.pop %v903
  %v918 = vxor.u32 %v904, 2147483648
  %v919 = vmul.f32 %v918, 1.442695
  %v920 = vpow.pop %v919
  %v921 = vadd.f32 %v920, 1.0
  %v922 = vrcp.pop %v921
  %v923 = vmul.f32 1.0, %v922
  %v924 = vld [vmem:[%s4] sm:$0xff]
  %v925 = vmul.f32 %v910, %v924
  %v926 = vmul.f32 %v916, %v917
  %v927 = vadd.f32 %v925, %v926
  %v928 = vtanh.pop %v927
  %v929 = vmul.f32 %v923, %v928
  %930 = vst [vmem:[%s4] sm:$0xff] %v929
  %931 = vst [vmem:[#allocation2] sm:$0xff] %v927
  %s932 = scalar_lea.vmem %s0, 16
  %v933 = vld [vmem:[%s932] sm:$0xff]
  %v934 = vpack.c.bf16 %v933, %v933
  %v935 = vld [vmem:[%s1] sm:$0xff]
  %v936 = vld [vmem:[%s1 + $0x8] sm:$0xff]
  %v937 = vld [vmem:[%s1 + $0x10] sm:$0xff]
  %v938 = vld [vmem:[%s1 + $0x18] sm:$0xff]
  %v939 = vld [vmem:[%s1 + $0x20] sm:$0xff]
  %v940 = vld [vmem:[%s1 + $0x28] sm:$0xff]
  %v941 = vld [vmem:[%s1 + $0x30] sm:$0xff]
  %v942 = vld [vmem:[%s1 + $0x38] sm:$0xff]
  %v951 = vunpack.c.l.b16 %v935
  %v952 = vunpack.c.h.b16 %v935
  %v953 = vunpack.c.l.b16 %v936
  %v954 = vunpack.c.h.b16 %v936
  %v955 = vunpack.c.l.b16 %v937
  %v956 = vunpack.c.h.b16 %v937
  %v957 = vunpack.c.l.b16 %v938
  %v958 = vunpack.c.h.b16 %v938
  %v959 = vunpack.c.l.b16 %v939
  %v960 = vunpack.c.h.b16 %v939
  %v961 = vunpack.c.l.b16 %v940
  %v962 = vunpack.c.h.b16 %v940
  %v963 = vunpack.c.l.b16 %v941
  %v964 = vunpack.c.h.b16 %v941
  %v965 = vunpack.c.l.b16 %v942
  %v966 = vunpack.c.h.b16 %v942
  %v967 = vpack.c.b16 %v955, %v951
  %v968 = vpack.c.b16 %v956, %v952
  %v969 = vpack.c.b16 %v957, %v953
  %v970 = vpack.c.b16 %v958, %v954
  %v971 = vpack.c.b16 %v963, %v959
  %v972 = vpack.c.b16 %v964, %v960
  %v973 = vpack.c.b16 %v965, %v961
  %v974 = vpack.c.b16 %v966, %v962
  %v984 = vsel %vm96, %v934, 0
  %986 = vmatprep.subr.bf16.mxu0 %v968
  %987 = vmatpush1.bf16.msra.mxu0 %v967
  %988 = vmatprep.subr.bf16.mxu0 %v972
  %989 = vmatpush1.bf16.msra.mxu0 %v971
  %990 = vmatprep.subr.bf16.mxu0 0
  %991 = vmatpush1.bf16.msra.mxu0 0
  %992 = vmatprep.subr.bf16.mxu0 0
  %993 = vmatpush1.bf16.msra.mxu0 0
  %994 = vmatprep.subr.bf16.mxu0 0
  %995 = vmatpush1.bf16.msra.mxu0 0
  %996 = vmatprep.subr.bf16.mxu0 0
  %997 = vmatpush1.bf16.msra.mxu0 0
  %998 = vmatprep.subr.bf16.mxu0 0
  %999 = vmatpush1.bf16.msra.mxu0 0
  %1000 = vmatprep.subr.bf16.mxu0 0
  %1001 = vmatpush1.bf16.msra.mxu0 0
  %1002 = vmatprep.subr.bf16.mxu0 0
  %1003 = vmatpush1.bf16.msra.mxu0 0
  %1004 = vmatprep.subr.bf16.mxu0 0
  %1005 = vmatpush1.bf16.msra.mxu0 0
  %1006 = vmatprep.subr.bf16.mxu0 0
  %1007 = vmatpush1.bf16.msra.mxu0 0
  %1008 = vmatprep.subr.bf16.mxu0 0
  %1009 = vmatpush1.bf16.msra.mxu0 0
  %1010 = vmatprep.subr.bf16.mxu0 0
  %1011 = vmatpush1.bf16.msra.mxu0 0
  %1012 = vmatprep.subr.bf16.mxu0 0
  %1013 = vmatpush1.bf16.msra.mxu0 0
  %1014 = vmatprep.subr.bf16.mxu0 0
  %1015 = vmatpush1.bf16.msra.mxu0 0
  %1016 = vmatprep.subr.bf16.mxu0 0
  %1017 = vmatpush1.bf16.msra.mxu0 0
  %1018 = vmatprep.mubr.bf16.mxu0 0
  %1019 = vmatmul.mubr.bf16.gmra.mrb[0].mxu0 %v984
  %v1020 = vpop.f32.mrb[0].mxu0
  %v1021 = vadd.f32 %v29, %v1020
  %v1022 = vpop.f32.mrb[0].mxu0
  %v1023 = vadd.f32 %v33, %v1022
  %v1024 = vpop.f32.mrb[0].mxu0
  %v1025 = vpop.f32.mrb[0].mxu0
  %1026 = vdwg.mxu0
  %1027 = vmatprep.subr.bf16.mxu0 %v970
  %1028 = vmatpush1.bf16.msra.mxu0 %v969
  %1029 = vmatprep.subr.bf16.mxu0 %v974
  %1030 = vmatpush1.bf16.msra.mxu0 %v973
  %1031 = vmatprep.subr.bf16.mxu0 0
  %1032 = vmatpush1.bf16.msra.mxu0 0
  %1033 = vmatprep.subr.bf16.mxu0 0
  %1034 = vmatpush1.bf16.msra.mxu0 0
  %1035 = vmatprep.subr.bf16.mxu0 0
  %1036 = vmatpush1.bf16.msra.mxu0 0
  %1037 = vmatprep.subr.bf16.mxu0 0
  %1038 = vmatpush1.bf16.msra.mxu0 0
  %1039 = vmatprep.subr.bf16.mxu0 0
  %1040 = vmatpush1.bf16.msra.mxu0 0
  %1041 = vmatprep.subr.bf16.mxu0 0
  %1042 = vmatpush1.bf16.msra.mxu0 0
  %1043 = vmatprep.subr.bf16.mxu0 0
  %1044 = vmatpush1.bf16.msra.mxu0 0
  %1045 = vmatprep.subr.bf16.mxu0 0
  %1046 = vmatpush1.bf16.msra.mxu0 0
  %1047 = vmatprep.subr.bf16.mxu0 0
  %1048 = vmatpush1.bf16.msra.mxu0 0
  %1049 = vmatprep.subr.bf16.mxu0 0
  %1050 = vmatpush1.bf16.msra.mxu0 0
  %1051 = vmatprep.subr.bf16.mxu0 0
  %1052 = vmatpush1.bf16.msra.mxu0 0
  %1053 = vmatprep.subr.bf16.mxu0 0
  %1054 = vmatpush1.bf16.msra.mxu0 0
  %1055 = vmatprep.subr.bf16.mxu0 0
  %1056 = vmatpush1.bf16.msra.mxu0 0
  %1057 = vmatprep.subr.bf16.mxu0 0
  %1058 = vmatpush1.bf16.msra.mxu0 0
  %1059 = vmatprep.mubr.bf16.mxu0 0
  %1060 = vmatmul.mubr.bf16.gmra.mrb[0].mxu0 %v984
  %v1061 = vpop.f32.mrb[0].mxu0
  %v1062 = vadd.f32 %v37, %v1061
  %v1063 = vpop.f32.mrb[0].mxu0
  %v1064 = vadd.f32 %v41, %v1063
  %v1065 = vpop.f32.mrb[0].mxu0
  %v1066 = vpop.f32.mrb[0].mxu0
  %1067 = vdwg.mxu0
  %v1068 = vld [vmem:[#allocation2] sm:$0xff]
  %v1069 = vpack.c.bf16 %v1068, %v1068
  %v1070 = vld [vmem:[%s2] sm:$0xff]
  %v1071 = vld [vmem:[%s2 + $0x8] sm:$0xff]
  %v1072 = vld [vmem:[%s2 + $0x10] sm:$0xff]
  %v1073 = vld [vmem:[%s2 + $0x18] sm:$0xff]
  %v1074 = vld [vmem:[%s2 + $0x20] sm:$0xff]
  %v1075 = vld [vmem:[%s2 + $0x28] sm:$0xff]
  %v1076 = vld [vmem:[%s2 + $0x30] sm:$0xff]
  %v1077 = vld [vmem:[%s2 + $0x38] sm:$0xff]
  %v1078 = vld [vmem:[%s2 + $0x40] sm:$0xff]
  %v1079 = vld [vmem:[%s2 + $0x48] sm:$0xff]
  %v1080 = vld [vmem:[%s2 + $0x50] sm:$0xff]
  %v1081 = vld [vmem:[%s2 + $0x58] sm:$0xff]
  %v1082 = vld [vmem:[%s2 + $0x60] sm:$0xff]
  %v1083 = vld [vmem:[%s2 + $0x68] sm:$0xff]
  %v1084 = vld [vmem:[%s2 + $0x70] sm:$0xff]
  %v1085 = vld [vmem:[%s2 + $0x78] sm:$0xff]
  %v1086 = vld [vmem:[%s2 + $0x80] sm:$0xff]
  %v1087 = vld [vmem:[%s2 + $0x88] sm:$0xff]
  %v1088 = vld [vmem:[%s2 + $0x90] sm:$0xff]
  %v1089 = vld [vmem:[%s2 + $0x98] sm:$0xff]
  %v1090 = vld [vmem:[%s2 + $0xa0] sm:$0xff]
  %v1091 = vld [vmem:[%s2 + $0xa8] sm:$0xff]
  %v1092 = vld [vmem:[%s2 + $0xb0] sm:$0xff]
  %v1093 = vld [vmem:[%s2 + $0xb8] sm:$0xff]
  %v1094 = vld [vmem:[%s2 + $0xc0] sm:$0xff]
  %v1095 = vld [vmem:[%s2 + $0xc8] sm:$0xff]
  %v1096 = vld [vmem:[%s2 + $0xd0] sm:$0xff]
  %v1097 = vld [vmem:[%s2 + $0xd8] sm:$0xff]
  %v1098 = vld [vmem:[%s2 + $0xe0] sm:$0xff]
  %v1099 = vld [vmem:[%s2 + $0xe8] sm:$0xff]
  %v1100 = vld [vmem:[%s2 + $0xf0] sm:$0xff]
  %v1101 = vld [vmem:[%s2 + $0xf8] sm:$0xff]
  %v1134 = vunpack.c.l.b16 %v1070
  %v1135 = vunpack.c.h.b16 %v1070
  %v1136 = vunpack.c.l.b16 %v1071
  %v1137 = vunpack.c.h.b16 %v1071
  %v1138 = vunpack.c.l.b16 %v1072
  %v1139 = vunpack.c.h.b16 %v1072
  %v1140 = vunpack.c.l.b16 %v1073
  %v1141 = vunpack.c.h.b16 %v1073
  %v1142 = vunpack.c.l.b16 %v1074
  %v1143 = vunpack.c.h.b16 %v1074
  %v1144 = vunpack.c.l.b16 %v1075
  %v1145 = vunpack.c.h.b16 %v1075
  %v1146 = vunpack.c.l.b16 %v1076
  %v1147 = vunpack.c.h.b16 %v1076
  %v1148 = vunpack.c.l.b16 %v1077
  %v1149 = vunpack.c.h.b16 %v1077
  %v1150 = vunpack.c.l.b16 %v1078
  %v1151 = vunpack.c.h.b16 %v1078
  %v1152 = vunpack.c.l.b16 %v1079
  %v1153 = vunpack.c.h.b16 %v1079
  %v1154 = vunpack.c.l.b16 %v1080
  %v1155 = vunpack.c.h.b16 %v1080
  %v1156 = vunpack.c.l.b16 %v1081
  %v1157 = vunpack.c.h.b16 %v1081
  %v1158 = vunpack.c.l.b16 %v1082
  %v1159 = vunpack.c.h.b16 %v1082
  %v1160 = vunpack.c.l.b16 %v1083
  %v1161 = vunpack.c.h.b16 %v1083
  %v1162 = vunpack.c.l.b16 %v1084
  %v1163 = vunpack.c.h.b16 %v1084
  %v1164 = vunpack.c.l.b16 %v1085
  %v1165 = vunpack.c.h.b16 %v1085
  %v1166 = vunpack.c.l.b16 %v1086
  %v1167 = vunpack.c.h.b16 %v1086
  %v1168 = vunpack.c.l.b16 %v1087
  %v1169 = vunpack.c.h.b16 %v1087
  %v1170 = vunpack.c.l.b16 %v1088
  %v1171 = vunpack.c.h.b16 %v1088
  %v1172 = vunpack.c.l.b16 %v1089
  %v1173 = vunpack.c.h.b16 %v1089
  %v1174 = vunpack.c.l.b16 %v1090
  %v1175 = vunpack.c.h.b16 %v1090
  %v1176 = vunpack.c.l.b16 %v1091
  %v1177 = vunpack.c.h.b16 %v1091
  %v1178 = vunpack.c.l.b16 %v1092
  %v1179 = vunpack.c.h.b16 %v1092
  %v1180 = vunpack.c.l.b16 %v1093
  %v1181 = vunpack.c.h.b16 %v1093
  %v1182 = vunpack.c.l.b16 %v1094
  %v1183 = vunpack.c.h.b16 %v1094
  %v1184 = vunpack.c.l.b16 %v1095
  %v1185 = vunpack.c.h.b16 %v1095
  %v1186 = vunpack.c.l.b16 %v1096
  %v1187 = vunpack.c.h.b16 %v1096
  %v1188 = vunpack.c.l.b16 %v1097
  %v1189 = vunpack.c.h.b16 %v1097
  %v1190 = vunpack.c.l.b16 %v1098
  %v1191 = vunpack.c.h.b16 %v1098
  %v1192 = vunpack.c.l.b16 %v1099
  %v1193 = vunpack.c.h.b16 %v1099
  %v1194 = vunpack.c.l.b16 %v1100
  %v1195 = vunpack.c.h.b16 %v1100
  %v1196 = vunpack.c.l.b16 %v1101
  %v1197 = vunpack.c.h.b16 %v1101
  %v1198 = vpack.c.b16 %v1138, %v1134
  %v1199 = vpack.c.b16 %v1139, %v1135
  %v1200 = vpack.c.b16 %v1140, %v1136
  %v1201 = vpack.c.b16 %v1141, %v1137
  %v1202 = vpack.c.b16 %v1146, %v1142
  %v1203 = vpack.c.b16 %v1147, %v1143
  %v1204 = vpack.c.b16 %v1148, %v1144
  %v1205 = vpack.c.b16 %v1149, %v1145
  %v1206 = vpack.c.b16 %v1154, %v1150
  %v1207 = vpack.c.b16 %v1155, %v1151
  %v1208 = vpack.c.b16 %v1156, %v1152
  %v1209 = vpack.c.b16 %v1157, %v1153
  %v1210 = vpack.c.b16 %v1162, %v1158
  %v1211 = vpack.c.b16 %v1163, %v1159
  %v1212 = vpack.c.b16 %v1164, %v1160
  %v1213 = vpack.c.b16 %v1165, %v1161
  %v1214 = vpack.c.b16 %v1170, %v1166
  %v1215 = vpack.c.b16 %v1171, %v1167
  %v1216 = vpack.c.b16 %v1172, %v1168
  %v1217 = vpack.c.b16 %v1173, %v1169
  %v1218 = vpack.c.b16 %v1178, %v1174
  %v1219 = vpack.c.b16 %v1179, %v1175
  %v1220 = vpack.c.b16 %v1180, %v1176
  %v1221 = vpack.c.b16 %v1181, %v1177
  %v1222 = vpack.c.b16 %v1186, %v1182
  %v1223 = vpack.c.b16 %v1187, %v1183
  %v1224 = vpack.c.b16 %v1188, %v1184
  %v1225 = vpack.c.b16 %v1189, %v1185
  %v1226 = vpack.c.b16 %v1194, %v1190
  %v1227 = vpack.c.b16 %v1195, %v1191
  %v1228 = vpack.c.b16 %v1196, %v1192
  %v1229 = vpack.c.b16 %v1197, %v1193
  %1262 = vmatprep.subr.bf16.mxu0 %v1199
  %1263 = vmatpush1.bf16.msra.mxu0 %v1198
  %1264 = vmatprep.subr.bf16.mxu0 %v1203
  %1265 = vmatpush1.bf16.msra.mxu0 %v1202
  %1266 = vmatprep.subr.bf16.mxu0 %v1207
  %1267 = vmatpush1.bf16.msra.mxu0 %v1206
  %1268 = vmatprep.subr.bf16.mxu0 %v1211
  %1269 = vmatpush1.bf16.msra.mxu0 %v1210
  %1270 = vmatprep.subr.bf16.mxu0 %v1215
  %1271 = vmatpush1.bf16.msra.mxu0 %v1214
  %1272 = vmatprep.subr.bf16.mxu0 %v1219
  %1273 = vmatpush1.bf16.msra.mxu0 %v1218
  %1274 = vmatprep.subr.bf16.mxu0 %v1223
  %1275 = vmatpush1.bf16.msra.mxu0 %v1222
  %1276 = vmatprep.subr.bf16.mxu0 %v1227
  %1277 = vmatpush1.bf16.msra.mxu0 %v1226
  %1278 = vmatprep.subr.bf16.mxu0 0
  %1279 = vmatpush1.bf16.msra.mxu0 0
  %1280 = vmatprep.subr.bf16.mxu0 0
  %1281 = vmatpush1.bf16.msra.mxu0 0
  %1282 = vmatprep.subr.bf16.mxu0 0
  %1283 = vmatpush1.bf16.msra.mxu0 0
  %1284 = vmatprep.subr.bf16.mxu0 0
  %1285 = vmatpush1.bf16.msra.mxu0 0
  %1286 = vmatprep.subr.bf16.mxu0 0
  %1287 = vmatpush1.bf16.msra.mxu0 0
  %1288 = vmatprep.subr.bf16.mxu0 0
  %1289 = vmatpush1.bf16.msra.mxu0 0
  %1290 = vmatprep.subr.bf16.mxu0 0
  %1291 = vmatpush1.bf16.msra.mxu0 0
  %1292 = vmatprep.subr.bf16.mxu0 0
  %1293 = vmatpush1.bf16.msra.mxu0 0
  %1294 = vmatprep.mubr.bf16.mxu0 0
  %1295 = vmatmul.mubr.bf16.gmra.mrb[0].mxu0 %v1069
  %v1296 = vpop.f32.mrb[0].mxu0
  %v1297 = vadd.f32 0.0, %v1296
  %v1298 = vpop.f32.mrb[0].mxu0
  %v1299 = vadd.f32 0.0, %v1298
  %v1300 = vpop.f32.mrb[0].mxu0
  %v1301 = vpop.f32.mrb[0].mxu0
  %1302 = vdwg.mxu0
  %1303 = vmatprep.subr.bf16.mxu0 %v1201
  %1304 = vmatpush1.bf16.msra.mxu0 %v1200
  %1305 = vmatprep.subr.bf16.mxu0 %v1205
  %1306 = vmatpush1.bf16.msra.mxu0 %v1204
  %1307 = vmatprep.subr.bf16.mxu0 %v1209
  %1308 = vmatpush1.bf16.msra.mxu0 %v1208
  %1309 = vmatprep.subr.bf16.mxu0 %v1213
  %1310 = vmatpush1.bf16.msra.mxu0 %v1212
  %1311 = vmatprep.subr.bf16.mxu0 %v1217
  %1312 = vmatpush1.bf16.msra.mxu0 %v1216
  %1313 = vmatprep.subr.bf16.mxu0 %v1221
  %1314 = vmatpush1.bf16.msra.mxu0 %v1220
  %1315 = vmatprep.subr.bf16.mxu0 %v1225
  %1316 = vmatpush1.bf16.msra.mxu0 %v1224
  %1317 = vmatprep.subr.bf16.mxu0 %v1229
  %1318 = vmatpush1.bf16.msra.mxu0 %v1228
  %1319 = vmatprep.subr.bf16.mxu0 0
  %1320 = vmatpush1.bf16.msra.mxu0 0
  %1321 = vmatprep.subr.bf16.mxu0 0
  %1322 = vmatpush1.bf16.msra.mxu0 0
  %1323 = vmatprep.subr.bf16.mxu0 0
  %1324 = vmatpush1.bf16.msra.mxu0 0
  %1325 = vmatprep.subr.bf16.mxu0 0
  %1326 = vmatpush1.bf16.msra.mxu0 0
  %1327 = vmatprep.subr.bf16.mxu0 0
  %1328 = vmatpush1.bf16.msra.mxu0 0
  %1329 = vmatprep.subr.bf16.mxu0 0
  %1330 = vmatpush1.bf16.msra.mxu0 0
  %1331 = vmatprep.subr.bf16.mxu0 0
  %1332 = vmatpush1.bf16.msra.mxu0 0
  %1333 = vmatprep.subr.bf16.mxu0 0
  %1334 = vmatpush1.bf16.msra.mxu0 0
  %1335 = vmatprep.mubr.bf16.mxu0 0
  %1336 = vmatmul.mubr.bf16.gmra.mrb[0].mxu0 %v1069
  %v1337 = vpop.f32.mrb[0].mxu0
  %v1338 = vadd.f32 0.0, %v1337
  %v1339 = vpop.f32.mrb[0].mxu0
  %v1340 = vadd.f32 0.0, %v1339
  %v1341 = vpop.f32.mrb[0].mxu0
  %v1342 = vpop.f32.mrb[0].mxu0
  %1343 = vdwg.mxu0
  %v1344 = vadd.f32 %v1021, %v1297
  %v1345 = vadd.f32 %v1023, %v1299
  %v1346 = vadd.f32 %v1062, %v1338
  %v1347 = vadd.f32 %v1064, %v1340
  %v1348 = vxor.u32 %v1344, 2147483648
  %v1349 = vmul.f32 %v1348, 1.442695
  %v1350 = vpow.pop %v1349
  %v1351 = vadd.f32 %v1350, 1.0
  %v1352 = vrcp.pop %v1351
  %v1353 = vmul.f32 1.0, %v1352
  %v1354 = vxor.u32 %v1345, 2147483648
  %v1355 = vmul.f32 %v1354, 1.442695
  %v1356 = vpow.pop %v1355
  %v1357 = vadd.f32 %v1356, 1.0
  %v1358 = vrcp.pop %v1357
  %v1359 = vmul.f32 1.0, %v1358
  %v1360 = vtanh.pop %v1346
  %v1361 = vxor.u32 %v1347, 2147483648
  %v1362 = vmul.f32 %v1361, 1.442695
  %v1363 = vpow.pop %v1362
  %v1364 = vadd.f32 %v1363, 1.0
  %v1365 = vrcp.pop %v1364
  %v1366 = vmul.f32 1.0, %v1365
  %v1367 = vld [vmem:[%s4] sm:$0xff]
  %v1368 = vmul.f32 %v1353, %v1367
  %v1369 = vmul.f32 %v1359, %v1360
  %v1370 = vadd.f32 %v1368, %v1369
  %v1371 = vtanh.pop %v1370
  %v1372 = vmul.f32 %v1366, %v1371
  %1373 = vst [vmem:[%s4] sm:$0xff] %v1372
  %1374 = vst [vmem:[#allocation2] sm:$0xff] %v1370
  %s1375 = scalar_lea.vmem %s0, 24
  %v1376 = vld [vmem:[%s1375] sm:$0xff]
  %v1377 = vpack.c.bf16 %v1376, %v1376
  %v1378 = vld [vmem:[%s1] sm:$0xff]
  %v1379 = vld [vmem:[%s1 + $0x8] sm:$0xff]
  %v1380 = vld [vmem:[%s1 + $0x10] sm:$0xff]
  %v1381 = vld [vmem:[%s1 + $0x18] sm:$0xff]
  %v1382 = vld [vmem:[%s1 + $0x20] sm:$0xff]
  %v1383 = vld [vmem:[%s1 + $0x28] sm:$0xff]
  %v1384 = vld [vmem:[%s1 + $0x30] sm:$0xff]
  %v1385 = vld [vmem:[%s1 + $0x38] sm:$0xff]
  %v1394 = vunpack.c.l.b16 %v1378
  %v1395 = vunpack.c.h.b16 %v1378
  %v1396 = vunpack.c.l.b16 %v1379
  %v1397 = vunpack.c.h.b16 %v1379
  %v1398 = vunpack.c.l.b16 %v1380
  %v1399 = vunpack.c.h.b16 %v1380
  %v1400 = vunpack.c.l.b16 %v1381
  %v1401 = vunpack.c.h.b16 %v1381
  %v1402 = vunpack.c.l.b16 %v1382
  %v1403 = vunpack.c.h.b16 %v1382
  %v1404 = vunpack.c.l.b16 %v1383
  %v1405 = vunpack.c.h.b16 %v1383
  %v1406 = vunpack.c.l.b16 %v1384
  %v1407 = vunpack.c.h.b16 %v1384
  %v1408 = vunpack.c.l.b16 %v1385
  %v1409 = vunpack.c.h.b16 %v1385
  %v1410 = vpack.c.b16 %v1398, %v1394
  %v1411 = vpack.c.b16 %v1399, %v1395
  %v1412 = vpack.c.b16 %v1400, %v1396
  %v1413 = vpack.c.b16 %v1401, %v1397
  %v1414 = vpack.c.b16 %v1406, %v1402
  %v1415 = vpack.c.b16 %v1407, %v1403
  %v1416 = vpack.c.b16 %v1408, %v1404
  %v1417 = vpack.c.b16 %v1409, %v1405
  %v1427 = vsel %vm96, %v1377, 0
  %1429 = vmatprep.subr.bf16.mxu0 %v1411
  %1430 = vmatpush1.bf16.msra.mxu0 %v1410
  %1431 = vmatprep.subr.bf16.mxu0 %v1415
  %1432 = vmatpush1.bf16.msra.mxu0 %v1414
  %1433 = vmatprep.subr.bf16.mxu0 0
  %1434 = vmatpush1.bf16.msra.mxu0 0
  %1435 = vmatprep.subr.bf16.mxu0 0
  %1436 = vmatpush1.bf16.msra.mxu0 0
  %1437 = vmatprep.subr.bf16.mxu0 0
  %1438 = vmatpush1.bf16.msra.mxu0 0
  %1439 = vmatprep.subr.bf16.mxu0 0
  %1440 = vmatpush1.bf16.msra.mxu0 0
  %1441 = vmatprep.subr.bf16.mxu0 0
  %1442 = vmatpush1.bf16.msra.mxu0 0
  %1443 = vmatprep.subr.bf16.mxu0 0
  %1444 = vmatpush1.bf16.msra.mxu0 0
  %1445 = vmatprep.subr.bf16.mxu0 0
  %1446 = vmatpush1.bf16.msra.mxu0 0
  %1447 = vmatprep.subr.bf16.mxu0 0
  %1448 = vmatpush1.bf16.msra.mxu0 0
  %1449 = vmatprep.subr.bf16.mxu0 0
  %1450 = vmatpush1.bf16.msra.mxu0 0
  %1451 = vmatprep.subr.bf16.mxu0 0
  %1452 = vmatpush1.bf16.msra.mxu0 0
  %1453 = vmatprep.subr.bf16.mxu0 0
  %1454 = vmatpush1.bf16.msra.mxu0 0
  %1455 = vmatprep.subr.bf16.mxu0 0
  %1456 = vmatpush1.bf16.msra.mxu0 0
  %1457 = vmatprep.subr.bf16.mxu0 0
  %1458 = vmatpush1.bf16.msra.mxu0 0
  %1459 = vmatprep.subr.bf16.mxu0 0
  %1460 = vmatpush1.bf16.msra.mxu0 0
  %1461 = vmatprep.mubr.bf16.mxu0 0
  %1462 = vmatmul.mubr.bf16.gmra.mrb[0].mxu0 %v1427
  %v1463 = vpop.f32.mrb[0].mxu0
  %v1464 = vadd.f32 %v29, %v1463
  %v1465 = vpop.f32.mrb[0].mxu0
  %v1466 = vadd.f32 %v33, %v1465
  %v1467 = vpop.f32.mrb[0].mxu0
  %v1468 = vpop.f32.mrb[0].mxu0
  %1469 = vdwg.mxu0
  %1470 = vmatprep.subr.bf16.mxu0 %v1413
  %1471 = vmatpush1.bf16.msra.mxu0 %v1412
  %1472 = vmatprep.subr.bf16.mxu0 %v1417
  %1473 = vmatpush1.bf16.msra.mxu0 %v1416
  %1474 = vmatprep.subr.bf16.mxu0 0
  %1475 = vmatpush1.bf16.msra.mxu0 0
  %1476 = vmatprep.subr.bf16.mxu0 0
  %1477 = vmatpush1.bf16.msra.mxu0 0
  %1478 = vmatprep.subr.bf16.mxu0 0
  %1479 = vmatpush1.bf16.msra.mxu0 0
  %1480 = vmatprep.subr.bf16.mxu0 0
  %1481 = vmatpush1.bf16.msra.mxu0 0
  %1482 = vmatprep.subr.bf16.mxu0 0
  %1483 = vmatpush1.bf16.msra.mxu0 0
  %1484 = vmatprep.subr.bf16.mxu0 0
  %1485 = vmatpush1.bf16.msra.mxu0 0
  %1486 = vmatprep.subr.bf16.mxu0 0
  %1487 = vmatpush1.bf16.msra.mxu0 0
  %1488 = vmatprep.subr.bf16.mxu0 0
  %1489 = vmatpush1.bf16.msra.mxu0 0
  %1490 = vmatprep.subr.bf16.mxu0 0
  %1491 = vmatpush1.bf16.msra.mxu0 0
  %1492 = vmatprep.subr.bf16.mxu0 0
  %1493 = vmatpush1.bf16.msra.mxu0 0
  %1494 = vmatprep.subr.bf16.mxu0 0
  %1495 = vmatpush1.bf16.msra.mxu0 0
  %1496 = vmatprep.subr.bf16.mxu0 0
  %1497 = vmatpush1.bf16.msra.mxu0 0
  %1498 = vmatprep.subr.bf16.mxu0 0
  %1499 = vmatpush1.bf16.msra.mxu0 0
  %1500 = vmatprep.subr.bf16.mxu0 0
  %1501 = vmatpush1.bf16.msra.mxu0 0
  %1502 = vmatprep.mubr.bf16.mxu0 0
  %1503 = vmatmul.mubr.bf16.gmra.mrb[0].mxu0 %v1427
  %v1504 = vpop.f32.mrb[0].mxu0
  %v1505 = vadd.f32 %v37, %v1504
  %v1506 = vpop.f32.mrb[0].mxu0
  %v1507 = vadd.f32 %v41, %v1506
  %v1508 = vpop.f32.mrb[0].mxu0
  %v1509 = vpop.f32.mrb[0].mxu0
  %1510 = vdwg.mxu0
  %v1511 = vld [vmem:[#allocation2] sm:$0xff]
  %v1512 = vpack.c.bf16 %v1511, %v1511
  %v1513 = vld [vmem:[%s2] sm:$0xff]
  %v1514 = vld [vmem:[%s2 + $0x8] sm:$0xff]
  %v1515 = vld [vmem:[%s2 + $0x10] sm:$0xff]
  %v1516 = vld [vmem:[%s2 + $0x18] sm:$0xff]
  %v1517 = vld [vmem:[%s2 + $0x20] sm:$0xff]
  %v1518 = vld [vmem:[%s2 + $0x28] sm:$0xff]
  %v1519 = vld [vmem:[%s2 + $0x30] sm:$0xff]
  %v1520 = vld [vmem:[%s2 + $0x38] sm:$0xff]
  %v1521 = vld [vmem:[%s2 + $0x40] sm:$0xff]
  %v1522 = vld [vmem:[%s2 + $0x48] sm:$0xff]
  %v1523 = vld [vmem:[%s2 + $0x50] sm:$0xff]
  %v1524 = vld [vmem:[%s2 + $0x58] sm:$0xff]
  %v1525 = vld [vmem:[%s2 + $0x60] sm:$0xff]
  %v1526 = vld [vmem:[%s2 + $0x68] sm:$0xff]
  %v1527 = vld [vmem:[%s2 + $0x70] sm:$0xff]
  %v1528 = vld [vmem:[%s2 + $0x78] sm:$0xff]
  %v1529 = vld [vmem:[%s2 + $0x80] sm:$0xff]
  %v1530 = vld [vmem:[%s2 + $0x88] sm:$0xff]
  %v1531 = vld [vmem:[%s2 + $0x90] sm:$0xff]
  %v1532 = vld [vmem:[%s2 + $0x98] sm:$0xff]
  %v1533 = vld [vmem:[%s2 + $0xa0] sm:$0xff]
  %v1534 = vld [vmem:[%s2 + $0xa8] sm:$0xff]
  %v1535 = vld [vmem:[%s2 + $0xb0] sm:$0xff]
  %v1536 = vld [vmem:[%s2 + $0xb8] sm:$0xff]
  %v1537 = vld [vmem:[%s2 + $0xc0] sm:$0xff]
  %v1538 = vld [vmem:[%s2 + $0xc8] sm:$0xff]
  %v1539 = vld [vmem:[%s2 + $0xd0] sm:$0xff]
  %v1540 = vld [vmem:[%s2 + $0xd8] sm:$0xff]
  %v1541 = vld [vmem:[%s2 + $0xe0] sm:$0xff]
  %v1542 = vld [vmem:[%s2 + $0xe8] sm:$0xff]
  %v1543 = vld [vmem:[%s2 + $0xf0] sm:$0xff]
  %v1544 = vld [vmem:[%s2 + $0xf8] sm:$0xff]
  %v1577 = vunpack.c.l.b16 %v1513
  %v1578 = vunpack.c.h.b16 %v1513
  %v1579 = vunpack.c.l.b16 %v1514
  %v1580 = vunpack.c.h.b16 %v1514
  %v1581 = vunpack.c.l.b16 %v1515
  %v1582 = vunpack.c.h.b16 %v1515
  %v1583 = vunpack.c.l.b16 %v1516
  %v1584 = vunpack.c.h.b16 %v1516
  %v1585 = vunpack.c.l.b16 %v1517
  %v1586 = vunpack.c.h.b16 %v1517
  %v1587 = vunpack.c.l.b16 %v1518
  %v1588 = vunpack.c.h.b16 %v1518
  %v1589 = vunpack.c.l.b16 %v1519
  %v1590 = vunpack.c.h.b16 %v1519
  %v1591 = vunpack.c.l.b16 %v1520
  %v1592 = vunpack.c.h.b16 %v1520
  %v1593 = vunpack.c.l.b16 %v1521
  %v1594 = vunpack.c.h.b16 %v1521
  %v1595 = vunpack.c.l.b16 %v1522
  %v1596 = vunpack.c.h.b16 %v1522
  %v1597 = vunpack.c.l.b16 %v1523
  %v1598 = vunpack.c.h.b16 %v1523
  %v1599 = vunpack.c.l.b16 %v1524
  %v1600 = vunpack.c.h.b16 %v1524
  %v1601 = vunpack.c.l.b16 %v1525
  %v1602 = vunpack.c.h.b16 %v1525
  %v1603 = vunpack.c.l.b16 %v1526
  %v1604 = vunpack.c.h.b16 %v1526
  %v1605 = vunpack.c.l.b16 %v1527
  %v1606 = vunpack.c.h.b16 %v1527
  %v1607 = vunpack.c.l.b16 %v1528
  %v1608 = vunpack.c.h.b16 %v1528
  %v1609 = vunpack.c.l.b16 %v1529
  %v1610 = vunpack.c.h.b16 %v1529
  %v1611 = vunpack.c.l.b16 %v1530
  %v1612 = vunpack.c.h.b16 %v1530
  %v1613 = vunpack.c.l.b16 %v1531
  %v1614 = vunpack.c.h.b16 %v1531
  %v1615 = vunpack.c.l.b16 %v1532
  %v1616 = vunpack.c.h.b16 %v1532
  %v1617 = vunpack.c.l.b16 %v1533
  %v1618 = vunpack.c.h.b16 %v1533
  %v1619 = vunpack.c.l.b16 %v1534
  %v1620 = vunpack.c.h.b16 %v1534
  %v1621 = vunpack.c.l.b16 %v1535
  %v1622 = vunpack.c.h.b16 %v1535
  %v1623 = vunpack.c.l.b16 %v1536
  %v1624 = vunpack.c.h.b16 %v1536
  %v1625 = vunpack.c.l.b16 %v1537
  %v1626 = vunpack.c.h.b16 %v1537
  %v1627 = vunpack.c.l.b16 %v1538
  %v1628 = vunpack.c.h.b16 %v1538
  %v1629 = vunpack.c.l.b16 %v1539
  %v1630 = vunpack.c.h.b16 %v1539
  %v1631 = vunpack.c.l.b16 %v1540
  %v1632 = vunpack.c.h.b16 %v1540
  %v1633 = vunpack.c.l.b16 %v1541
  %v1634 = vunpack.c.h.b16 %v1541
  %v1635 = vunpack.c.l.b16 %v1542
  %v1636 = vunpack.c.h.b16 %v1542
  %v1637 = vunpack.c.l.b16 %v1543
  %v1638 = vunpack.c.h.b16 %v1543
  %v1639 = vunpack.c.l.b16 %v1544
  %v1640 = vunpack.c.h.b16 %v1544
  %v1641 = vpack.c.b16 %v1581, %v1577
  %v1642 = vpack.c.b16 %v1582, %v1578
  %v1643 = vpack.c.b16 %v1583, %v1579
  %v1644 = vpack.c.b16 %v1584, %v1580
  %v1645 = vpack.c.b16 %v1589, %v1585
  %v1646 = vpack.c.b16 %v1590, %v1586
  %v1647 = vpack.c.b16 %v1591, %v1587
  %v1648 = vpack.c.b16 %v1592, %v1588
  %v1649 = vpack.c.b16 %v1597, %v1593
  %v1650 = vpack.c.b16 %v1598, %v1594
  %v1651 = vpack.c.b16 %v1599, %v1595
  %v1652 = vpack.c.b16 %v1600, %v1596
  %v1653 = vpack.c.b16 %v1605, %v1601
  %v1654 = vpack.c.b16 %v1606, %v1602
  %v1655 = vpack.c.b16 %v1607, %v1603
  %v1656 = vpack.c.b16 %v1608, %v1604
  %v1657 = vpack.c.b16 %v1613, %v1609
  %v1658 = vpack.c.b16 %v1614, %v1610
  %v1659 = vpack.c.b16 %v1615, %v1611
  %v1660 = vpack.c.b16 %v1616, %v1612
  %v1661 = vpack.c.b16 %v1621, %v1617
  %v1662 = vpack.c.b16 %v1622, %v1618
  %v1663 = vpack.c.b16 %v1623, %v1619
  %v1664 = vpack.c.b16 %v1624, %v1620
  %v1665 = vpack.c.b16 %v1629, %v1625
  %v1666 = vpack.c.b16 %v1630, %v1626
  %v1667 = vpack.c.b16 %v1631, %v1627
  %v1668 = vpack.c.b16 %v1632, %v1628
  %v1669 = vpack.c.b16 %v1637, %v1633
  %v1670 = vpack.c.b16 %v1638, %v1634
  %v1671 = vpack.c.b16 %v1639, %v1635
  %v1672 = vpack.c.b16 %v1640, %v1636
  %1705 = vmatprep.subr.bf16.mxu0 %v1642
  %1706 = vmatpush1.bf16.msra.mxu0 %v1641
  %1707 = vmatprep.subr.bf16.mxu0 %v1646
  %1708 = vmatpush1.bf16.msra.mxu0 %v1645
  %1709 = vmatprep.subr.bf16.mxu0 %v1650
  %1710 = vmatpush1.bf16.msra.mxu0 %v1649
  %1711 = vmatprep.subr.bf16.mxu0 %v1654
  %1712 = vmatpush1.bf16.msra.mxu0 %v1653
  %1713 = vmatprep.subr.bf16.mxu0 %v1658
  %1714 = vmatpush1.bf16.msra.mxu0 %v1657
  %1715 = vmatprep.subr.bf16.mxu0 %v1662
  %1716 = vmatpush1.bf16.msra.mxu0 %v1661
  %1717 = vmatprep.subr.bf16.mxu0 %v1666
  %1718 = vmatpush1.bf16.msra.mxu0 %v1665
  %1719 = vmatprep.subr.bf16.mxu0 %v1670
  %1720 = vmatpush1.bf16.msra.mxu0 %v1669
  %1721 = vmatprep.subr.bf16.mxu0 0
  %1722 = vmatpush1.bf16.msra.mxu0 0
  %1723 = vmatprep.subr.bf16.mxu0 0
  %1724 = vmatpush1.bf16.msra.mxu0 0
  %1725 = vmatprep.subr.bf16.mxu0 0
  %1726 = vmatpush1.bf16.msra.mxu0 0
  %1727 = vmatprep.subr.bf16.mxu0 0
  %1728 = vmatpush1.bf16.msra.mxu0 0
  %1729 = vmatprep.subr.bf16.mxu0 0
  %1730 = vmatpush1.bf16.msra.mxu0 0
  %1731 = vmatprep.subr.bf16.mxu0 0
  %1732 = vmatpush1.bf16.msra.mxu0 0
  %1733 = vmatprep.subr.bf16.mxu0 0
  %1734 = vmatpush1.bf16.msra.mxu0 0
  %1735 = vmatprep.subr.bf16.mxu0 0
  %1736 = vmatpush1.bf16.msra.mxu0 0
  %1737 = vmatprep.mubr.bf16.mxu0 0
  %1738 = vmatmul.mubr.bf16.gmra.mrb[0].mxu0 %v1512
  %v1739 = vpop.f32.mrb[0].mxu0
  %v1740 = vadd.f32 0.0, %v1739
  %v1741 = vpop.f32.mrb[0].mxu0
  %v1742 = vadd.f32 0.0, %v1741
  %v1743 = vpop.f32.mrb[0].mxu0
  %v1744 = vpop.f32.mrb[0].mxu0
  %1745 = vdwg.mxu0
  %1746 = vmatprep.subr.bf16.mxu0 %v1644
  %1747 = vmatpush1.bf16.msra.mxu0 %v1643
  %1748 = vmatprep.subr.bf16.mxu0 %v1648
  %1749 = vmatpush1.bf16.msra.mxu0 %v1647
  %1750 = vmatprep.subr.bf16.mxu0 %v1652
  %1751 = vmatpush1.bf16.msra.mxu0 %v1651
  %1752 = vmatprep.subr.bf16.mxu0 %v1656
  %1753 = vmatpush1.bf16.msra.mxu0 %v1655
  %1754 = vmatprep.subr.bf16.mxu0 %v1660
  %1755 = vmatpush1.bf16.msra.mxu0 %v1659
  %1756 = vmatprep.subr.bf16.mxu0 %v1664
  %1757 = vmatpush1.bf16.msra.mxu0 %v1663
  %1758 = vmatprep.subr.bf16.mxu0 %v1668
  %1759 = vmatpush1.bf16.msra.mxu0 %v1667
  %1760 = vmatprep.subr.bf16.mxu0 %v1672
  %1761 = vmatpush1.bf16.msra.mxu0 %v1671
  %1762 = vmatprep.subr.bf16.mxu0 0
  %1763 = vmatpush1.bf16.msra.mxu0 0
  %1764 = vmatprep.subr.bf16.mxu0 0
  %1765 = vmatpush1.bf16.msra.mxu0 0
  %1766 = vmatprep.subr.bf16.mxu0 0
  %1767 = vmatpush1.bf16.msra.mxu0 0
  %1768 = vmatprep.subr.bf16.mxu0 0
  %1769 = vmatpush1.bf16.msra.mxu0 0
  %1770 = vmatprep.subr.bf16.mxu0 0
  %1771 = vmatpush1.bf16.msra.mxu0 0
  %1772 = vmatprep.subr.bf16.mxu0 0
  %1773 = vmatpush1.bf16.msra.mxu0 0
  %1774 = vmatprep.subr.bf16.mxu0 0
  %1775 = vmatpush1.bf16.msra.mxu0 0
  %1776 = vmatprep.subr.bf16.mxu0 0
  %1777 = vmatpush1.bf16.msra.mxu0 0
  %1778 = vmatprep.mubr.bf16.mxu0 0
  %1779 = vmatmul.mubr.bf16.gmra.mrb[0].mxu0 %v1512
  %v1780 = vpop.f32.mrb[0].mxu0
  %v1781 = vadd.f32 0.0, %v1780
  %v1782 = vpop.f32.mrb[0].mxu0
  %v1783 = vadd.f32 0.0, %v1782
  %v1784 = vpop.f32.mrb[0].mxu0
  %v1785 = vpop.f32.mrb[0].mxu0
  %1786 = vdwg.mxu0
  %v1787 = vadd.f32 %v1464, %v1740
  %v1788 = vadd.f32 %v1466, %v1742
  %v1789 = vadd.f32 %v1505, %v1781
  %v1790 = vadd.f32 %v1507, %v1783
  %v1791 = vxor.u32 %v1787, 2147483648
  %v1792 = vmul.f32 %v1791, 1.442695
  %v1793 = vpow.pop %v1792
  %v1794 = vadd.f32 %v1793, 1.0
  %v1795 = vrcp.pop %v1794
  %v1796 = vmul.f32 1.0, %v1795
  %v1797 = vxor.u32 %v1788, 2147483648
  %v1798 = vmul.f32 %v1797, 1.442695
  %v1799 = vpow.pop %v1798
  %v1800 = vadd.f32 %v1799, 1.0
  %v1801 = vrcp.pop %v1800
  %v1802 = vmul.f32 1.0, %v1801
  %v1803 = vtanh.pop %v1789
  %v1804 = vxor.u32 %v1790, 2147483648
  %v1805 = vmul.f32 %v1804, 1.442695
  %v1806 = vpow.pop %v1805
  %v1807 = vadd.f32 %v1806, 1.0
  %v1808 = vrcp.pop %v1807
  %v1809 = vmul.f32 1.0, %v1808
  %v1810 = vld [vmem:[%s4] sm:$0xff]
  %v1811 = vmul.f32 %v1796, %v1810
  %v1812 = vmul.f32 %v1802, %v1803
  %v1813 = vadd.f32 %v1811, %v1812
  %v1814 = vtanh.pop %v1813
  %v1815 = vmul.f32 %v1809, %v1814
  %1816 = vst [vmem:[%s4] sm:$0xff] %v1815
  %1817 = vst [vmem:[#allocation2] sm:$0xff] %v1813
  %s1818 = scalar_lea.vmem %s0, 32
  %v1819 = vld [vmem:[%s1818] sm:$0xff]
  %v1820 = vpack.c.bf16 %v1819, %v1819
  %v1821 = vld [vmem:[%s1] sm:$0xff]
  %v1822 = vld [vmem:[%s1 + $0x8] sm:$0xff]
  %v1823 = vld [vmem:[%s1 + $0x10] sm:$0xff]
  %v1824 = vld [vmem:[%s1 + $0x18] sm:$0xff]
  %v1825 = vld [vmem:[%s1 + $0x20] sm:$0xff]
  %v1826 = vld [vmem:[%s1 + $0x28] sm:$0xff]
  %v1827 = vld [vmem:[%s1 + $0x30] sm:$0xff]
  %v1828 = vld [vmem:[%s1 + $0x38] sm:$0xff]
  %v1837 = vunpack.c.l.b16 %v1821
  %v1838 = vunpack.c.h.b16 %v1821
  %v1839 = vunpack.c.l.b16 %v1822
  %v1840 = vunpack.c.h.b16 %v1822
  %v1841 = vunpack.c.l.b16 %v1823
  %v1842 = vunpack.c.h.b16 %v1823
  %v1843 = vunpack.c.l.b16 %v1824
  %v1844 = vunpack.c.h.b16 %v1824
  %v1845 = vunpack.c.l.b16 %v1825
  %v1846 = vunpack.c.h.b16 %v1825
  %v1847 = vunpack.c.l.b16 %v1826
  %v1848 = vunpack.c.h.b16 %v1826
  %v1849 = vunpack.c.l.b16 %v1827
  %v1850 = vunpack.c.h.b16 %v1827
  %v1851 = vunpack.c.l.b16 %v1828
  %v1852 = vunpack.c.h.b16 %v1828
  %v1853 = vpack.c.b16 %v1841, %v1837
  %v1854 = vpack.c.b16 %v1842, %v1838
  %v1855 = vpack.c.b16 %v1843, %v1839
  %v1856 = vpack.c.b16 %v1844, %v1840
  %v1857 = vpack.c.b16 %v1849, %v1845
  %v1858 = vpack.c.b16 %v1850, %v1846
  %v1859 = vpack.c.b16 %v1851, %v1847
  %v1860 = vpack.c.b16 %v1852, %v1848
  %v1870 = vsel %vm96, %v1820, 0
  %1872 = vmatprep.subr.bf16.mxu0 %v1854
  %1873 = vmatpush1.bf16.msra.mxu0 %v1853
  %1874 = vmatprep.subr.bf16.mxu0 %v1858
  %1875 = vmatpush1.bf16.msra.mxu0 %v1857
  %1876 = vmatprep.subr.bf16.mxu0 0
  %1877 = vmatpush1.bf16.msra.mxu0 0
  %1878 = vmatprep.subr.bf16.mxu0 0
  %1879 = vmatpush1.bf16.msra.mxu0 0
  %1880 = vmatprep.subr.bf16.mxu0 0
  %1881 = vmatpush1.bf16.msra.mxu0 0
  %1882 = vmatprep.subr.bf16.mxu0 0
  %1883 = vmatpush1.bf16.msra.mxu0 0
  %1884 = vmatprep.subr.bf16.mxu0 0
  %1885 = vmatpush1.bf16.msra.mxu0 0
  %1886 = vmatprep.subr.bf16.mxu0 0
  %1887 = vmatpush1.bf16.msra.mxu0 0
  %1888 = vmatprep.subr.bf16.mxu0 0
  %1889 = vmatpush1.bf16.msra.mxu0 0
  %1890 = vmatprep.subr.bf16.mxu0 0
  %1891 = vmatpush1.bf16.msra.mxu0 0
  %1892 = vmatprep.subr.bf16.mxu0 0
  %1893 = vmatpush1.bf16.msra.mxu0 0
  %1894 = vmatprep.subr.bf16.mxu0 0
  %1895 = vmatpush1.bf16.msra.mxu0 0
  %1896 = vmatprep.subr.bf16.mxu0 0
  %1897 = vmatpush1.bf16.msra.mxu0 0
  %1898 = vmatprep.subr.bf16.mxu0 0
  %1899 = vmatpush1.bf16.msra.mxu0 0
  %1900 = vmatprep.subr.bf16.mxu0 0
  %1901 = vmatpush1.bf16.msra.mxu0 0
  %1902 = vmatprep.subr.bf16.mxu0 0
  %1903 = vmatpush1.bf16.msra.mxu0 0
  %1904 = vmatprep.mubr.bf16.mxu0 0
  %1905 = vmatmul.mubr.bf16.gmra.mrb[0].mxu0 %v1870
  %v1906 = vpop.f32.mrb[0].mxu0
  %v1907 = vadd.f32 %v29, %v1906
  %v1908 = vpop.f32.mrb[0].mxu0
  %v1909 = vadd.f32 %v33, %v1908
  %v1910 = vpop.f32.mrb[0].mxu0
  %v1911 = vpop.f32.mrb[0].mxu0
  %1912 = vdwg.mxu0
  %1913 = vmatprep.subr.bf16.mxu0 %v1856
  %1914 = vmatpush1.bf16.msra.mxu0 %v1855
  %1915 = vmatprep.subr.bf16.mxu0 %v1860
  %1916 = vmatpush1.bf16.msra.mxu0 %v1859
  %1917 = vmatprep.subr.bf16.mxu0 0
  %1918 = vmatpush1.bf16.msra.mxu0 0
  %1919 = vmatprep.subr.bf16.mxu0 0
  %1920 = vmatpush1.bf16.msra.mxu0 0
  %1921 = vmatprep.subr.bf16.mxu0 0
  %1922 = vmatpush1.bf16.msra.mxu0 0
  %1923 = vmatprep.subr.bf16.mxu0 0
  %1924 = vmatpush1.bf16.msra.mxu0 0
  %1925 = vmatprep.subr.bf16.mxu0 0
  %1926 = vmatpush1.bf16.msra.mxu0 0
  %1927 = vmatprep.subr.bf16.mxu0 0
  %1928 = vmatpush1.bf16.msra.mxu0 0
  %1929 = vmatprep.subr.bf16.mxu0 0
  %1930 = vmatpush1.bf16.msra.mxu0 0
  %1931 = vmatprep.subr.bf16.mxu0 0
  %1932 = vmatpush1.bf16.msra.mxu0 0
  %1933 = vmatprep.subr.bf16.mxu0 0
  %1934 = vmatpush1.bf16.msra.mxu0 0
  %1935 = vmatprep.subr.bf16.mxu0 0
  %1936 = vmatpush1.bf16.msra.mxu0 0
  %1937 = vmatprep.subr.bf16.mxu0 0
  %1938 = vmatpush1.bf16.msra.mxu0 0
  %1939 = vmatprep.subr.bf16.mxu0 0
  %1940 = vmatpush1.bf16.msra.mxu0 0
  %1941 = vmatprep.subr.bf16.mxu0 0
  %1942 = vmatpush1.bf16.msra.mxu0 0
  %1943 = vmatprep.subr.bf16.mxu0 0
  %1944 = vmatpush1.bf16.msra.mxu0 0
  %1945 = vmatprep.mubr.bf16.mxu0 0
  %1946 = vmatmul.mubr.bf16.gmra.mrb[0].mxu0 %v1870
  %v1947 = vpop.f32.mrb[0].mxu0
  %v1948 = vadd.f32 %v37, %v1947
  %v1949 = vpop.f32.mrb[0].mxu0
  %v1950 = vadd.f32 %v41, %v1949
  %v1951 = vpop.f32.mrb[0].mxu0
  %v1952 = vpop.f32.mrb[0].mxu0
  %1953 = vdwg.mxu0
  %v1954 = vld [vmem:[#allocation2] sm:$0xff]
  %v1955 = vpack.c.bf16 %v1954, %v1954
  %v1956 = vld [vmem:[%s2] sm:$0xff]
  %v1957 = vld [vmem:[%s2 + $0x8] sm:$0xff]
  %v1958 = vld [vmem:[%s2 + $0x10] sm:$0xff]
  %v1959 = vld [vmem:[%s2 + $0x18] sm:$0xff]
  %v1960 = vld [vmem:[%s2 + $0x20] sm:$0xff]
  %v1961 = vld [vmem:[%s2 + $0x28] sm:$0xff]
  %v1962 = vld [vmem:[%s2 + $0x30] sm:$0xff]
  %v1963 = vld [vmem:[%s2 + $0x38] sm:$0xff]
  %v1964 = vld [vmem:[%s2 + $0x40] sm:$0xff]
  %v1965 = vld [vmem:[%s2 + $0x48] sm:$0xff]
  %v1966 = vld [vmem:[%s2 + $0x50] sm:$0xff]
  %v1967 = vld [vmem:[%s2 + $0x58] sm:$0xff]
  %v1968 = vld [vmem:[%s2 + $0x60] sm:$0xff]
  %v1969 = vld [vmem:[%s2 + $0x68] sm:$0xff]
  %v1970 = vld [vmem:[%s2 + $0x70] sm:$0xff]
  %v1971 = vld [vmem:[%s2 + $0x78] sm:$0xff]
  %v1972 = vld [vmem:[%s2 + $0x80] sm:$0xff]
  %v1973 = vld [vmem:[%s2 + $0x88] sm:$0xff]
  %v1974 = vld [vmem:[%s2 + $0x90] sm:$0xff]
  %v1975 = vld [vmem:[%s2 + $0x98] sm:$0xff]
  %v1976 = vld [vmem:[%s2 + $0xa0] sm:$0xff]
  %v1977 = vld [vmem:[%s2 + $0xa8] sm:$0xff]
  %v1978 = vld [vmem:[%s2 + $0xb0] sm:$0xff]
  %v1979 = vld [vmem:[%s2 + $0xb8] sm:$0xff]
  %v1980 = vld [vmem:[%s2 + $0xc0] sm:$0xff]
  %v1981 = vld [vmem:[%s2 + $0xc8] sm:$0xff]
  %v1982 = vld [vmem:[%s2 + $0xd0] sm:$0xff]
  %v1983 = vld [vmem:[%s2 + $0xd8] sm:$0xff]
  %v1984 = vld [vmem:[%s2 + $0xe0] sm:$0xff]
  %v1985 = vld [vmem:[%s2 + $0xe8] sm:$0xff]
  %v1986 = vld [vmem:[%s2 + $0xf0] sm:$0xff]
  %v1987 = vld [vmem:[%s2 + $0xf8] sm:$0xff]
  %v2020 = vunpack.c.l.b16 %v1956
  %v2021 = vunpack.c.h.b16 %v1956
  %v2022 = vunpack.c.l.b16 %v1957
  %v2023 = vunpack.c.h.b16 %v1957
  %v2024 = vunpack.c.l.b16 %v1958
  %v2025 = vunpack.c.h.b16 %v1958
  %v2026 = vunpack.c.l.b16 %v1959
  %v2027 = vunpack.c.h.b16 %v1959
  %v2028 = vunpack.c.l.b16 %v1960
  %v2029 = vunpack.c.h.b16 %v1960
  %v2030 = vunpack.c.l.b16 %v1961
  %v2031 = vunpack.c.h.b16 %v1961
  %v2032 = vunpack.c.l.b16 %v1962
  %v2033 = vunpack.c.h.b16 %v1962
  %v2034 = vunpack.c.l.b16 %v1963
  %v2035 = vunpack.c.h.b16 %v1963
  %v2036 = vunpack.c.l.b16 %v1964
  %v2037 = vunpack.c.h.b16 %v1964
  %v2038 = vunpack.c.l.b16 %v1965
  %v2039 = vunpack.c.h.b16 %v1965
  %v2040 = vunpack.c.l.b16 %v1966
  %v2041 = vunpack.c.h.b16 %v1966
  %v2042 = vunpack.c.l.b16 %v1967
  %v2043 = vunpack.c.h.b16 %v1967
  %v2044 = vunpack.c.l.b16 %v1968
  %v2045 = vunpack.c.h.b16 %v1968
  %v2046 = vunpack.c.l.b16 %v1969
  %v2047 = vunpack.c.h.b16 %v1969
  %v2048 = vunpack.c.l.b16 %v1970
  %v2049 = vunpack.c.h.b16 %v1970
  %v2050 = vunpack.c.l.b16 %v1971
  %v2051 = vunpack.c.h.b16 %v1971
  %v2052 = vunpack.c.l.b16 %v1972
  %v2053 = vunpack.c.h.b16 %v1972
  %v2054 = vunpack.c.l.b16 %v1973
  %v2055 = vunpack.c.h.b16 %v1973
  %v2056 = vunpack.c.l.b16 %v1974
  %v2057 = vunpack.c.h.b16 %v1974
  %v2058 = vunpack.c.l.b16 %v1975
  %v2059 = vunpack.c.h.b16 %v1975
  %v2060 = vunpack.c.l.b16 %v1976
  %v2061 = vunpack.c.h.b16 %v1976
  %v2062 = vunpack.c.l.b16 %v1977
  %v2063 = vunpack.c.h.b16 %v1977
  %v2064 = vunpack.c.l.b16 %v1978
  %v2065 = vunpack.c.h.b16 %v1978
  %v2066 = vunpack.c.l.b16 %v1979
  %v2067 = vunpack.c.h.b16 %v1979
  %v2068 = vunpack.c.l.b16 %v1980
  %v2069 = vunpack.c.h.b16 %v1980
  %v2070 = vunpack.c.l.b16 %v1981
  %v2071 = vunpack.c.h.b16 %v1981
  %v2072 = vunpack.c.l.b16 %v1982
  %v2073 = vunpack.c.h.b16 %v1982
  %v2074 = vunpack.c.l.b16 %v1983
  %v2075 = vunpack.c.h.b16 %v1983
  %v2076 = vunpack.c.l.b16 %v1984
  %v2077 = vunpack.c.h.b16 %v1984
  %v2078 = vunpack.c.l.b16 %v1985
  %v2079 = vunpack.c.h.b16 %v1985
  %v2080 = vunpack.c.l.b16 %v1986
  %v2081 = vunpack.c.h.b16 %v1986
  %v2082 = vunpack.c.l.b16 %v1987
  %v2083 = vunpack.c.h.b16 %v1987
  %v2084 = vpack.c.b16 %v2024, %v2020
  %v2085 = vpack.c.b16 %v2025, %v2021
  %v2086 = vpack.c.b16 %v2026, %v2022
  %v2087 = vpack.c.b16 %v2027, %v2023
  %v2088 = vpack.c.b16 %v2032, %v2028
  %v2089 = vpack.c.b16 %v2033, %v2029
  %v2090 = vpack.c.b16 %v2034, %v2030
  %v2091 = vpack.c.b16 %v2035, %v2031
  %v2092 = vpack.c.b16 %v2040, %v2036
  %v2093 = vpack.c.b16 %v2041, %v2037
  %v2094 = vpack.c.b16 %v2042, %v2038
  %v2095 = vpack.c.b16 %v2043, %v2039
  %v2096 = vpack.c.b16 %v2048, %v2044
  %v2097 = vpack.c.b16 %v2049, %v2045
  %v2098 = vpack.c.b16 %v2050, %v2046
  %v2099 = vpack.c.b16 %v2051, %v2047
  %v2100 = vpack.c.b16 %v2056, %v2052
  %v2101 = vpack.c.b16 %v2057, %v2053
  %v2102 = vpack.c.b16 %v2058, %v2054
  %v2103 = vpack.c.b16 %v2059, %v2055
  %v2104 = vpack.c.b16 %v2064, %v2060
  %v2105 = vpack.c.b16 %v2065, %v2061
  %v2106 = vpack.c.b16 %v2066, %v2062
  %v2107 = vpack.c.b16 %v2067, %v2063
  %v2108 = vpack.c.b16 %v2072, %v2068
  %v2109 = vpack.c.b16 %v2073, %v2069
  %v2110 = vpack.c.b16 %v2074, %v2070
  %v2111 = vpack.c.b16 %v2075, %v2071
  %v2112 = vpack.c.b16 %v2080, %v2076
  %v2113 = vpack.c.b16 %v2081, %v2077
  %v2114 = vpack.c.b16 %v2082, %v2078
  %v2115 = vpack.c.b16 %v2083, %v2079
  %2148 = vmatprep.subr.bf16.mxu0 %v2085
  %2149 = vmatpush1.bf16.msra.mxu0 %v2084
  %2150 = vmatprep.subr.bf16.mxu0 %v2089
  %2151 = vmatpush1.bf16.msra.mxu0 %v2088
  %2152 = vmatprep.subr.bf16.mxu0 %v2093
  %2153 = vmatpush1.bf16.msra.mxu0 %v2092
  %2154 = vmatprep.subr.bf16.mxu0 %v2097
  %2155 = vmatpush1.bf16.msra.mxu0 %v2096
  %2156 = vmatprep.subr.bf16.mxu0 %v2101
  %2157 = vmatpush1.bf16.msra.mxu0 %v2100
  %2158 = vmatprep.subr.bf16.mxu0 %v2105
  %2159 = vmatpush1.bf16.msra.mxu0 %v2104
  %2160 = vmatprep.subr.bf16.mxu0 %v2109
  %2161 = vmatpush1.bf16.msra.mxu0 %v2108
  %2162 = vmatprep.subr.bf16.mxu0 %v2113
  %2163 = vmatpush1.bf16.msra.mxu0 %v2112
  %2164 = vmatprep.subr.bf16.mxu0 0
  %2165 = vmatpush1.bf16.msra.mxu0 0
  %2166 = vmatprep.subr.bf16.mxu0 0
  %2167 = vmatpush1.bf16.msra.mxu0 0
  %2168 = vmatprep.subr.bf16.mxu0 0
  %2169 = vmatpush1.bf16.msra.mxu0 0
  %2170 = vmatprep.subr.bf16.mxu0 0
  %2171 = vmatpush1.bf16.msra.mxu0 0
  %2172 = vmatprep.subr.bf16.mxu0 0
  %2173 = vmatpush1.bf16.msra.mxu0 0
  %2174 = vmatprep.subr.bf16.mxu0 0
  %2175 = vmatpush1.bf16.msra.mxu0 0
  %2176 = vmatprep.subr.bf16.mxu0 0
  %2177 = vmatpush1.bf16.msra.mxu0 0
  %2178 = vmatprep.subr.bf16.mxu0 0
  %2179 = vmatpush1.bf16.msra.mxu0 0
  %2180 = vmatprep.mubr.bf16.mxu0 0
  %2181 = vmatmul.mubr.bf16.gmra.mrb[0].mxu0 %v1955
  %v2182 = vpop.f32.mrb[0].mxu0
  %v2183 = vadd.f32 0.0, %v2182
  %v2184 = vpop.f32.mrb[0].mxu0
  %v2185 = vadd.f32 0.0, %v2184
  %v2186 = vpop.f32.mrb[0].mxu0
  %v2187 = vpop.f32.mrb[0].mxu0
  %2188 = vdwg.mxu0
  %2189 = vmatprep.subr.bf16.mxu0 %v2087
  %2190 = vmatpush1.bf16.msra.mxu0 %v2086
  %2191 = vmatprep.subr.bf16.mxu0 %v2091
  %2192 = vmatpush1.bf16.msra.mxu0 %v2090
  %2193 = vmatprep.subr.bf16.mxu0 %v2095
  %2194 = vmatpush1.bf16.msra.mxu0 %v2094
  %2195 = vmatprep.subr.bf16.mxu0 %v2099
  %2196 = vmatpush1.bf16.msra.mxu0 %v2098
  %2197 = vmatprep.subr.bf16.mxu0 %v2103
  %2198 = vmatpush1.bf16.msra.mxu0 %v2102
  %2199 = vmatprep.subr.bf16.mxu0 %v2107
  %2200 = vmatpush1.bf16.msra.mxu0 %v2106
  %2201 = vmatprep.subr.bf16.mxu0 %v2111
  %2202 = vmatpush1.bf16.msra.mxu0 %v2110
  %2203 = vmatprep.subr.bf16.mxu0 %v2115
  %2204 = vmatpush1.bf16.msra.mxu0 %v2114
  %2205 = vmatprep.subr.bf16.mxu0 0
  %2206 = vmatpush1.bf16.msra.mxu0 0
  %2207 = vmatprep.subr.bf16.mxu0 0
  %2208 = vmatpush1.bf16.msra.mxu0 0
  %2209 = vmatprep.subr.bf16.mxu0 0
  %2210 = vmatpush1.bf16.msra.mxu0 0
  %2211 = vmatprep.subr.bf16.mxu0 0
  %2212 = vmatpush1.bf16.msra.mxu0 0
  %2213 = vmatprep.subr.bf16.mxu0 0
  %2214 = vmatpush1.bf16.msra.mxu0 0
  %2215 = vmatprep.subr.bf16.mxu0 0
  %2216 = vmatpush1.bf16.msra.mxu0 0
  %2217 = vmatprep.subr.bf16.mxu0 0
  %2218 = vmatpush1.bf16.msra.mxu0 0
  %2219 = vmatprep.subr.bf16.mxu0 0
  %2220 = vmatpush1.bf16.msra.mxu0 0
  %2221 = vmatprep.mubr.bf16.mxu0 0
  %2222 = vmatmul.mubr.bf16.gmra.mrb[0].mxu0 %v1955
  %v2223 = vpop.f32.mrb[0].mxu0
  %v2224 = vadd.f32 0.0, %v2223
  %v2225 = vpop.f32.mrb[0].mxu0
  %v2226 = vadd.f32 0.0, %v2225
  %v2227 = vpop.f32.mrb[0].mxu0
  %v2228 = vpop.f32.mrb[0].mxu0
  %2229 = vdwg.mxu0
  %v2230 = vadd.f32 %v1907, %v2183
  %v2231 = vadd.f32 %v1909, %v2185
  %v2232 = vadd.f32 %v1948, %v2224
  %v2233 = vadd.f32 %v1950, %v2226
  %v2234 = vxor.u32 %v2230, 2147483648
  %v2235 = vmul.f32 %v2234, 1.442695
  %v2236 = vpow.pop %v2235
  %v2237 = vadd.f32 %v2236, 1.0
  %v2238 = vrcp.pop %v2237
  %v2239 = vmul.f32 1.0, %v2238
  %v2240 = vxor.u32 %v2231, 2147483648
  %v2241 = vmul.f32 %v2240, 1.442695
  %v2242 = vpow.pop %v2241
  %v2243 = vadd.f32 %v2242, 1.0
  %v2244 = vrcp.pop %v2243
  %v2245 = vmul.f32 1.0, %v2244
  %v2246 = vtanh.pop %v2232
  %v2247 = vxor.u32 %v2233, 2147483648
  %v2248 = vmul.f32 %v2247, 1.442695
  %v2249 = vpow.pop %v2248
  %v2250 = vadd.f32 %v2249, 1.0
  %v2251 = vrcp.pop %v2250
  %v2252 = vmul.f32 1.0, %v2251
  %v2253 = vld [vmem:[%s4] sm:$0xff]
  %v2254 = vmul.f32 %v2239, %v2253
  %v2255 = vmul.f32 %v2245, %v2246
  %v2256 = vadd.f32 %v2254, %v2255
  %v2257 = vtanh.pop %v2256
  %v2258 = vmul.f32 %v2252, %v2257
  %2259 = vst [vmem:[%s4] sm:$0xff] %v2258
  %2260 = vst [vmem:[#allocation2] sm:$0xff] %v2256
  %s2261 = scalar_lea.vmem %s0, 40
  %v2262 = vld [vmem:[%s2261] sm:$0xff]
  %v2263 = vpack.c.bf16 %v2262, %v2262
  %v2264 = vld [vmem:[%s1] sm:$0xff]
  %v2265 = vld [vmem:[%s1 + $0x8] sm:$0xff]
  %v2266 = vld [vmem:[%s1 + $0x10] sm:$0xff]
  %v2267 = vld [vmem:[%s1 + $0x18] sm:$0xff]
  %v2268 = vld [vmem:[%s1 + $0x20] sm:$0xff]
  %v2269 = vld [vmem:[%s1 + $0x28] sm:$0xff]
  %v2270 = vld [vmem:[%s1 + $0x30] sm:$0xff]
  %v2271 = vld [vmem:[%s1 + $0x38] sm:$0xff]
  %v2280 = vunpack.c.l.b16 %v2264
  %v2281 = vunpack.c.h.b16 %v2264
  %v2282 = vunpack.c.l.b16 %v2265
  %v2283 = vunpack.c.h.b16 %v2265
  %v2284 = vunpack.c.l.b16 %v2266
  %v2285 = vunpack.c.h.b16 %v2266
  %v2286 = vunpack.c.l.b16 %v2267
  %v2287 = vunpack.c.h.b16 %v2267
  %v2288 = vunpack.c.l.b16 %v2268
  %v2289 = vunpack.c.h.b16 %v2268
  %v2290 = vunpack.c.l.b16 %v2269
  %v2291 = vunpack.c.h.b16 %v2269
  %v2292 = vunpack.c.l.b16 %v2270
  %v2293 = vunpack.c.h.b16 %v2270
  %v2294 = vunpack.c.l.b16 %v2271
  %v2295 = vunpack.c.h.b16 %v2271
  %v2296 = vpack.c.b16 %v2284, %v2280
  %v2297 = vpack.c.b16 %v2285, %v2281
  %v2298 = vpack.c.b16 %v2286, %v2282
  %v2299 = vpack.c.b16 %v2287, %v2283
  %v2300 = vpack.c.b16 %v2292, %v2288
  %v2301 = vpack.c.b16 %v2293, %v2289
  %v2302 = vpack.c.b16 %v2294, %v2290
  %v2303 = vpack.c.b16 %v2295, %v2291
  %v2313 = vsel %vm96, %v2263, 0
  %2315 = vmatprep.subr.bf16.mxu0 %v2297
  %2316 = vmatpush1.bf16.msra.mxu0 %v2296
  %2317 = vmatprep.subr.bf16.mxu0 %v2301
  %2318 = vmatpush1.bf16.msra.mxu0 %v2300
  %2319 = vmatprep.subr.bf16.mxu0 0
  %2320 = vmatpush1.bf16.msra.mxu0 0
  %2321 = vmatprep.subr.bf16.mxu0 0
  %2322 = vmatpush1.bf16.msra.mxu0 0
  %2323 = vmatprep.subr.bf16.mxu0 0
  %2324 = vmatpush1.bf16.msra.mxu0 0
  %2325 = vmatprep.subr.bf16.mxu0 0
  %2326 = vmatpush1.bf16.msra.mxu0 0
  %2327 = vmatprep.subr.bf16.mxu0 0
  %2328 = vmatpush1.bf16.msra.mxu0 0
  %2329 = vmatprep.subr.bf16.mxu0 0
  %2330 = vmatpush1.bf16.msra.mxu0 0
  %2331 = vmatprep.subr.bf16.mxu0 0
  %2332 = vmatpush1.bf16.msra.mxu0 0
  %2333 = vmatprep.subr.bf16.mxu0 0
  %2334 = vmatpush1.bf16.msra.mxu0 0
  %2335 = vmatprep.subr.bf16.mxu0 0
  %2336 = vmatpush1.bf16.msra.mxu0 0
  %2337 = vmatprep.subr.bf16.mxu0 0
  %2338 = vmatpush1.bf16.msra.mxu0 0
  %2339 = vmatprep.subr.bf16.mxu0 0
  %2340 = vmatpush1.bf16.msra.mxu0 0
  %2341 = vmatprep.subr.bf16.mxu0 0
  %2342 = vmatpush1.bf16.msra.mxu0 0
  %2343 = vmatprep.subr.bf16.mxu0 0
  %2344 = vmatpush1.bf16.msra.mxu0 0
  %2345 = vmatprep.subr.bf16.mxu0 0
  %2346 = vmatpush1.bf16.msra.mxu0 0
  %2347 = vmatprep.mubr.bf16.mxu0 0
  %2348 = vmatmul.mubr.bf16.gmra.mrb[0].mxu0 %v2313
  %v2349 = vpop.f32.mrb[0].mxu0
  %v2350 = vadd.f32 %v29, %v2349
  %v2351 = vpop.f32.mrb[0].mxu0
  %v2352 = vadd.f32 %v33, %v2351
  %v2353 = vpop.f32.mrb[0].mxu0
  %v2354 = vpop.f32.mrb[0].mxu0
  %2355 = vdwg.mxu0
  %2356 = vmatprep.subr.bf16.mxu0 %v2299
  %2357 = vmatpush1.bf16.msra.mxu0 %v2298
  %2358 = vmatprep.subr.bf16.mxu0 %v2303
  %2359 = vmatpush1.bf16.msra.mxu0 %v2302
  %2360 = vmatprep.subr.bf16.mxu0 0
  %2361 = vmatpush1.bf16.msra.mxu0 0
  %2362 = vmatprep.subr.bf16.mxu0 0
  %2363 = vmatpush1.bf16.msra.mxu0 0
  %2364 = vmatprep.subr.bf16.mxu0 0
  %2365 = vmatpush1.bf16.msra.mxu0 0
  %2366 = vmatprep.subr.bf16.mxu0 0
  %2367 = vmatpush1.bf16.msra.mxu0 0
  %2368 = vmatprep.subr.bf16.mxu0 0
  %2369 = vmatpush1.bf16.msra.mxu0 0
  %2370 = vmatprep.subr.bf16.mxu0 0
  %2371 = vmatpush1.bf16.msra.mxu0 0
  %2372 = vmatprep.subr.bf16.mxu0 0
  %2373 = vmatpush1.bf16.msra.mxu0 0
  %2374 = vmatprep.subr.bf16.mxu0 0
  %2375 = vmatpush1.bf16.msra.mxu0 0
  %2376 = vmatprep.subr.bf16.mxu0 0
  %2377 = vmatpush1.bf16.msra.mxu0 0
  %2378 = vmatprep.subr.bf16.mxu0 0
  %2379 = vmatpush1.bf16.msra.mxu0 0
  %2380 = vmatprep.subr.bf16.mxu0 0
  %2381 = vmatpush1.bf16.msra.mxu0 0
  %2382 = vmatprep.subr.bf16.mxu0 0
  %2383 = vmatpush1.bf16.msra.mxu0 0
  %2384 = vmatprep.subr.bf16.mxu0 0
  %2385 = vmatpush1.bf16.msra.mxu0 0
  %2386 = vmatprep.subr.bf16.mxu0 0
  %2387 = vmatpush1.bf16.msra.mxu0 0
  %2388 = vmatprep.mubr.bf16.mxu0 0
  %2389 = vmatmul.mubr.bf16.gmra.mrb[0].mxu0 %v2313
  %v2390 = vpop.f32.mrb[0].mxu0
  %v2391 = vadd.f32 %v37, %v2390
  %v2392 = vpop.f32.mrb[0].mxu0
  %v2393 = vadd.f32 %v41, %v2392
  %v2394 = vpop.f32.mrb[0].mxu0
  %v2395 = vpop.f32.mrb[0].mxu0
  %2396 = vdwg.mxu0
  %v2397 = vld [vmem:[#allocation2] sm:$0xff]
  %v2398 = vpack.c.bf16 %v2397, %v2397
  %v2399 = vld [vmem:[%s2] sm:$0xff]
  %v2400 = vld [vmem:[%s2 + $0x8] sm:$0xff]
  %v2401 = vld [vmem:[%s2 + $0x10] sm:$0xff]
  %v2402 = vld [vmem:[%s2 + $0x18] sm:$0xff]
  %v2403 = vld [vmem:[%s2 + $0x20] sm:$0xff]
  %v2404 = vld [vmem:[%s2 + $0x28] sm:$0xff]
  %v2405 = vld [vmem:[%s2 + $0x30] sm:$0xff]
  %v2406 = vld [vmem:[%s2 + $0x38] sm:$0xff]
  %v2407 = vld [vmem:[%s2 + $0x40] sm:$0xff]
  %v2408 = vld [vmem:[%s2 + $0x48] sm:$0xff]
  %v2409 = vld [vmem:[%s2 + $0x50] sm:$0xff]
  %v2410 = vld [vmem:[%s2 + $0x58] sm:$0xff]
  %v2411 = vld [vmem:[%s2 + $0x60] sm:$0xff]
  %v2412 = vld [vmem:[%s2 + $0x68] sm:$0xff]
  %v2413 = vld [vmem:[%s2 + $0x70] sm:$0xff]
  %v2414 = vld [vmem:[%s2 + $0x78] sm:$0xff]
  %v2415 = vld [vmem:[%s2 + $0x80] sm:$0xff]
  %v2416 = vld [vmem:[%s2 + $0x88] sm:$0xff]
  %v2417 = vld [vmem:[%s2 + $0x90] sm:$0xff]
  %v2418 = vld [vmem:[%s2 + $0x98] sm:$0xff]
  %v2419 = vld [vmem:[%s2 + $0xa0] sm:$0xff]
  %v2420 = vld [vmem:[%s2 + $0xa8] sm:$0xff]
  %v2421 = vld [vmem:[%s2 + $0xb0] sm:$0xff]
  %v2422 = vld [vmem:[%s2 + $0xb8] sm:$0xff]
  %v2423 = vld [vmem:[%s2 + $0xc0] sm:$0xff]
  %v2424 = vld [vmem:[%s2 + $0xc8] sm:$0xff]
  %v2425 = vld [vmem:[%s2 + $0xd0] sm:$0xff]
  %v2426 = vld [vmem:[%s2 + $0xd8] sm:$0xff]
  %v2427 = vld [vmem:[%s2 + $0xe0] sm:$0xff]
  %v2428 = vld [vmem:[%s2 + $0xe8] sm:$0xff]
  %v2429 = vld [vmem:[%s2 + $0xf0] sm:$0xff]
  %v2430 = vld [vmem:[%s2 + $0xf8] sm:$0xff]
  %v2463 = vunpack.c.l.b16 %v2399
  %v2464 = vunpack.c.h.b16 %v2399
  %v2465 = vunpack.c.l.b16 %v2400
  %v2466 = vunpack.c.h.b16 %v2400
  %v2467 = vunpack.c.l.b16 %v2401
  %v2468 = vunpack.c.h.b16 %v2401
  %v2469 = vunpack.c.l.b16 %v2402
  %v2470 = vunpack.c.h.b16 %v2402
  %v2471 = vunpack.c.l.b16 %v2403
  %v2472 = vunpack.c.h.b16 %v2403
  %v2473 = vunpack.c.l.b16 %v2404
  %v2474 = vunpack.c.h.b16 %v2404
  %v2475 = vunpack.c.l.b16 %v2405
  %v2476 = vunpack.c.h.b16 %v2405
  %v2477 = vunpack.c.l.b16 %v2406
  %v2478 = vunpack.c.h.b16 %v2406
  %v2479 = vunpack.c.l.b16 %v2407
  %v2480 = vunpack.c.h.b16 %v2407
  %v2481 = vunpack.c.l.b16 %v2408
  %v2482 = vunpack.c.h.b16 %v2408
  %v2483 = vunpack.c.l.b16 %v2409
  %v2484 = vunpack.c.h.b16 %v2409
  %v2485 = vunpack.c.l.b16 %v2410
  %v2486 = vunpack.c.h.b16 %v2410
  %v2487 = vunpack.c.l.b16 %v2411
  %v2488 = vunpack.c.h.b16 %v2411
  %v2489 = vunpack.c.l.b16 %v2412
  %v2490 = vunpack.c.h.b16 %v2412
  %v2491 = vunpack.c.l.b16 %v2413
  %v2492 = vunpack.c.h.b16 %v2413
  %v2493 = vunpack.c.l.b16 %v2414
  %v2494 = vunpack.c.h.b16 %v2414
  %v2495 = vunpack.c.l.b16 %v2415
  %v2496 = vunpack.c.h.b16 %v2415
  %v2497 = vunpack.c.l.b16 %v2416
  %v2498 = vunpack.c.h.b16 %v2416
  %v2499 = vunpack.c.l.b16 %v2417
  %v2500 = vunpack.c.h.b16 %v2417
  %v2501 = vunpack.c.l.b16 %v2418
  %v2502 = vunpack.c.h.b16 %v2418
  %v2503 = vunpack.c.l.b16 %v2419
  %v2504 = vunpack.c.h.b16 %v2419
  %v2505 = vunpack.c.l.b16 %v2420
  %v2506 = vunpack.c.h.b16 %v2420
  %v2507 = vunpack.c.l.b16 %v2421
  %v2508 = vunpack.c.h.b16 %v2421
  %v2509 = vunpack.c.l.b16 %v2422
  %v2510 = vunpack.c.h.b16 %v2422
  %v2511 = vunpack.c.l.b16 %v2423
  %v2512 = vunpack.c.h.b16 %v2423
  %v2513 = vunpack.c.l.b16 %v2424
  %v2514 = vunpack.c.h.b16 %v2424
  %v2515 = vunpack.c.l.b16 %v2425
  %v2516 = vunpack.c.h.b16 %v2425
  %v2517 = vunpack.c.l.b16 %v2426
  %v2518 = vunpack.c.h.b16 %v2426
  %v2519 = vunpack.c.l.b16 %v2427
  %v2520 = vunpack.c.h.b16 %v2427
  %v2521 = vunpack.c.l.b16 %v2428
  %v2522 = vunpack.c.h.b16 %v2428
  %v2523 = vunpack.c.l.b16 %v2429
  %v2524 = vunpack.c.h.b16 %v2429
  %v2525 = vunpack.c.l.b16 %v2430
  %v2526 = vunpack.c.h.b16 %v2430
  %v2527 = vpack.c.b16 %v2467, %v2463
  %v2528 = vpack.c.b16 %v2468, %v2464
  %v2529 = vpack.c.b16 %v2469, %v2465
  %v2530 = vpack.c.b16 %v2470, %v2466
  %v2531 = vpack.c.b16 %v2475, %v2471
  %v2532 = vpack.c.b16 %v2476, %v2472
  %v2533 = vpack.c.b16 %v2477, %v2473
  %v2534 = vpack.c.b16 %v2478, %v2474
  %v2535 = vpack.c.b16 %v2483, %v2479
  %v2536 = vpack.c.b16 %v2484, %v2480
  %v2537 = vpack.c.b16 %v2485, %v2481
  %v2538 = vpack.c.b16 %v2486, %v2482
  %v2539 = vpack.c.b16 %v2491, %v2487
  %v2540 = vpack.c.b16 %v2492, %v2488
  %v2541 = vpack.c.b16 %v2493, %v2489
  %v2542 = vpack.c.b16 %v2494, %v2490
  %v2543 = vpack.c.b16 %v2499, %v2495
  %v2544 = vpack.c.b16 %v2500, %v2496
  %v2545 = vpack.c.b16 %v2501, %v2497
  %v2546 = vpack.c.b16 %v2502, %v2498
  %v2547 = vpack.c.b16 %v2507, %v2503
  %v2548 = vpack.c.b16 %v2508, %v2504
  %v2549 = vpack.c.b16 %v2509, %v2505
  %v2550 = vpack.c.b16 %v2510, %v2506
  %v2551 = vpack.c.b16 %v2515, %v2511
  %v2552 = vpack.c.b16 %v2516, %v2512
  %v2553 = vpack.c.b16 %v2517, %v2513
  %v2554 = vpack.c.b16 %v2518, %v2514
  %v2555 = vpack.c.b16 %v2523, %v2519
  %v2556 = vpack.c.b16 %v2524, %v2520
  %v2557 = vpack.c.b16 %v2525, %v2521
  %v2558 = vpack.c.b16 %v2526, %v2522
  %2591 = vmatprep.subr.bf16.mxu0 %v2528
  %2592 = vmatpush1.bf16.msra.mxu0 %v2527
  %2593 = vmatprep.subr.bf16.mxu0 %v2532
  %2594 = vmatpush1.bf16.msra.mxu0 %v2531
  %2595 = vmatprep.subr.bf16.mxu0 %v2536
  %2596 = vmatpush1.bf16.msra.mxu0 %v2535
  %2597 = vmatprep.subr.bf16.mxu0 %v2540
  %2598 = vmatpush1.bf16.msra.mxu0 %v2539
  %2599 = vmatprep.subr.bf16.mxu0 %v2544
  %2600 = vmatpush1.bf16.msra.mxu0 %v2543
  %2601 = vmatprep.subr.bf16.mxu0 %v2548
  %2602 = vmatpush1.bf16.msra.mxu0 %v2547
  %2603 = vmatprep.subr.bf16.mxu0 %v2552
  %2604 = vmatpush1.bf16.msra.mxu0 %v2551
  %2605 = vmatprep.subr.bf16.mxu0 %v2556
  %2606 = vmatpush1.bf16.msra.mxu0 %v2555
  %2607 = vmatprep.subr.bf16.mxu0 0
  %2608 = vmatpush1.bf16.msra.mxu0 0
  %2609 = vmatprep.subr.bf16.mxu0 0
  %2610 = vmatpush1.bf16.msra.mxu0 0
  %2611 = vmatprep.subr.bf16.mxu0 0
  %2612 = vmatpush1.bf16.msra.mxu0 0
  %2613 = vmatprep.subr.bf16.mxu0 0
  %2614 = vmatpush1.bf16.msra.mxu0 0
  %2615 = vmatprep.subr.bf16.mxu0 0
  %2616 = vmatpush1.bf16.msra.mxu0 0
  %2617 = vmatprep.subr.bf16.mxu0 0
  %2618 = vmatpush1.bf16.msra.mxu0 0
  %2619 = vmatprep.subr.bf16.mxu0 0
  %2620 = vmatpush1.bf16.msra.mxu0 0
  %2621 = vmatprep.subr.bf16.mxu0 0
  %2622 = vmatpush1.bf16.msra.mxu0 0
  %2623 = vmatprep.mubr.bf16.mxu0 0
  %2624 = vmatmul.mubr.bf16.gmra.mrb[0].mxu0 %v2398
  %v2625 = vpop.f32.mrb[0].mxu0
  %v2626 = vadd.f32 0.0, %v2625
  %v2627 = vpop.f32.mrb[0].mxu0
  %v2628 = vadd.f32 0.0, %v2627
  %v2629 = vpop.f32.mrb[0].mxu0
  %v2630 = vpop.f32.mrb[0].mxu0
  %2631 = vdwg.mxu0
  %2632 = vmatprep.subr.bf16.mxu0 %v2530
  %2633 = vmatpush1.bf16.msra.mxu0 %v2529
  %2634 = vmatprep.subr.bf16.mxu0 %v2534
  %2635 = vmatpush1.bf16.msra.mxu0 %v2533
  %2636 = vmatprep.subr.bf16.mxu0 %v2538
  %2637 = vmatpush1.bf16.msra.mxu0 %v2537
  %2638 = vmatprep.subr.bf16.mxu0 %v2542
  %2639 = vmatpush1.bf16.msra.mxu0 %v2541
  %2640 = vmatprep.subr.bf16.mxu0 %v2546
  %2641 = vmatpush1.bf16.msra.mxu0 %v2545
  %2642 = vmatprep.subr.bf16.mxu0 %v2550
  %2643 = vmatpush1.bf16.msra.mxu0 %v2549
  %2644 = vmatprep.subr.bf16.mxu0 %v2554
  %2645 = vmatpush1.bf16.msra.mxu0 %v2553
  %2646 = vmatprep.subr.bf16.mxu0 %v2558
  %2647 = vmatpush1.bf16.msra.mxu0 %v2557
  %2648 = vmatprep.subr.bf16.mxu0 0
  %2649 = vmatpush1.bf16.msra.mxu0 0
  %2650 = vmatprep.subr.bf16.mxu0 0
  %2651 = vmatpush1.bf16.msra.mxu0 0
  %2652 = vmatprep.subr.bf16.mxu0 0
  %2653 = vmatpush1.bf16.msra.mxu0 0
  %2654 = vmatprep.subr.bf16.mxu0 0
  %2655 = vmatpush1.bf16.msra.mxu0 0
  %2656 = vmatprep.subr.bf16.mxu0 0
  %2657 = vmatpush1.bf16.msra.mxu0 0
  %2658 = vmatprep.subr.bf16.mxu0 0
  %2659 = vmatpush1.bf16.msra.mxu0 0
  %2660 = vmatprep.subr.bf16.mxu0 0
  %2661 = vmatpush1.bf16.msra.mxu0 0
  %2662 = vmatprep.subr.bf16.mxu0 0
  %2663 = vmatpush1.bf16.msra.mxu0 0
  %2664 = vmatprep.mubr.bf16.mxu0 0
  %2665 = vmatmul.mubr.bf16.gmra.mrb[0].mxu0 %v2398
  %v2666 = vpop.f32.mrb[0].mxu0
  %v2667 = vadd.f32 0.0, %v2666
  %v2668 = vpop.f32.mrb[0].mxu0
  %v2669 = vadd.f32 0.0, %v2668
  %v2670 = vpop.f32.mrb[0].mxu0
  %v2671 = vpop.f32.mrb[0].mxu0
  %2672 = vdwg.mxu0
  %v2673 = vadd.f32 %v2350, %v2626
  %v2674 = vadd.f32 %v2352, %v2628
  %v2675 = vadd.f32 %v2391, %v2667
  %v2676 = vadd.f32 %v2393, %v2669
  %v2677 = vxor.u32 %v2673, 2147483648
  %v2678 = vmul.f32 %v2677, 1.442695
  %v2679 = vpow.pop %v2678
  %v2680 = vadd.f32 %v2679, 1.0
  %v2681 = vrcp.pop %v2680
  %v2682 = vmul.f32 1.0, %v2681
  %v2683 = vxor.u32 %v2674, 2147483648
  %v2684 = vmul.f32 %v2683, 1.442695
  %v2685 = vpow.pop %v2684
  %v2686 = vadd.f32 %v2685, 1.0
  %v2687 = vrcp.pop %v2686
  %v2688 = vmul.f32 1.0, %v2687
  %v2689 = vtanh.pop %v2675
  %v2690 = vxor.u32 %v2676, 2147483648
  %v2691 = vmul.f32 %v2690, 1.442695
  %v2692 = vpow.pop %v2691
  %v2693 = vadd.f32 %v2692, 1.0
  %v2694 = vrcp.pop %v2693
  %v2695 = vmul.f32 1.0, %v2694
  %v2696 = vld [vmem:[%s4] sm:$0xff]
  %v2697 = vmul.f32 %v2682, %v2696
  %v2698 = vmul.f32 %v2688, %v2689
  %v2699 = vadd.f32 %v2697, %v2698
  %v2700 = vtanh.pop %v2699
  %v2701 = vmul.f32 %v2695, %v2700
  %2702 = vst [vmem:[%s4] sm:$0xff] %v2701
  %2703 = vst [vmem:[#allocation2] sm:$0xff] %v2699
  %s2704 = scalar_lea.vmem %s0, 48
  %v2705 = vld [vmem:[%s2704] sm:$0xff]
  %v2706 = vpack.c.bf16 %v2705, %v2705
  %v2707 = vld [vmem:[%s1] sm:$0xff]
  %v2708 = vld [vmem:[%s1 + $0x8] sm:$0xff]
  %v2709 = vld [vmem:[%s1 + $0x10] sm:$0xff]
  %v2710 = vld [vmem:[%s1 + $0x18] sm:$0xff]
  %v2711 = vld [vmem:[%s1 + $0x20] sm:$0xff]
  %v2712 = vld [vmem:[%s1 + $0x28] sm:$0xff]
  %v2713 = vld [vmem:[%s1 + $0x30] sm:$0xff]
  %v2714 = vld [vmem:[%s1 + $0x38] sm:$0xff]
  %v2723 = vunpack.c.l.b16 %v2707
  %v2724 = vunpack.c.h.b16 %v2707
  %v2725 = vunpack.c.l.b16 %v2708
  %v2726 = vunpack.c.h.b16 %v2708
  %v2727 = vunpack.c.l.b16 %v2709
  %v2728 = vunpack.c.h.b16 %v2709
  %v2729 = vunpack.c.l.b16 %v2710
  %v2730 = vunpack.c.h.b16 %v2710
  %v2731 = vunpack.c.l.b16 %v2711
  %v2732 = vunpack.c.h.b16 %v2711
  %v2733 = vunpack.c.l.b16 %v2712
  %v2734 = vunpack.c.h.b16 %v2712
  %v2735 = vunpack.c.l.b16 %v2713
  %v2736 = vunpack.c.h.b16 %v2713
  %v2737 = vunpack.c.l.b16 %v2714
  %v2738 = vunpack.c.h.b16 %v2714
  %v2739 = vpack.c.b16 %v2727, %v2723
  %v2740 = vpack.c.b16 %v2728, %v2724
  %v2741 = vpack.c.b16 %v2729, %v2725
  %v2742 = vpack.c.b16 %v2730, %v2726
  %v2743 = vpack.c.b16 %v2735, %v2731
  %v2744 = vpack.c.b16 %v2736, %v2732
  %v2745 = vpack.c.b16 %v2737, %v2733
  %v2746 = vpack.c.b16 %v2738, %v2734
  %v2756 = vsel %vm96, %v2706, 0
  %2758 = vmatprep.subr.bf16.mxu0 %v2740
  %2759 = vmatpush1.bf16.msra.mxu0 %v2739
  %2760 = vmatprep.subr.bf16.mxu0 %v2744
  %2761 = vmatpush1.bf16.msra.mxu0 %v2743
  %2762 = vmatprep.subr.bf16.mxu0 0
  %2763 = vmatpush1.bf16.msra.mxu0 0
  %2764 = vmatprep.subr.bf16.mxu0 0
  %2765 = vmatpush1.bf16.msra.mxu0 0
  %2766 = vmatprep.subr.bf16.mxu0 0
  %2767 = vmatpush1.bf16.msra.mxu0 0
  %2768 = vmatprep.subr.bf16.mxu0 0
  %2769 = vmatpush1.bf16.msra.mxu0 0
  %2770 = vmatprep.subr.bf16.mxu0 0
  %2771 = vmatpush1.bf16.msra.mxu0 0
  %2772 = vmatprep.subr.bf16.mxu0 0
  %2773 = vmatpush1.bf16.msra.mxu0 0
  %2774 = vmatprep.subr.bf16.mxu0 0
  %2775 = vmatpush1.bf16.msra.mxu0 0
  %2776 = vmatprep.subr.bf16.mxu0 0
  %2777 = vmatpush1.bf16.msra.mxu0 0
  %2778 = vmatprep.subr.bf16.mxu0 0
  %2779 = vmatpush1.bf16.msra.mxu0 0
  %2780 = vmatprep.subr.bf16.mxu0 0
  %2781 = vmatpush1.bf16.msra.mxu0 0
  %2782 = vmatprep.subr.bf16.mxu0 0
  %2783 = vmatpush1.bf16.msra.mxu0 0
  %2784 = vmatprep.subr.bf16.mxu0 0
  %2785 = vmatpush1.bf16.msra.mxu0 0
  %2786 = vmatprep.subr.bf16.mxu0 0
  %2787 = vmatpush1.bf16.msra.mxu0 0
  %2788 = vmatprep.subr.bf16.mxu0 0
  %2789 = vmatpush1.bf16.msra.mxu0 0
  %2790 = vmatprep.mubr.bf16.mxu0 0
  %2791 = vmatmul.mubr.bf16.gmra.mrb[0].mxu0 %v2756
  %v2792 = vpop.f32.mrb[0].mxu0
  %v2793 = vadd.f32 %v29, %v2792
  %v2794 = vpop.f32.mrb[0].mxu0
  %v2795 = vadd.f32 %v33, %v2794
  %v2796 = vpop.f32.mrb[0].mxu0
  %v2797 = vpop.f32.mrb[0].mxu0
  %2798 = vdwg.mxu0
  %2799 = vmatprep.subr.bf16.mxu0 %v2742
  %2800 = vmatpush1.bf16.msra.mxu0 %v2741
  %2801 = vmatprep.subr.bf16.mxu0 %v2746
  %2802 = vmatpush1.bf16.msra.mxu0 %v2745
  %2803 = vmatprep.subr.bf16.mxu0 0
  %2804 = vmatpush1.bf16.msra.mxu0 0
  %2805 = vmatprep.subr.bf16.mxu0 0
  %2806 = vmatpush1.bf16.msra.mxu0 0
  %2807 = vmatprep.subr.bf16.mxu0 0
  %2808 = vmatpush1.bf16.msra.mxu0 0
  %2809 = vmatprep.subr.bf16.mxu0 0
  %2810 = vmatpush1.bf16.msra.mxu0 0
  %2811 = vmatprep.subr.bf16.mxu0 0
  %2812 = vmatpush1.bf16.msra.mxu0 0
  %2813 = vmatprep.subr.bf16.mxu0 0
  %2814 = vmatpush1.bf16.msra.mxu0 0
  %2815 = vmatprep.subr.bf16.mxu0 0
  %2816 = vmatpush1.bf16.msra.mxu0 0
  %2817 = vmatprep.subr.bf16.mxu0 0
  %2818 = vmatpush1.bf16.msra.mxu0 0
  %2819 = vmatprep.subr.bf16.mxu0 0
  %2820 = vmatpush1.bf16.msra.mxu0 0
  %2821 = vmatprep.subr.bf16.mxu0 0
  %2822 = vmatpush1.bf16.msra.mxu0 0
  %2823 = vmatprep.subr.bf16.mxu0 0
  %2824 = vmatpush1.bf16.msra.mxu0 0
  %2825 = vmatprep.subr.bf16.mxu0 0
  %2826 = vmatpush1.bf16.msra.mxu0 0
  %2827 = vmatprep.subr.bf16.mxu0 0
  %2828 = vmatpush1.bf16.msra.mxu0 0
  %2829 = vmatprep.subr.bf16.mxu0 0
  %2830 = vmatpush1.bf16.msra.mxu0 0
  %2831 = vmatprep.mubr.bf16.mxu0 0
  %2832 = vmatmul.mubr.bf16.gmra.mrb[0].mxu0 %v2756
  %v2833 = vpop.f32.mrb[0].mxu0
  %v2834 = vadd.f32 %v37, %v2833
  %v2835 = vpop.f32.mrb[0].mxu0
  %v2836 = vadd.f32 %v41, %v2835
  %v2837 = vpop.f32.mrb[0].mxu0
  %v2838 = vpop.f32.mrb[0].mxu0
  %2839 = vdwg.mxu0
  %v2840 = vld [vmem:[#allocation2] sm:$0xff]
  %v2841 = vpack.c.bf16 %v2840, %v2840
  %v2842 = vld [vmem:[%s2] sm:$0xff]
  %v2843 = vld [vmem:[%s2 + $0x8] sm:$0xff]
  %v2844 = vld [vmem:[%s2 + $0x10] sm:$0xff]
  %v2845 = vld [vmem:[%s2 + $0x18] sm:$0xff]
  %v2846 = vld [vmem:[%s2 + $0x20] sm:$0xff]
  %v2847 = vld [vmem:[%s2 + $0x28] sm:$0xff]
  %v2848 = vld [vmem:[%s2 + $0x30] sm:$0xff]
  %v2849 = vld [vmem:[%s2 + $0x38] sm:$0xff]
  %v2850 = vld [vmem:[%s2 + $0x40] sm:$0xff]
  %v2851 = vld [vmem:[%s2 + $0x48] sm:$0xff]
  %v2852 = vld [vmem:[%s2 + $0x50] sm:$0xff]
  %v2853 = vld [vmem:[%s2 + $0x58] sm:$0xff]
  %v2854 = vld [vmem:[%s2 + $0x60] sm:$0xff]
  %v2855 = vld [vmem:[%s2 + $0x68] sm:$0xff]
  %v2856 = vld [vmem:[%s2 + $0x70] sm:$0xff]
  %v2857 = vld [vmem:[%s2 + $0x78] sm:$0xff]
  %v2858 = vld [vmem:[%s2 + $0x80] sm:$0xff]
  %v2859 = vld [vmem:[%s2 + $0x88] sm:$0xff]
  %v2860 = vld [vmem:[%s2 + $0x90] sm:$0xff]
  %v2861 = vld [vmem:[%s2 + $0x98] sm:$0xff]
  %v2862 = vld [vmem:[%s2 + $0xa0] sm:$0xff]
  %v2863 = vld [vmem:[%s2 + $0xa8] sm:$0xff]
  %v2864 = vld [vmem:[%s2 + $0xb0] sm:$0xff]
  %v2865 = vld [vmem:[%s2 + $0xb8] sm:$0xff]
  %v2866 = vld [vmem:[%s2 + $0xc0] sm:$0xff]
  %v2867 = vld [vmem:[%s2 + $0xc8] sm:$0xff]
  %v2868 = vld [vmem:[%s2 + $0xd0] sm:$0xff]
  %v2869 = vld [vmem:[%s2 + $0xd8] sm:$0xff]
  %v2870 = vld [vmem:[%s2 + $0xe0] sm:$0xff]
  %v2871 = vld [vmem:[%s2 + $0xe8] sm:$0xff]
  %v2872 = vld [vmem:[%s2 + $0xf0] sm:$0xff]
  %v2873 = vld [vmem:[%s2 + $0xf8] sm:$0xff]
  %v2906 = vunpack.c.l.b16 %v2842
  %v2907 = vunpack.c.h.b16 %v2842
  %v2908 = vunpack.c.l.b16 %v2843
  %v2909 = vunpack.c.h.b16 %v2843
  %v2910 = vunpack.c.l.b16 %v2844
  %v2911 = vunpack.c.h.b16 %v2844
  %v2912 = vunpack.c.l.b16 %v2845
  %v2913 = vunpack.c.h.b16 %v2845
  %v2914 = vunpack.c.l.b16 %v2846
  %v2915 = vunpack.c.h.b16 %v2846
  %v2916 = vunpack.c.l.b16 %v2847
  %v2917 = vunpack.c.h.b16 %v2847
  %v2918 = vunpack.c.l.b16 %v2848
  %v2919 = vunpack.c.h.b16 %v2848
  %v2920 = vunpack.c.l.b16 %v2849
  %v2921 = vunpack.c.h.b16 %v2849
  %v2922 = vunpack.c.l.b16 %v2850
  %v2923 = vunpack.c.h.b16 %v2850
  %v2924 = vunpack.c.l.b16 %v2851
  %v2925 = vunpack.c.h.b16 %v2851
  %v2926 = vunpack.c.l.b16 %v2852
  %v2927 = vunpack.c.h.b16 %v2852
  %v2928 = vunpack.c.l.b16 %v2853
  %v2929 = vunpack.c.h.b16 %v2853
  %v2930 = vunpack.c.l.b16 %v2854
  %v2931 = vunpack.c.h.b16 %v2854
  %v2932 = vunpack.c.l.b16 %v2855
  %v2933 = vunpack.c.h.b16 %v2855
  %v2934 = vunpack.c.l.b16 %v2856
  %v2935 = vunpack.c.h.b16 %v2856
  %v2936 = vunpack.c.l.b16 %v2857
  %v2937 = vunpack.c.h.b16 %v2857
  %v2938 = vunpack.c.l.b16 %v2858
  %v2939 = vunpack.c.h.b16 %v2858
  %v2940 = vunpack.c.l.b16 %v2859
  %v2941 = vunpack.c.h.b16 %v2859
  %v2942 = vunpack.c.l.b16 %v2860
  %v2943 = vunpack.c.h.b16 %v2860
  %v2944 = vunpack.c.l.b16 %v2861
  %v2945 = vunpack.c.h.b16 %v2861
  %v2946 = vunpack.c.l.b16 %v2862
  %v2947 = vunpack.c.h.b16 %v2862
  %v2948 = vunpack.c.l.b16 %v2863
  %v2949 = vunpack.c.h.b16 %v2863
  %v2950 = vunpack.c.l.b16 %v2864
  %v2951 = vunpack.c.h.b16 %v2864
  %v2952 = vunpack.c.l.b16 %v2865
  %v2953 = vunpack.c.h.b16 %v2865
  %v2954 = vunpack.c.l.b16 %v2866
  %v2955 = vunpack.c.h.b16 %v2866
  %v2956 = vunpack.c.l.b16 %v2867
  %v2957 = vunpack.c.h.b16 %v2867
  %v2958 = vunpack.c.l.b16 %v2868
  %v2959 = vunpack.c.h.b16 %v2868
  %v2960 = vunpack.c.l.b16 %v2869
  %v2961 = vunpack.c.h.b16 %v2869
  %v2962 = vunpack.c.l.b16 %v2870
  %v2963 = vunpack.c.h.b16 %v2870
  %v2964 = vunpack.c.l.b16 %v2871
  %v2965 = vunpack.c.h.b16 %v2871
  %v2966 = vunpack.c.l.b16 %v2872
  %v2967 = vunpack.c.h.b16 %v2872
  %v2968 = vunpack.c.l.b16 %v2873
  %v2969 = vunpack.c.h.b16 %v2873
  %v2970 = vpack.c.b16 %v2910, %v2906
  %v2971 = vpack.c.b16 %v2911, %v2907
  %v2972 = vpack.c.b16 %v2912, %v2908
  %v2973 = vpack.c.b16 %v2913, %v2909
  %v2974 = vpack.c.b16 %v2918, %v2914
  %v2975 = vpack.c.b16 %v2919, %v2915
  %v2976 = vpack.c.b16 %v2920, %v2916
  %v2977 = vpack.c.b16 %v2921, %v2917
  %v2978 = vpack.c.b16 %v2926, %v2922
  %v2979 = vpack.c.b16 %v2927, %v2923
  %v2980 = vpack.c.b16 %v2928, %v2924
  %v2981 = vpack.c.b16 %v2929, %v2925
  %v2982 = vpack.c.b16 %v2934, %v2930
  %v2983 = vpack.c.b16 %v2935, %v2931
  %v2984 = vpack.c.b16 %v2936, %v2932
  %v2985 = vpack.c.b16 %v2937, %v2933
  %v2986 = vpack.c.b16 %v2942, %v2938
  %v2987 = vpack.c.b16 %v2943, %v2939
  %v2988 = vpack.c.b16 %v2944, %v2940
  %v2989 = vpack.c.b16 %v2945, %v2941
  %v2990 = vpack.c.b16 %v2950, %v2946
  %v2991 = vpack.c.b16 %v2951, %v2947
  %v2992 = vpack.c.b16 %v2952, %v2948
  %v2993 = vpack.c.b16 %v2953, %v2949
  %v2994 = vpack.c.b16 %v2958, %v2954
  %v2995 = vpack.c.b16 %v2959, %v2955
  %v2996 = vpack.c.b16 %v2960, %v2956
  %v2997 = vpack.c.b16 %v2961, %v2957
  %v2998 = vpack.c.b16 %v2966, %v2962
  %v2999 = vpack.c.b16 %v2967, %v2963
  %v3000 = vpack.c.b16 %v2968, %v2964
  %v3001 = vpack.c.b16 %v2969, %v2965
  %3034 = vmatprep.subr.bf16.mxu0 %v2971
  %3035 = vmatpush1.bf16.msra.mxu0 %v2970
  %3036 = vmatprep.subr.bf16.mxu0 %v2975
  %3037 = vmatpush1.bf16.msra.mxu0 %v2974
  %3038 = vmatprep.subr.bf16.mxu0 %v2979
  %3039 = vmatpush1.bf16.msra.mxu0 %v2978
  %3040 = vmatprep.subr.bf16.mxu0 %v2983
  %3041 = vmatpush1.bf16.msra.mxu0 %v2982
  %3042 = vmatprep.subr.bf16.mxu0 %v2987
  %3043 = vmatpush1.bf16.msra.mxu0 %v2986
  %3044 = vmatprep.subr.bf16.mxu0 %v2991
  %3045 = vmatpush1.bf16.msra.mxu0 %v2990
  %3046 = vmatprep.subr.bf16.mxu0 %v2995
  %3047 = vmatpush1.bf16.msra.mxu0 %v2994
  %3048 = vmatprep.subr.bf16.mxu0 %v2999
  %3049 = vmatpush1.bf16.msra.mxu0 %v2998
  %3050 = vmatprep.subr.bf16.mxu0 0
  %3051 = vmatpush1.bf16.msra.mxu0 0
  %3052 = vmatprep.subr.bf16.mxu0 0
  %3053 = vmatpush1.bf16.msra.mxu0 0
  %3054 = vmatprep.subr.bf16.mxu0 0
  %3055 = vmatpush1.bf16.msra.mxu0 0
  %3056 = vmatprep.subr.bf16.mxu0 0
  %3057 = vmatpush1.bf16.msra.mxu0 0
  %3058 = vmatprep.subr.bf16.mxu0 0
  %3059 = vmatpush1.bf16.msra.mxu0 0
  %3060 = vmatprep.subr.bf16.mxu0 0
  %3061 = vmatpush1.bf16.msra.mxu0 0
  %3062 = vmatprep.subr.bf16.mxu0 0
  %3063 = vmatpush1.bf16.msra.mxu0 0
  %3064 = vmatprep.subr.bf16.mxu0 0
  %3065 = vmatpush1.bf16.msra.mxu0 0
  %3066 = vmatprep.mubr.bf16.mxu0 0
  %3067 = vmatmul.mubr.bf16.gmra.mrb[0].mxu0 %v2841
  %v3068 = vpop.f32.mrb[0].mxu0
  %v3069 = vadd.f32 0.0, %v3068
  %v3070 = vpop.f32.mrb[0].mxu0
  %v3071 = vadd.f32 0.0, %v3070
  %v3072 = vpop.f32.mrb[0].mxu0
  %v3073 = vpop.f32.mrb[0].mxu0
  %3074 = vdwg.mxu0
  %3075 = vmatprep.subr.bf16.mxu0 %v2973
  %3076 = vmatpush1.bf16.msra.mxu0 %v2972
  %3077 = vmatprep.subr.bf16.mxu0 %v2977
  %3078 = vmatpush1.bf16.msra.mxu0 %v2976
  %3079 = vmatprep.subr.bf16.mxu0 %v2981
  %3080 = vmatpush1.bf16.msra.mxu0 %v2980
  %3081 = vmatprep.subr.bf16.mxu0 %v2985
  %3082 = vmatpush1.bf16.msra.mxu0 %v2984
  %3083 = vmatprep.subr.bf16.mxu0 %v2989
  %3084 = vmatpush1.bf16.msra.mxu0 %v2988
  %3085 = vmatprep.subr.bf16.mxu0 %v2993
  %3086 = vmatpush1.bf16.msra.mxu0 %v2992
  %3087 = vmatprep.subr.bf16.mxu0 %v2997
  %3088 = vmatpush1.bf16.msra.mxu0 %v2996
  %3089 = vmatprep.subr.bf16.mxu0 %v3001
  %3090 = vmatpush1.bf16.msra.mxu0 %v3000
  %3091 = vmatprep.subr.bf16.mxu0 0
  %3092 = vmatpush1.bf16.msra.mxu0 0
  %3093 = vmatprep.subr.bf16.mxu0 0
  %3094 = vmatpush1.bf16.msra.mxu0 0
  %3095 = vmatprep.subr.bf16.mxu0 0
  %3096 = vmatpush1.bf16.msra.mxu0 0
  %3097 = vmatprep.subr.bf16.mxu0 0
  %3098 = vmatpush1.bf16.msra.mxu0 0
  %3099 = vmatprep.subr.bf16.mxu0 0
  %3100 = vmatpush1.bf16.msra.mxu0 0
  %3101 = vmatprep.subr.bf16.mxu0 0
  %3102 = vmatpush1.bf16.msra.mxu0 0
  %3103 = vmatprep.subr.bf16.mxu0 0
  %3104 = vmatpush1.bf16.msra.mxu0 0
  %3105 = vmatprep.subr.bf16.mxu0 0
  %3106 = vmatpush1.bf16.msra.mxu0 0
  %3107 = vmatprep.mubr.bf16.mxu0 0
  %3108 = vmatmul.mubr.bf16.gmra.mrb[0].mxu0 %v2841
  %v3109 = vpop.f32.mrb[0].mxu0
  %v3110 = vadd.f32 0.0, %v3109
  %v3111 = vpop.f32.mrb[0].mxu0
  %v3112 = vadd.f32 0.0, %v3111
  %v3113 = vpop.f32.mrb[0].mxu0
  %v3114 = vpop.f32.mrb[0].mxu0
  %3115 = vdwg.mxu0
  %v3116 = vadd.f32 %v2793, %v3069
  %v3117 = vadd.f32 %v2795, %v3071
  %v3118 = vadd.f32 %v2834, %v3110
  %v3119 = vadd.f32 %v2836, %v3112
  %v3120 = vxor.u32 %v3116, 2147483648
  %v3121 = vmul.f32 %v3120, 1.442695
  %v3122 = vpow.pop %v3121
  %v3123 = vadd.f32 %v3122, 1.0
  %v3124 = vrcp.pop %v3123
  %v3125 = vmul.f32 1.0, %v3124
  %v3126 = vxor.u32 %v3117, 2147483648
  %v3127 = vmul.f32 %v3126, 1.442695
  %v3128 = vpow.pop %v3127
  %v3129 = vadd.f32 %v3128, 1.0
  %v3130 = vrcp.pop %v3129
  %v3131 = vmul.f32 1.0, %v3130
  %v3132 = vtanh.pop %v3118
  %v3133 = vxor.u32 %v3119, 2147483648
  %v3134 = vmul.f32 %v3133, 1.442695
  %v3135 = vpow.pop %v3134
  %v3136 = vadd.f32 %v3135, 1.0
  %v3137 = vrcp.pop %v3136
  %v3138 = vmul.f32 1.0, %v3137
  %v3139 = vld [vmem:[%s4] sm:$0xff]
  %v3140 = vmul.f32 %v3125, %v3139
  %v3141 = vmul.f32 %v3131, %v3132
  %v3142 = vadd.f32 %v3140, %v3141
  %v3143 = vtanh.pop %v3142
  %v3144 = vmul.f32 %v3138, %v3143
  %3145 = vst [vmem:[%s4] sm:$0xff] %v3144
  %3146 = vst [vmem:[#allocation2] sm:$0xff] %v3142
  %s3147 = scalar_lea.vmem %s0, 56
  %v3148 = vld [vmem:[%s3147] sm:$0xff]
  %v3149 = vpack.c.bf16 %v3148, %v3148
  %v3150 = vld [vmem:[%s1] sm:$0xff]
  %v3151 = vld [vmem:[%s1 + $0x8] sm:$0xff]
  %v3152 = vld [vmem:[%s1 + $0x10] sm:$0xff]
  %v3153 = vld [vmem:[%s1 + $0x18] sm:$0xff]
  %v3154 = vld [vmem:[%s1 + $0x20] sm:$0xff]
  %v3155 = vld [vmem:[%s1 + $0x28] sm:$0xff]
  %v3156 = vld [vmem:[%s1 + $0x30] sm:$0xff]
  %v3157 = vld [vmem:[%s1 + $0x38] sm:$0xff]
  %v3166 = vunpack.c.l.b16 %v3150
  %v3167 = vunpack.c.h.b16 %v3150
  %v3168 = vunpack.c.l.b16 %v3151
  %v3169 = vunpack.c.h.b16 %v3151
  %v3170 = vunpack.c.l.b16 %v3152
  %v3171 = vunpack.c.h.b16 %v3152
  %v3172 = vunpack.c.l.b16 %v3153
  %v3173 = vunpack.c.h.b16 %v3153
  %v3174 = vunpack.c.l.b16 %v3154
  %v3175 = vunpack.c.h.b16 %v3154
  %v3176 = vunpack.c.l.b16 %v3155
  %v3177 = vunpack.c.h.b16 %v3155
  %v3178 = vunpack.c.l.b16 %v3156
  %v3179 = vunpack.c.h.b16 %v3156
  %v3180 = vunpack.c.l.b16 %v3157
  %v3181 = vunpack.c.h.b16 %v3157
  %v3182 = vpack.c.b16 %v3170, %v3166
  %v3183 = vpack.c.b16 %v3171, %v3167
  %v3184 = vpack.c.b16 %v3172, %v3168
  %v3185 = vpack.c.b16 %v3173, %v3169
  %v3186 = vpack.c.b16 %v3178, %v3174
  %v3187 = vpack.c.b16 %v3179, %v3175
  %v3188 = vpack.c.b16 %v3180, %v3176
  %v3189 = vpack.c.b16 %v3181, %v3177
  %v3199 = vsel %vm96, %v3149, 0
  %3201 = vmatprep.subr.bf16.mxu0 %v3183
  %3202 = vmatpush1.bf16.msra.mxu0 %v3182
  %3203 = vmatprep.subr.bf16.mxu0 %v3187
  %3204 = vmatpush1.bf16.msra.mxu0 %v3186
  %3205 = vmatprep.subr.bf16.mxu0 0
  %3206 = vmatpush1.bf16.msra.mxu0 0
  %3207 = vmatprep.subr.bf16.mxu0 0
  %3208 = vmatpush1.bf16.msra.mxu0 0
  %3209 = vmatprep.subr.bf16.mxu0 0
  %3210 = vmatpush1.bf16.msra.mxu0 0
  %3211 = vmatprep.subr.bf16.mxu0 0
  %3212 = vmatpush1.bf16.msra.mxu0 0
  %3213 = vmatprep.subr.bf16.mxu0 0
  %3214 = vmatpush1.bf16.msra.mxu0 0
  %3215 = vmatprep.subr.bf16.mxu0 0
  %3216 = vmatpush1.bf16.msra.mxu0 0
  %3217 = vmatprep.subr.bf16.mxu0 0
  %3218 = vmatpush1.bf16.msra.mxu0 0
  %3219 = vmatprep.subr.bf16.mxu0 0
  %3220 = vmatpush1.bf16.msra.mxu0 0
  %3221 = vmatprep.subr.bf16.mxu0 0
  %3222 = vmatpush1.bf16.msra.mxu0 0
  %3223 = vmatprep.subr.bf16.mxu0 0
  %3224 = vmatpush1.bf16.msra.mxu0 0
  %3225 = vmatprep.subr.bf16.mxu0 0
  %3226 = vmatpush1.bf16.msra.mxu0 0
  %3227 = vmatprep.subr.bf16.mxu0 0
  %3228 = vmatpush1.bf16.msra.mxu0 0
  %3229 = vmatprep.subr.bf16.mxu0 0
  %3230 = vmatpush1.bf16.msra.mxu0 0
  %3231 = vmatprep.subr.bf16.mxu0 0
  %3232 = vmatpush1.bf16.msra.mxu0 0
  %3233 = vmatprep.mubr.bf16.mxu0 0
  %3234 = vmatmul.mubr.bf16.gmra.mrb[0].mxu0 %v3199
  %v3235 = vpop.f32.mrb[0].mxu0
  %v3236 = vadd.f32 %v29, %v3235
  %v3237 = vpop.f32.mrb[0].mxu0
  %v3238 = vadd.f32 %v33, %v3237
  %v3239 = vpop.f32.mrb[0].mxu0
  %v3240 = vpop.f32.mrb[0].mxu0
  %3241 = vdwg.mxu0
  %3242 = vmatprep.subr.bf16.mxu0 %v3185
  %3243 = vmatpush1.bf16.msra.mxu0 %v3184
  %3244 = vmatprep.subr.bf16.mxu0 %v3189
  %3245 = vmatpush1.bf16.msra.mxu0 %v3188
  %3246 = vmatprep.subr.bf16.mxu0 0
  %3247 = vmatpush1.bf16.msra.mxu0 0
  %3248 = vmatprep.subr.bf16.mxu0 0
  %3249 = vmatpush1.bf16.msra.mxu0 0
  %3250 = vmatprep.subr.bf16.mxu0 0
  %3251 = vmatpush1.bf16.msra.mxu0 0
  %3252 = vmatprep.subr.bf16.mxu0 0
  %3253 = vmatpush1.bf16.msra.mxu0 0
  %3254 = vmatprep.subr.bf16.mxu0 0
  %3255 = vmatpush1.bf16.msra.mxu0 0
  %3256 = vmatprep.subr.bf16.mxu0 0
  %3257 = vmatpush1.bf16.msra.mxu0 0
  %3258 = vmatprep.subr.bf16.mxu0 0
  %3259 = vmatpush1.bf16.msra.mxu0 0
  %3260 = vmatprep.subr.bf16.mxu0 0
  %3261 = vmatpush1.bf16.msra.mxu0 0
  %3262 = vmatprep.subr.bf16.mxu0 0
  %3263 = vmatpush1.bf16.msra.mxu0 0
  %3264 = vmatprep.subr.bf16.mxu0 0
  %3265 = vmatpush1.bf16.msra.mxu0 0
  %3266 = vmatprep.subr.bf16.mxu0 0
  %3267 = vmatpush1.bf16.msra.mxu0 0
  %3268 = vmatprep.subr.bf16.mxu0 0
  %3269 = vmatpush1.bf16.msra.mxu0 0
  %3270 = vmatprep.subr.bf16.mxu0 0
  %3271 = vmatpush1.bf16.msra.mxu0 0
  %3272 = vmatprep.subr.bf16.mxu0 0
  %3273 = vmatpush1.bf16.msra.mxu0 0
  %3274 = vmatprep.mubr.bf16.mxu0 0
  %3275 = vmatmul.mubr.bf16.gmra.mrb[0].mxu0 %v3199
  %v3276 = vpop.f32.mrb[0].mxu0
  %v3277 = vadd.f32 %v37, %v3276
  %v3278 = vpop.f32.mrb[0].mxu0
  %v3279 = vadd.f32 %v41, %v3278
  %v3280 = vpop.f32.mrb[0].mxu0
  %v3281 = vpop.f32.mrb[0].mxu0
  %3282 = vdwg.mxu0
  %v3283 = vld [vmem:[#allocation2] sm:$0xff]
  %v3284 = vpack.c.bf16 %v3283, %v3283
  %v3285 = vld [vmem:[%s2] sm:$0xff]
  %v3286 = vld [vmem:[%s2 + $0x8] sm:$0xff]
  %v3287 = vld [vmem:[%s2 + $0x10] sm:$0xff]
  %v3288 = vld [vmem:[%s2 + $0x18] sm:$0xff]
  %v3289 = vld [vmem:[%s2 + $0x20] sm:$0xff]
  %v3290 = vld [vmem:[%s2 + $0x28] sm:$0xff]
  %v3291 = vld [vmem:[%s2 + $0x30] sm:$0xff]
  %v3292 = vld [vmem:[%s2 + $0x38] sm:$0xff]
  %v3293 = vld [vmem:[%s2 + $0x40] sm:$0xff]
  %v3294 = vld [vmem:[%s2 + $0x48] sm:$0xff]
  %v3295 = vld [vmem:[%s2 + $0x50] sm:$0xff]
  %v3296 = vld [vmem:[%s2 + $0x58] sm:$0xff]
  %v3297 = vld [vmem:[%s2 + $0x60] sm:$0xff]
  %v3298 = vld [vmem:[%s2 + $0x68] sm:$0xff]
  %v3299 = vld [vmem:[%s2 + $0x70] sm:$0xff]
  %v3300 = vld [vmem:[%s2 + $0x78] sm:$0xff]
  %v3301 = vld [vmem:[%s2 + $0x80] sm:$0xff]
  %v3302 = vld [vmem:[%s2 + $0x88] sm:$0xff]
  %v3303 = vld [vmem:[%s2 + $0x90] sm:$0xff]
  %v3304 = vld [vmem:[%s2 + $0x98] sm:$0xff]
  %v3305 = vld [vmem:[%s2 + $0xa0] sm:$0xff]
  %v3306 = vld [vmem:[%s2 + $0xa8] sm:$0xff]
  %v3307 = vld [vmem:[%s2 + $0xb0] sm:$0xff]
  %v3308 = vld [vmem:[%s2 + $0xb8] sm:$0xff]
  %v3309 = vld [vmem:[%s2 + $0xc0] sm:$0xff]
  %v3310 = vld [vmem:[%s2 + $0xc8] sm:$0xff]
  %v3311 = vld [vmem:[%s2 + $0xd0] sm:$0xff]
  %v3312 = vld [vmem:[%s2 + $0xd8] sm:$0xff]
  %v3313 = vld [vmem:[%s2 + $0xe0] sm:$0xff]
  %v3314 = vld [vmem:[%s2 + $0xe8] sm:$0xff]
  %v3315 = vld [vmem:[%s2 + $0xf0] sm:$0xff]
  %v3316 = vld [vmem:[%s2 + $0xf8] sm:$0xff]
  %v3349 = vunpack.c.l.b16 %v3285
  %v3350 = vunpack.c.h.b16 %v3285
  %v3351 = vunpack.c.l.b16 %v3286
  %v3352 = vunpack.c.h.b16 %v3286
  %v3353 = vunpack.c.l.b16 %v3287
  %v3354 = vunpack.c.h.b16 %v3287
  %v3355 = vunpack.c.l.b16 %v3288
  %v3356 = vunpack.c.h.b16 %v3288
  %v3357 = vunpack.c.l.b16 %v3289
  %v3358 = vunpack.c.h.b16 %v3289
  %v3359 = vunpack.c.l.b16 %v3290
  %v3360 = vunpack.c.h.b16 %v3290
  %v3361 = vunpack.c.l.b16 %v3291
  %v3362 = vunpack.c.h.b16 %v3291
  %v3363 = vunpack.c.l.b16 %v3292
  %v3364 = vunpack.c.h.b16 %v3292
  %v3365 = vunpack.c.l.b16 %v3293
  %v3366 = vunpack.c.h.b16 %v3293
  %v3367 = vunpack.c.l.b16 %v3294
  %v3368 = vunpack.c.h.b16 %v3294
  %v3369 = vunpack.c.l.b16 %v3295
  %v3370 = vunpack.c.h.b16 %v3295
  %v3371 = vunpack.c.l.b16 %v3296
  %v3372 = vunpack.c.h.b16 %v3296
  %v3373 = vunpack.c.l.b16 %v3297
  %v3374 = vunpack.c.h.b16 %v3297
  %v3375 = vunpack.c.l.b16 %v3298
  %v3376 = vunpack.c.h.b16 %v3298
  %v3377 = vunpack.c.l.b16 %v3299
  %v3378 = vunpack.c.h.b16 %v3299
  %v3379 = vunpack.c.l.b16 %v3300
  %v3380 = vunpack.c.h.b16 %v3300
  %v3381 = vunpack.c.l.b16 %v3301
  %v3382 = vunpack.c.h.b16 %v3301
  %v3383 = vunpack.c.l.b16 %v3302
  %v3384 = vunpack.c.h.b16 %v3302
  %v3385 = vunpack.c.l.b16 %v3303
  %v3386 = vunpack.c.h.b16 %v3303
  %v3387 = vunpack.c.l.b16 %v3304
  %v3388 = vunpack.c.h.b16 %v3304
  %v3389 = vunpack.c.l.b16 %v3305
  %v3390 = vunpack.c.h.b16 %v3305
  %v3391 = vunpack.c.l.b16 %v3306
  %v3392 = vunpack.c.h.b16 %v3306
  %v3393 = vunpack.c.l.b16 %v3307
  %v3394 = vunpack.c.h.b16 %v3307
  %v3395 = vunpack.c.l.b16 %v3308
  %v3396 = vunpack.c.h.b16 %v3308
  %v3397 = vunpack.c.l.b16 %v3309
  %v3398 = vunpack.c.h.b16 %v3309
  %v3399 = vunpack.c.l.b16 %v3310
  %v3400 = vunpack.c.h.b16 %v3310
  %v3401 = vunpack.c.l.b16 %v3311
  %v3402 = vunpack.c.h.b16 %v3311
  %v3403 = vunpack.c.l.b16 %v3312
  %v3404 = vunpack.c.h.b16 %v3312
  %v3405 = vunpack.c.l.b16 %v3313
  %v3406 = vunpack.c.h.b16 %v3313
  %v3407 = vunpack.c.l.b16 %v3314
  %v3408 = vunpack.c.h.b16 %v3314
  %v3409 = vunpack.c.l.b16 %v3315
  %v3410 = vunpack.c.h.b16 %v3315
  %v3411 = vunpack.c.l.b16 %v3316
  %v3412 = vunpack.c.h.b16 %v3316
  %v3413 = vpack.c.b16 %v3353, %v3349
  %v3414 = vpack.c.b16 %v3354, %v3350
  %v3415 = vpack.c.b16 %v3355, %v3351
  %v3416 = vpack.c.b16 %v3356, %v3352
  %v3417 = vpack.c.b16 %v3361, %v3357
  %v3418 = vpack.c.b16 %v3362, %v3358
  %v3419 = vpack.c.b16 %v3363, %v3359
  %v3420 = vpack.c.b16 %v3364, %v3360
  %v3421 = vpack.c.b16 %v3369, %v3365
  %v3422 = vpack.c.b16 %v3370, %v3366
  %v3423 = vpack.c.b16 %v3371, %v3367
  %v3424 = vpack.c.b16 %v3372, %v3368
  %v3425 = vpack.c.b16 %v3377, %v3373
  %v3426 = vpack.c.b16 %v3378, %v3374
  %v3427 = vpack.c.b16 %v3379, %v3375
  %v3428 = vpack.c.b16 %v3380, %v3376
  %v3429 = vpack.c.b16 %v3385, %v3381
  %v3430 = vpack.c.b16 %v3386, %v3382
  %v3431 = vpack.c.b16 %v3387, %v3383
  %v3432 = vpack.c.b16 %v3388, %v3384
  %v3433 = vpack.c.b16 %v3393, %v3389
  %v3434 = vpack.c.b16 %v3394, %v3390
  %v3435 = vpack.c.b16 %v3395, %v3391
  %v3436 = vpack.c.b16 %v3396, %v3392
  %v3437 = vpack.c.b16 %v3401, %v3397
  %v3438 = vpack.c.b16 %v3402, %v3398
  %v3439 = vpack.c.b16 %v3403, %v3399
  %v3440 = vpack.c.b16 %v3404, %v3400
  %v3441 = vpack.c.b16 %v3409, %v3405
  %v3442 = vpack.c.b16 %v3410, %v3406
  %v3443 = vpack.c.b16 %v3411, %v3407
  %v3444 = vpack.c.b16 %v3412, %v3408
  %3477 = vmatprep.subr.bf16.mxu0 %v3414
  %3478 = vmatpush1.bf16.msra.mxu0 %v3413
  %3479 = vmatprep.subr.bf16.mxu0 %v3418
  %3480 = vmatpush1.bf16.msra.mxu0 %v3417
  %3481 = vmatprep.subr.bf16.mxu0 %v3422
  %3482 = vmatpush1.bf16.msra.mxu0 %v3421
  %3483 = vmatprep.subr.bf16.mxu0 %v3426
  %3484 = vmatpush1.bf16.msra.mxu0 %v3425
  %3485 = vmatprep.subr.bf16.mxu0 %v3430
  %3486 = vmatpush1.bf16.msra.mxu0 %v3429
  %3487 = vmatprep.subr.bf16.mxu0 %v3434
  %3488 = vmatpush1.bf16.msra.mxu0 %v3433
  %3489 = vmatprep.subr.bf16.mxu0 %v3438
  %3490 = vmatpush1.bf16.msra.mxu0 %v3437
  %3491 = vmatprep.subr.bf16.mxu0 %v3442
  %3492 = vmatpush1.bf16.msra.mxu0 %v3441
  %3493 = vmatprep.subr.bf16.mxu0 0
  %3494 = vmatpush1.bf16.msra.mxu0 0
  %3495 = vmatprep.subr.bf16.mxu0 0
  %3496 = vmatpush1.bf16.msra.mxu0 0
  %3497 = vmatprep.subr.bf16.mxu0 0
  %3498 = vmatpush1.bf16.msra.mxu0 0
  %3499 = vmatprep.subr.bf16.mxu0 0
  %3500 = vmatpush1.bf16.msra.mxu0 0
  %3501 = vmatprep.subr.bf16.mxu0 0
  %3502 = vmatpush1.bf16.msra.mxu0 0
  %3503 = vmatprep.subr.bf16.mxu0 0
  %3504 = vmatpush1.bf16.msra.mxu0 0
  %3505 = vmatprep.subr.bf16.mxu0 0
  %3506 = vmatpush1.bf16.msra.mxu0 0
  %3507 = vmatprep.subr.bf16.mxu0 0
  %3508 = vmatpush1.bf16.msra.mxu0 0
  %3509 = vmatprep.mubr.bf16.mxu0 0
  %3510 = vmatmul.mubr.bf16.gmra.mrb[0].mxu0 %v3284
  %v3511 = vpop.f32.mrb[0].mxu0
  %v3512 = vadd.f32 0.0, %v3511
  %v3513 = vpop.f32.mrb[0].mxu0
  %v3514 = vadd.f32 0.0, %v3513
  %v3515 = vpop.f32.mrb[0].mxu0
  %v3516 = vpop.f32.mrb[0].mxu0
  %3517 = vdwg.mxu0
  %3518 = vmatprep.subr.bf16.mxu0 %v3416
  %3519 = vmatpush1.bf16.msra.mxu0 %v3415
  %3520 = vmatprep.subr.bf16.mxu0 %v3420
  %3521 = vmatpush1.bf16.msra.mxu0 %v3419
  %3522 = vmatprep.subr.bf16.mxu0 %v3424
  %3523 = vmatpush1.bf16.msra.mxu0 %v3423
  %3524 = vmatprep.subr.bf16.mxu0 %v3428
  %3525 = vmatpush1.bf16.msra.mxu0 %v3427
  %3526 = vmatprep.subr.bf16.mxu0 %v3432
  %3527 = vmatpush1.bf16.msra.mxu0 %v3431
  %3528 = vmatprep.subr.bf16.mxu0 %v3436
  %3529 = vmatpush1.bf16.msra.mxu0 %v3435
  %3530 = vmatprep.subr.bf16.mxu0 %v3440
  %3531 = vmatpush1.bf16.msra.mxu0 %v3439
  %3532 = vmatprep.subr.bf16.mxu0 %v3444
  %3533 = vmatpush1.bf16.msra.mxu0 %v3443
  %3534 = vmatprep.subr.bf16.mxu0 0
  %3535 = vmatpush1.bf16.msra.mxu0 0
  %3536 = vmatprep.subr.bf16.mxu0 0
  %3537 = vmatpush1.bf16.msra.mxu0 0
  %3538 = vmatprep.subr.bf16.mxu0 0
  %3539 = vmatpush1.bf16.msra.mxu0 0
  %3540 = vmatprep.subr.bf16.mxu0 0
  %3541 = vmatpush1.bf16.msra.mxu0 0
  %3542 = vmatprep.subr.bf16.mxu0 0
  %3543 = vmatpush1.bf16.msra.mxu0 0
  %3544 = vmatprep.subr.bf16.mxu0 0
  %3545 = vmatpush1.bf16.msra.mxu0 0
  %3546 = vmatprep.subr.bf16.mxu0 0
  %3547 = vmatpush1.bf16.msra.mxu0 0
  %3548 = vmatprep.subr.bf16.mxu0 0
  %3549 = vmatpush1.bf16.msra.mxu0 0
  %3550 = vmatprep.mubr.bf16.mxu0 0
  %3551 = vmatmul.mubr.bf16.gmra.mrb[0].mxu0 %v3284
  %v3552 = vpop.f32.mrb[0].mxu0
  %v3553 = vadd.f32 0.0, %v3552
  %v3554 = vpop.f32.mrb[0].mxu0
  %v3555 = vadd.f32 0.0, %v3554
  %v3556 = vpop.f32.mrb[0].mxu0
  %v3557 = vpop.f32.mrb[0].mxu0
  %3558 = vdwg.mxu0
  %v3559 = vadd.f32 %v3236, %v3512
  %v3560 = vadd.f32 %v3238, %v3514
  %v3561 = vadd.f32 %v3277, %v3553
  %v3562 = vadd.f32 %v3279, %v3555
  %v3563 = vxor.u32 %v3559, 2147483648
  %v3564 = vmul.f32 %v3563, 1.442695
  %v3565 = vpow.pop %v3564
  %v3566 = vadd.f32 %v3565, 1.0
  %v3567 = vrcp.pop %v3566
  %v3568 = vmul.f32 1.0, %v3567
  %v3569 = vxor.u32 %v3560, 2147483648
  %v3570 = vmul.f32 %v3569, 1.442695
  %v3571 = vpow.pop %v3570
  %v3572 = vadd.f32 %v3571, 1.0
  %v3573 = vrcp.pop %v3572
  %v3574 = vmul.f32 1.0, %v3573
  %v3575 = vtanh.pop %v3561
  %v3576 = vxor.u32 %v3562, 2147483648
  %v3577 = vmul.f32 %v3576, 1.442695
  %v3578 = vpow.pop %v3577
  %v3579 = vadd.f32 %v3578, 1.0
  %v3580 = vrcp.pop %v3579
  %v3581 = vmul.f32 1.0, %v3580
  %v3582 = vld [vmem:[%s4] sm:$0xff]
  %v3583 = vmul.f32 %v3568, %v3582
  %v3584 = vmul.f32 %v3574, %v3575
  %v3585 = vadd.f32 %v3583, %v3584
  %v3586 = vtanh.pop %v3585
  %v3587 = vmul.f32 %v3581, %v3586
  %3588 = vst [vmem:[%s4] sm:$0xff] %v3587
  %3589 = vst [vmem:[#allocation2] sm:$0xff] %v3585
  // Predicated region
  $region22: #{mtrnn_forward.1} parent=0 // pred_check
    _
  $region23: #{mtrnn_forward.1} parent=0 // pred_check_branch
    %3591 = sbr.rel (0) target = $region25
  $region24: #{mtrnn_forward.1} parent=0 // pred_region
    _
  $region25: #{mtrnn_forward.1} parent=0 // pred_fallthru
    _
  // Predicated region
  $region26: #{mtrnn_forward.1} parent=0 // pred_check
    _
  $region27: #{mtrnn_forward.1} parent=0 // pred_check_branch
    %3593 = sbr.rel (0) target = $region29
  $region28: #{mtrnn_forward.1} parent=0 // pred_region
    _
  $region29: #{mtrnn_forward.1} parent=0 // pred_fallthru
    _

</llo_original>
